<compile_context>
chip_gen: v6e
topology: v6e:2x2x1
jax: 0.10.0
libtpu: 0.0.40
codegen_flags: <defaults>
</compile_context>

<pallas_src>
import functools
import math

import jax
import jax.numpy as jnp
from jax.experimental import pallas as pl
from jax.experimental.pallas import tpu as pltpu

_BN_EPS = 1e-5
_LANE = 128
_MID_LPAD = 8  # left zero-pad (columns) of the staged conv1 output; keeps the
               # big interior store sublane-aligned (offset 8, length W%8==0).


# -----------------------------------------------------------------------------
# Pallas kernel: fused (conv3x3 + BN + ReLU) x 2 for one batch element
# -----------------------------------------------------------------------------
def _doubleconv_kernel(xcol_ref, w1_ref, b1_ref, w2_ref, b2_ref, o_ref,
                       mid_ref, *, H, W, C_pad):
    """Refs:
      xcol_ref: (1, H*W, 9*C_in)            bf16  im2col'ed conv1 input
      w1_ref  : (9*C_in, C_pad)             bf16  BN-folded conv1 weights
      b1_ref  : (1, C_pad)                  f32   folded conv1+BN1 bias
      w2_ref  : (5, 2*C_pad, C_pad)         bf16  BN-folded, pair-K-packed conv2 taps
      b2_ref  : (1, C_pad)                  f32   folded conv2+BN2 bias
      o_ref   : (1, H*W, C_pad)             f32   lane-dense output
      mid_ref : (H+2, W+2*_MID_LPAD, C_pad) bf16  VMEM staging of conv1 output
    """
    LP = _MID_LPAD
    W_mid = W + 2 * LP

    # ---- conv1: single MXU matmul (K = 9*C_in), bias + ReLU ------------------
    y1 = jnp.dot(xcol_ref[0], w1_ref[...], preferred_element_type=jnp.float32)
    y1 = jnp.maximum(y1 + b1_ref[...], 0.0)                      # (H*W, C_pad)

    # ---- zero only the halo conv2 reads, then stage y1 (bf16, stays in VMEM)
    zrow = jnp.zeros((1, W_mid, C_pad), jnp.bfloat16)
    mid_ref[0:1, :, :] = zrow
    mid_ref[H + 1:H + 2, :, :] = zrow
    zcol = jnp.zeros((H, LP, C_pad), jnp.bfloat16)
    mid_ref[1:H + 1, 0:LP, :] = zcol
    mid_ref[1:H + 1, LP + W:W_mid, :] = zcol
    mid_ref[1:H + 1, LP:LP + W, :] = y1.astype(jnp.bfloat16).reshape(H, W, C_pad)

    # ---- conv2: 5 pair-K-packed (K = 2*C_pad) matmuls, value accumulation ----
    def window(k):
        dh, dw = k // 3, k % 3
        c0 = LP - 1 + dw
        return mid_ref[dh:dh + H, c0:c0 + W, :].reshape(H * W, C_pad)

    acc = None
    for p in range(5):
        k0, k1 = 2 * p, min(2 * p + 1, 8)      # pair 4: (tap8, zero weights)
        lhs = jnp.concatenate([window(k0), window(k1)], axis=-1)  # (H*W, 2*C_pad)
        part = jnp.dot(lhs, w2_ref[p], preferred_element_type=jnp.float32)
        acc = part if acc is None else acc + part
    o_ref[0] = jnp.maximum(acc + b2_ref[...], 0.0)


# -----------------------------------------------------------------------------
# Parameter folding / packing helpers (plain JAX, tiny, done once per call)
# -----------------------------------------------------------------------------
def _fold_bn(w, b, bn):
    """Fold Conv2d(weight=w, bias=b) + BatchNorm2d(eval) into (w', b')."""
    s = bn["gamma"] / jnp.sqrt(bn["var"] + _BN_EPS)
    return w * s[:, None, None, None], (b - bn["mean"]) * s + bn["beta"]


def _pack_w1(w, c_pad):
    """(C_out, C_in, 3, 3) -> (9*C_in, c_pad) bf16, K index = (kh*3+kw)*C_in + ci."""
    c_out, c_in = w.shape[0], w.shape[1]
    taps = jnp.transpose(w, (2, 3, 1, 0)).reshape(9 * c_in, c_out)
    taps = jnp.pad(taps, ((0, 0), (0, c_pad - c_out)))
    return taps.astype(jnp.bfloat16)


def _pack_w2_pairs(w, c_pad):
    """(C_out, C_out, 3, 3) -> (5, 2*c_pad, c_pad) bf16; taps paired along K,
    padded input/output channels and the 10th (phantom) tap are zero."""
    c_out, c_in2 = w.shape[0], w.shape[1]
    taps = jnp.transpose(w, (2, 3, 1, 0)).reshape(9, c_in2, c_out)
    taps = jnp.pad(taps, ((0, 1), (0, c_pad - c_in2), (0, c_pad - c_out)))
    pairs = taps.reshape(5, 2 * c_pad, c_pad)
    return pairs.astype(jnp.bfloat16)


def _pad_bias(b, c_pad):
    return jnp.pad(b, (0, c_pad - b.shape[0])).reshape(1, c_pad).astype(jnp.float32)


def _im2col_conv1(x_nhwc_bf16, h, w):
    """bf16 NHWC -> (N, H*W, 9*C_in) bf16, tap order k = dh*3 + dw."""
    xp = jnp.pad(x_nhwc_bf16, ((0, 0), (1, 1), (1, 1), (0, 0)))
    cols = [xp[:, dh:dh + h, dw:dw + w, :] for dh in range(3) for dw in range(3)]
    n, c_in = x_nhwc_bf16.shape[0], x_nhwc_bf16.shape[3]
    return jnp.concatenate(cols, axis=-1).reshape(n, h * w, 9 * c_in)


# -----------------------------------------------------------------------------
# DoubleConv forward (NCHW in / NCHW out, matching the PyTorch module)
# -----------------------------------------------------------------------------
def double_conv(x_nchw, params):
    n, c_in, h, w = x_nchw.shape
    c_out = params["w1"].shape[0]
    assert params["w2"].shape[0] == c_out and params["w2"].shape[1] == c_out
    assert w % 8 == 0, "W must be a multiple of 8 (sublane granularity)"
    c_pad = pl.cdiv(c_out, _LANE) * _LANE          # lane-dense padded channels

    w1, b1 = _fold_bn(params["w1"], params["b1"], params["bn1"])
    w2, b2 = _fold_bn(params["w2"], params["b2"], params["bn2"])
    w1p = _pack_w1(w1, c_pad)                      # (9*C_in, C_pad)    bf16
    w2p = _pack_w2_pairs(w2, c_pad)                # (5, 2*C_pad, C_pad) bf16
    b1p = _pad_bias(b1, c_pad)
    b2p = _pad_bias(b2, c_pad)

    x_nhwc = jnp.transpose(x_nchw, (0, 2, 3, 1)).astype(jnp.bfloat16)
    xcol = _im2col_conv1(x_nhwc, h, w)             # (N, H*W, 9*C_in)   bf16

    kernel = functools.partial(_doubleconv_kernel, H=h, W=w, C_pad=c_pad)

    flops = 2 * n * h * w * (9 * c_in * c_pad + 10 * c_pad * c_pad)
    bytes_accessed = (xcol.size * 2 + w1p.size * 2 + w2p.size * 2
                      + (b1p.size + b2p.size) * 4 + n * h * w * c_pad * 4)

    out = pl.pallas_call(
        kernel,
        out_shape=jax.ShapeDtypeStruct((n, h * w, c_pad), jnp.float32),
        grid=(n,),
        in_specs=[
            pl.BlockSpec((1, h * w, 9 * c_in), lambda i: (i, 0, 0)),
            pl.BlockSpec((9 * c_in, c_pad), lambda i: (0, 0)),
            pl.BlockSpec((1, c_pad), lambda i: (0, 0)),
            pl.BlockSpec((5, 2 * c_pad, c_pad), lambda i: (0, 0, 0)),
            pl.BlockSpec((1, c_pad), lambda i: (0, 0)),
        ],
        out_specs=pl.BlockSpec((1, h * w, c_pad), lambda i: (i, 0, 0)),
        scratch_shapes=[
            pltpu.VMEM((h + 2, w + 2 * _MID_LPAD, c_pad), jnp.bfloat16),
        ],
        compiler_params=pltpu.CompilerParams(
            dimension_semantics=("parallel",),
            vmem_limit_bytes=32 * 1024 * 1024,
        ),
        cost_estimate=pl.CostEstimate(
            flops=flops, transcendentals=0, bytes_accessed=bytes_accessed),
    )(xcol, w1p, b1p, w2p, b2p)

    y = out[:, :, :c_out].reshape(n, h, w, c_out)
    return jnp.transpose(y, (0, 3, 1, 2))                          # back to NCHW


# -----------------------------------------------------------------------------
# Pure-JAX reference (correctness tripwire)
# -----------------------------------------------------------------------------
def double_conv_reference(x_nchw, params):
    def block(x, w, b, bn):
        y = jax.lax.conv_general_dilated(
            x, w, window_strides=(1, 1), padding="SAME",
            dimension_numbers=("NCHW", "OIHW", "NCHW"))
        y = y + b[None, :, None, None]
        s = bn["gamma"] / jnp.sqrt(bn["var"] + _BN_EPS)
        y = ((y - bn["mean"][None, :, None, None]) * s[None, :, None, None]
             + bn["beta"][None, :, None, None])
        return jax.nn.relu(y)

    y = block(x_nchw, params["w1"], params["b1"], params["bn1"])
    return block(y, params["w2"], params["b2"], params["bn2"])


# -----------------------------------------------------------------------------
# Deterministic parameter construction
# -----------------------------------------------------------------------------
def make_params(key, c_in, c_out):
    ks = jax.random.split(key, 12)

    def conv(kw, kb, ci, co):
        std = 1.0 / math.sqrt(ci * 9)
        return (std * jax.random.normal(kw, (co, ci, 3, 3), jnp.float32),
                std * jax.random.normal(kb, (co,), jnp.float32))

    def bn(kg, kb, km, kv, c):
        return {"gamma": 1.0 + 0.1 * jax.random.normal(kg, (c,), jnp.float32),
                "beta": 0.1 * jax.random.normal(kb, (c,), jnp.float32),
                "mean": 0.1 * jax.random.normal(km, (c,), jnp.float32),
                "var": 1.0 + 0.2 * jax.random.uniform(kv, (c,), jnp.float32)}

    w1, b1 = conv(ks[0], ks[1], c_in, c_out)
    w2, b2 = conv(ks[2], ks[3], c_out, c_out)
    return {"w1": w1, "b1": b1, "bn1": bn(ks[4], ks[5], ks[6], ks[7], c_out),
            "w2": w2, "b2": b2, "bn2": bn(ks[8], ks[9], ks[10], ks[11], c_out)}


# -----------------------------------------------------------------------------
# Main
# -----------------------------------------------------------------------------
if __name__ == "__main__":
    N, C_IN, C_OUT, H, W = 2, 4, 8, 16, 16

    key = jax.random.PRNGKey(0)
    k_x, k_p = jax.random.split(key)
    x = jax.random.normal(k_x, (N, C_IN, H, W), jnp.float32)
    params = make_params(k_p, C_IN, C_OUT)

    y = jax.jit(double_conv)(x, params)
    jax.block_until_ready(y)
    assert y.shape == (N, C_OUT, H, W)
    assert bool(jnp.all(jnp.isfinite(y)))

    y_ref = jax.jit(double_conv_reference)(x, params)
    err = float(jnp.max(jnp.abs(y - y_ref)))
    scale = float(jnp.max(jnp.abs(y_ref)))
    tol = 5e-2 * max(scale, 1.0) + 1e-2     # relative-style bound (bf16 MXU + bf16 staging)
    assert err < tol, f"mismatch vs XLA reference: max abs err {err} (tol {tol})"

    print("KERNEL_OK")
</pallas_src>

<mosaic_0001>
module attributes {stable_mosaic.version = 11 : i64} {
  func.func @_doubleconv_kernel(%arg0: i32, %arg1: memref<1x256x36xbf16, #tpu.memory_space<vmem>>, %arg2: memref<36x128xbf16, #tpu.memory_space<vmem>>, %arg3: memref<1x128xf32, #tpu.memory_space<vmem>>, %arg4: memref<5x256x128xbf16, #tpu.memory_space<vmem>>, %arg5: memref<1x128xf32, #tpu.memory_space<vmem>>, %arg6: memref<1x256x128xf32, #tpu.memory_space<vmem>>, %arg7: memref<18x32x128xbf16, #tpu.memory_space<vmem>>) attributes {dimension_semantics = [#tpu.dimension_semantics<parallel>], iteration_bounds = array<i64: 2>, scalar_prefetch = 0 : i64, scratch_operands = 1 : i64, tpu.core_type = #tpu.core_type<tc>, window_params = [{transform_indices = @transform_0, window_bounds = array<i64: 1, 256, 36>}, {pipeline_mode = #tpu.pipeline_mode<synchronous>, transform_indices = @transform_1, window_bounds = array<i64: 36, 128>}, {pipeline_mode = #tpu.pipeline_mode<synchronous>, transform_indices = @transform_2, window_bounds = array<i64: 1, 128>}, {pipeline_mode = #tpu.pipeline_mode<synchronous>, transform_indices = @transform_3, window_bounds = array<i64: 5, 256, 128>}, {pipeline_mode = #tpu.pipeline_mode<synchronous>, transform_indices = @transform_4, window_bounds = array<i64: 1, 128>}, {transform_indices = @transform_5, window_bounds = array<i64: 1, 256, 128>}]} {
    %c0 = arith.constant 0 : index
    %c0_0 = arith.constant 0 : index
    %c0_1 = arith.constant 0 : index
    %0 = vector.load %arg1[%c0, %c0_0, %c0_1] : memref<1x256x36xbf16, #tpu.memory_space<vmem>>, vector<1x256x36xbf16>
    %1 = vector.shape_cast %0 : vector<1x256x36xbf16> to vector<256x36xbf16>
    %c0_2 = arith.constant 0 : index
    %c0_3 = arith.constant 0 : index
    %2 = vector.load %arg2[%c0_2, %c0_3] : memref<36x128xbf16, #tpu.memory_space<vmem>>, vector<36x128xbf16>
    %cst = arith.constant dense<0.000000e+00> : vector<256x128xf32>
    %3 = tpu.matmul %1, %2, %cst {dimension_numbers = #tpu.dot_dimension_numbers<[1], [0], [0], [1], [0, 0, 1, 1], [], []>} : vector<256x36xbf16>, vector<36x128xbf16>, vector<256x128xf32> -> vector<256x128xf32>
    %c0_4 = arith.constant 0 : index
    %c0_5 = arith.constant 0 : index
    %4 = vector.load %arg3[%c0_4, %c0_5] : memref<1x128xf32, #tpu.memory_space<vmem>>, vector<1x128xf32>
    %5 = vector.broadcast %4 : vector<1x128xf32> to vector<256x128xf32>
    %6 = arith.addf %3, %5 : vector<256x128xf32>
    %cst_6 = arith.constant 0.000000e+00 : f32
    %7 = vector.broadcast %cst_6 : f32 to vector<256x128xf32>
    %8 = arith.maximumf %6, %7 : vector<256x128xf32>
    %cst_7 = arith.constant 0.000000e+00 : bf16
    %9 = vector.broadcast %cst_7 : bf16 to vector<1x32x128xbf16>
    %c0_8 = arith.constant 0 : index
    %c0_9 = arith.constant 0 : index
    %c0_10 = arith.constant 0 : index
    %10 = vector.load %arg7[%c0_8, %c0_9, %c0_10] : memref<18x32x128xbf16, #tpu.memory_space<vmem>>, vector<1x32x128xbf16>
    tpu.vector_store %arg7[%c0_8, %c0_9, %c0_10], %9 {strides = array<i32>} : memref<18x32x128xbf16, #tpu.memory_space<vmem>>, vector<1x32x128xbf16>,
    %c17 = arith.constant 17 : index
    %c0_11 = arith.constant 0 : index
    %c0_12 = arith.constant 0 : index
    %11 = vector.load %arg7[%c17, %c0_11, %c0_12] : memref<18x32x128xbf16, #tpu.memory_space<vmem>>, vector<1x32x128xbf16>
    tpu.vector_store %arg7[%c17, %c0_11, %c0_12], %9 {strides = array<i32>} : memref<18x32x128xbf16, #tpu.memory_space<vmem>>, vector<1x32x128xbf16>,
    %cst_13 = arith.constant 0.000000e+00 : bf16
    %12 = vector.broadcast %cst_13 : bf16 to vector<16x8x128xbf16>
    %c1 = arith.constant 1 : index
    %c0_14 = arith.constant 0 : index
    %c0_15 = arith.constant 0 : index
    %13 = vector.load %arg7[%c1, %c0_14, %c0_15] : memref<18x32x128xbf16, #tpu.memory_space<vmem>>, vector<16x8x128xbf16>
    tpu.vector_store %arg7[%c1, %c0_14, %c0_15], %12 {strides = array<i32>} : memref<18x32x128xbf16, #tpu.memory_space<vmem>>, vector<16x8x128xbf16>,
    %c1_16 = arith.constant 1 : index
    %c24 = arith.constant 24 : index
    %c0_17 = arith.constant 0 : index
    %14 = vector.load %arg7[%c1_16, %c24, %c0_17] : memref<18x32x128xbf16, #tpu.memory_space<vmem>>, vector<16x8x128xbf16>
    tpu.vector_store %arg7[%c1_16, %c24, %c0_17], %12 {strides = array<i32>} : memref<18x32x128xbf16, #tpu.memory_space<vmem>>, vector<16x8x128xbf16>,
    %15 = arith.truncf %8 : vector<256x128xf32> to vector<256x128xbf16>
    %16 = vector.shape_cast %15 : vector<256x128xbf16> to vector<16x16x128xbf16>
    %c1_18 = arith.constant 1 : index
    %c8 = arith.constant 8 : index
    %c0_19 = arith.constant 0 : index
    %17 = vector.load %arg7[%c1_18, %c8, %c0_19] : memref<18x32x128xbf16, #tpu.memory_space<vmem>>, vector<16x16x128xbf16>
    tpu.vector_store %arg7[%c1_18, %c8, %c0_19], %16 {strides = array<i32>} : memref<18x32x128xbf16, #tpu.memory_space<vmem>>, vector<16x16x128xbf16>,
    %c0_20 = arith.constant 0 : index
    %c7 = arith.constant 7 : index
    %c0_21 = arith.constant 0 : index
    %18 = vector.load %arg7[%c0_20, %c7, %c0_21] : memref<18x32x128xbf16, #tpu.memory_space<vmem>>, vector<16x16x128xbf16>
    %19 = vector.shape_cast %18 : vector<16x16x128xbf16> to vector<256x128xbf16>
    %c0_22 = arith.constant 0 : index
    %c8_23 = arith.constant 8 : index
    %c0_24 = arith.constant 0 : index
    %20 = vector.load %arg7[%c0_22, %c8_23, %c0_24] : memref<18x32x128xbf16, #tpu.memory_space<vmem>>, vector<16x16x128xbf16>
    %21 = vector.shape_cast %20 : vector<16x16x128xbf16> to vector<256x128xbf16>
    %22 = tpu.concatenate %19, %21 in 1 : vector<256x128xbf16>, vector<256x128xbf16> -> vector<256x256xbf16>
    %c0_25 = arith.constant 0 : index
    %c0_26 = arith.constant 0 : index
    %c0_27 = arith.constant 0 : index
    %23 = vector.load %arg4[%c0_25, %c0_26, %c0_27] : memref<5x256x128xbf16, #tpu.memory_space<vmem>>, vector<1x256x128xbf16>
    %24 = vector.shape_cast %23 : vector<1x256x128xbf16> to vector<256x128xbf16>
    %cst_28 = arith.constant dense<0.000000e+00> : vector<256x128xf32>
    %25 = tpu.matmul %22, %24, %cst_28 {dimension_numbers = #tpu.dot_dimension_numbers<[1], [0], [0], [1], [0, 0, 1, 1], [], []>} : vector<256x256xbf16>, vector<256x128xbf16>, vector<256x128xf32> -> vector<256x128xf32>
    %c0_29 = arith.constant 0 : index
    %c9 = arith.constant 9 : index
    %c0_30 = arith.constant 0 : index
    %26 = vector.load %arg7[%c0_29, %c9, %c0_30] : memref<18x32x128xbf16, #tpu.memory_space<vmem>>, vector<16x16x128xbf16>
    %27 = vector.shape_cast %26 : vector<16x16x128xbf16> to vector<256x128xbf16>
    %c1_31 = arith.constant 1 : index
    %c7_32 = arith.constant 7 : index
    %c0_33 = arith.constant 0 : index
    %28 = vector.load %arg7[%c1_31, %c7_32, %c0_33] : memref<18x32x128xbf16, #tpu.memory_space<vmem>>, vector<16x16x128xbf16>
    %29 = vector.shape_cast %28 : vector<16x16x128xbf16> to vector<256x128xbf16>
    %30 = tpu.concatenate %27, %29 in 1 : vector<256x128xbf16>, vector<256x128xbf16> -> vector<256x256xbf16>
    %c1_34 = arith.constant 1 : index
    %c0_35 = arith.constant 0 : index
    %c0_36 = arith.constant 0 : index
    %31 = vector.load %arg4[%c1_34, %c0_35, %c0_36] : memref<5x256x128xbf16, #tpu.memory_space<vmem>>, vector<1x256x128xbf16>
    %32 = vector.shape_cast %31 : vector<1x256x128xbf16> to vector<256x128xbf16>
    %cst_37 = arith.constant dense<0.000000e+00> : vector<256x128xf32>
    %33 = tpu.matmul %30, %32, %cst_37 {dimension_numbers = #tpu.dot_dimension_numbers<[1], [0], [0], [1], [0, 0, 1, 1], [], []>} : vector<256x256xbf16>, vector<256x128xbf16>, vector<256x128xf32> -> vector<256x128xf32>
    %34 = arith.addf %25, %33 : vector<256x128xf32>
    %c1_38 = arith.constant 1 : index
    %c8_39 = arith.constant 8 : index
    %c0_40 = arith.constant 0 : index
    %35 = vector.load %arg7[%c1_38, %c8_39, %c0_40] : memref<18x32x128xbf16, #tpu.memory_space<vmem>>, vector<16x16x128xbf16>
    %36 = vector.shape_cast %35 : vector<16x16x128xbf16> to vector<256x128xbf16>
    %c1_41 = arith.constant 1 : index
    %c9_42 = arith.constant 9 : index
    %c0_43 = arith.constant 0 : index
    %37 = vector.load %arg7[%c1_41, %c9_42, %c0_43] : memref<18x32x128xbf16, #tpu.memory_space<vmem>>, vector<16x16x128xbf16>
    %38 = vector.shape_cast %37 : vector<16x16x128xbf16> to vector<256x128xbf16>
    %39 = tpu.concatenate %36, %38 in 1 : vector<256x128xbf16>, vector<256x128xbf16> -> vector<256x256xbf16>
    %c2 = arith.constant 2 : index
    %c0_44 = arith.constant 0 : index
    %c0_45 = arith.constant 0 : index
    %40 = vector.load %arg4[%c2, %c0_44, %c0_45] : memref<5x256x128xbf16, #tpu.memory_space<vmem>>, vector<1x256x128xbf16>
    %41 = vector.shape_cast %40 : vector<1x256x128xbf16> to vector<256x128xbf16>
    %cst_46 = arith.constant dense<0.000000e+00> : vector<256x128xf32>
    %42 = tpu.matmul %39, %41, %cst_46 {dimension_numbers = #tpu.dot_dimension_numbers<[1], [0], [0], [1], [0, 0, 1, 1], [], []>} : vector<256x256xbf16>, vector<256x128xbf16>, vector<256x128xf32> -> vector<256x128xf32>
    %43 = arith.addf %34, %42 : vector<256x128xf32>
    %c2_47 = arith.constant 2 : index
    %c7_48 = arith.constant 7 : index
    %c0_49 = arith.constant 0 : index
    %44 = vector.load %arg7[%c2_47, %c7_48, %c0_49] : memref<18x32x128xbf16, #tpu.memory_space<vmem>>, vector<16x16x128xbf16>
    %45 = vector.shape_cast %44 : vector<16x16x128xbf16> to vector<256x128xbf16>
    %c2_50 = arith.constant 2 : index
    %c8_51 = arith.constant 8 : index
    %c0_52 = arith.constant 0 : index
    %46 = vector.load %arg7[%c2_50, %c8_51, %c0_52] : memref<18x32x128xbf16, #tpu.memory_space<vmem>>, vector<16x16x128xbf16>
    %47 = vector.shape_cast %46 : vector<16x16x128xbf16> to vector<256x128xbf16>
    %48 = tpu.concatenate %45, %47 in 1 : vector<256x128xbf16>, vector<256x128xbf16> -> vector<256x256xbf16>
    %c3 = arith.constant 3 : index
    %c0_53 = arith.constant 0 : index
    %c0_54 = arith.constant 0 : index
    %49 = vector.load %arg4[%c3, %c0_53, %c0_54] : memref<5x256x128xbf16, #tpu.memory_space<vmem>>, vector<1x256x128xbf16>
    %50 = vector.shape_cast %49 : vector<1x256x128xbf16> to vector<256x128xbf16>
    %cst_55 = arith.constant dense<0.000000e+00> : vector<256x128xf32>
    %51 = tpu.matmul %48, %50, %cst_55 {dimension_numbers = #tpu.dot_dimension_numbers<[1], [0], [0], [1], [0, 0, 1, 1], [], []>} : vector<256x256xbf16>, vector<256x128xbf16>, vector<256x128xf32> -> vector<256x128xf32>
    %52 = arith.addf %43, %51 : vector<256x128xf32>
    %c2_56 = arith.constant 2 : index
    %c9_57 = arith.constant 9 : index
    %c0_58 = arith.constant 0 : index
    %53 = vector.load %arg7[%c2_56, %c9_57, %c0_58] : memref<18x32x128xbf16, #tpu.memory_space<vmem>>, vector<16x16x128xbf16>
    %54 = vector.shape_cast %53 : vector<16x16x128xbf16> to vector<256x128xbf16>
    %c2_59 = arith.constant 2 : index
    %c9_60 = arith.constant 9 : index
    %c0_61 = arith.constant 0 : index
    %55 = vector.load %arg7[%c2_59, %c9_60, %c0_61] : memref<18x32x128xbf16, #tpu.memory_space<vmem>>, vector<16x16x128xbf16>
    %56 = vector.shape_cast %55 : vector<16x16x128xbf16> to vector<256x128xbf16>
    %57 = tpu.concatenate %54, %56 in 1 : vector<256x128xbf16>, vector<256x128xbf16> -> vector<256x256xbf16>
    %c4 = arith.constant 4 : index
    %c0_62 = arith.constant 0 : index
    %c0_63 = arith.constant 0 : index
    %58 = vector.load %arg4[%c4, %c0_62, %c0_63] : memref<5x256x128xbf16, #tpu.memory_space<vmem>>, vector<1x256x128xbf16>
    %59 = vector.shape_cast %58 : vector<1x256x128xbf16> to vector<256x128xbf16>
    %cst_64 = arith.constant dense<0.000000e+00> : vector<256x128xf32>
    %60 = tpu.matmul %57, %59, %cst_64 {dimension_numbers = #tpu.dot_dimension_numbers<[1], [0], [0], [1], [0, 0, 1, 1], [], []>} : vector<256x256xbf16>, vector<256x128xbf16>, vector<256x128xf32> -> vector<256x128xf32>
    %61 = arith.addf %52, %60 : vector<256x128xf32>
    %c0_65 = arith.constant 0 : index
    %c0_66 = arith.constant 0 : index
    %62 = vector.load %arg5[%c0_65, %c0_66] : memref<1x128xf32, #tpu.memory_space<vmem>>, vector<1x128xf32>
    %63 = vector.broadcast %62 : vector<1x128xf32> to vector<256x128xf32>
    %64 = arith.addf %61, %63 : vector<256x128xf32>
    %cst_67 = arith.constant 0.000000e+00 : f32
    %65 = vector.broadcast %cst_67 : f32 to vector<256x128xf32>
    %66 = arith.maximumf %64, %65 : vector<256x128xf32>
    %c0_68 = arith.constant 0 : index
    %c0_69 = arith.constant 0 : index
    %c0_70 = arith.constant 0 : index
    %67 = vector.load %arg6[%c0_68, %c0_69, %c0_70] : memref<1x256x128xf32, #tpu.memory_space<vmem>>, vector<1x256x128xf32>
    %68 = vector.shape_cast %67 : vector<1x256x128xf32> to vector<256x128xf32>
    %69 = vector.shape_cast %66 : vector<256x128xf32> to vector<1x256x128xf32>
    tpu.vector_store %arg6[%c0_68, %c0_69, %c0_70], %69 {strides = array<i32>} : memref<1x256x128xf32, #tpu.memory_space<vmem>>, vector<1x256x128xf32>,
    return
  }
  func.func @transform_0(%arg0: i32) -> (i32, i32, i32) {
    %c0_i32 = arith.constant 0 : i32
    %c0_i32_0 = arith.constant 0 : i32
    %c0_i32_1 = arith.constant 0 : i32
    return %arg0, %c0_i32, %c0_i32_0 : i32, i32, i32
  }
  func.func @transform_1(%arg0: i32) -> (i32, i32) {
    %c0_i32 = arith.constant 0 : i32
    %c0_i32_0 = arith.constant 0 : i32
    %c0_i32_1 = arith.constant 0 : i32
    return %c0_i32, %c0_i32_0 : i32, i32
  }
  func.func @transform_2(%arg0: i32) -> (i32, i32) {
    %c0_i32 = arith.constant 0 : i32
    %c0_i32_0 = arith.constant 0 : i32
    %c0_i32_1 = arith.constant 0 : i32
    return %c0_i32, %c0_i32_0 : i32, i32
  }
  func.func @transform_3(%arg0: i32) -> (i32, i32, i32) {
    %c0_i32 = arith.constant 0 : i32
    %c0_i32_0 = arith.constant 0 : i32
    %c0_i32_1 = arith.constant 0 : i32
    %c0_i32_2 = arith.constant 0 : i32
    return %c0_i32, %c0_i32_0, %c0_i32_1 : i32, i32, i32
  }
  func.func @transform_4(%arg0: i32) -> (i32, i32) {
    %c0_i32 = arith.constant 0 : i32
    %c0_i32_0 = arith.constant 0 : i32
    %c0_i32_1 = arith.constant 0 : i32
    return %c0_i32, %c0_i32_0 : i32, i32
  }
  func.func @transform_5(%arg0: i32) -> (i32, i32, i32) {
    %c0_i32 = arith.constant 0 : i32
    %c0_i32_0 = arith.constant 0 : i32
    %c0_i32_1 = arith.constant 0 : i32
    return %arg0, %c0_i32, %c0_i32_0 : i32, i32, i32
  }
}

</mosaic_0001>

<llo_original>
// kernel: double_conv.1
$region0: #{double_conv.1}
  #allocation0 [shape = 'u32[]', space=smem, size = 0x4, offset = 0x4, fixed_abs, tag = 'smem constant byte address 0x4 - core index']
  #allocation1 [shape = 'u32[144,128]{1,0:T(1,128)}', space=vmem, size = 0x12000, scoped, tag = 'internal scratch']
  #allocation2 [shape = 'bf16[18,32,128]{2,1,0:T(8,128)(2,1)}', space=vmem, size = 0x24000, scoped, tag = 'scratch operand']
  %s0 = inlined_call_operand.vmem [shape: bf16[2,256,36], index: 0, kind: input, shape index: {}]
  %s1 = inlined_call_operand.vmem [shape: bf16[36,128], index: 1, kind: input, shape index: {}]
  %s2 = inlined_call_operand.vmem [shape: f32[1,128], index: 2, kind: input, shape index: {}]
  %s3 = inlined_call_operand.vmem [shape: bf16[5,256,128], index: 3, kind: input, shape index: {}]
  %s4 = inlined_call_operand.vmem [shape: f32[1,128], index: 4, kind: input, shape index: {}]
  %s5 = inlined_call_operand.vmem [shape: f32[2,256,128], index: 5, kind: output, shape index: {}]
  %s6 = sld [smem:[#allocation0]]
  $region53: #{double_conv.1} parent=0
    _
  %s8 = ssub.s32 1, %s6
  %s9 = scalar_select 0, %s8, %s6
  loop: start=0, step=1, limit=4
  $region2: #{double_conv.1} parent=0 // loop_pre_header
    _
  $region3: #{double_conv.1} parent=0 // loop_header
    %s11 = sphi 0, %s15
    %p12 = scmp.ge.s32.totalorder %s11, 4
    %s21 = sphi 0, %s23
    %s24 = sphi 0, %s21
    %s25 = sphi 0, %s24
    %s41 = sphi 0, %s25
    %s45 = sphi 0, %s45
    %s47 = sphi 0, %s45
    %s48 = sphi 0, %s47
    %s62 = sphi 0, %s48
    %s66 = sphi 0, %s66
    %s68 = sphi 0, %s66
    %s69 = sphi 0, %s68
    %s83 = sphi 0, %s69
    %s87 = sphi 0, %s87
    %s89 = sphi 0, %s87
    %s90 = sphi 0, %s89
    %s104 = sphi 0, %s90
    %s108 = sphi 0, %s108
    %s110 = sphi 0, %s108
    %s111 = sphi 0, %s110
    %s125 = sphi 0, %s111
    %s131 = sphi 0, %s133
    %s134 = sphi 0, %s131
    %s135 = sphi 0, %s134
    %s151 = sphi 0, %s135
  $region4: #{double_conv.1} parent=0 // loop_header_branch
    %14 = sbr.rel (%p12) target = $region8
  $region5: #{double_conv.1} parent=0 // loop_body
    %s16 = ssub.s32 %s11, 1
    %s17 = ssub.s32 %s11, 2
    %s18 = sadd.s32 %s11, 1
    %s19 = ssub.s32 %s11, %s18
    %p20 = scmp.eq.s32.totalorder %s19, 0
    %s22 = sadd.s32 %s21, 1
    %s23 = scalar_select %p20, %s21, %s22
    %p26 = pneg %p20
    %p27 = scmp.eq.s32.totalorder %s11, 1
    %p28 = por %p26, %p27
    %p29 = scmp.ne.s32.totalorder %s21, %s24
    %p30 = scmp.eq.s32.totalorder %s11, 0
    %p31 = por %p29, %p30
    %p32 = scmp.ne.s32.totalorder %s21, %s24
    %p33 = scmp.eq.s32.totalorder %s16, 1
    %p34 = por %p32, %p33
    %p35 = scmp.ne.s32.totalorder %s24, %s25
    %p36 = scmp.eq.s32.totalorder %s16, 0
    %p37 = por %p35, %p36
    %p38 = scmp.ne.s32.totalorder %s24, %s25
    %p39 = scmp.eq.s32.totalorder %s17, 1
    %p40 = por %p38, %p39
    %p42 = scmp.ne.s32.totalorder %s25, %s41
    %p43 = scmp.eq.s32.totalorder %s17, 0
    %p44 = por %p42, %p43
    %s46 = sadd.s32 %s45, 1
    %p49 = scmp.eq.s32.totalorder %s11, 1
    %p50 = scmp.ne.s32.totalorder %s45, %s47
    %p51 = scmp.eq.s32.totalorder %s11, 0
    %p52 = por %p50, %p51
    %p53 = scmp.ne.s32.totalorder %s45, %s47
    %p54 = scmp.eq.s32.totalorder %s16, 1
    %p55 = por %p53, %p54
    %p56 = scmp.ne.s32.totalorder %s47, %s48
    %p57 = scmp.eq.s32.totalorder %s16, 0
    %p58 = por %p56, %p57
    %p59 = scmp.ne.s32.totalorder %s47, %s48
    %p60 = scmp.eq.s32.totalorder %s17, 1
    %p61 = por %p59, %p60
    %p63 = scmp.ne.s32.totalorder %s48, %s62
    %p64 = scmp.eq.s32.totalorder %s17, 0
    %p65 = por %p63, %p64
    %s67 = sadd.s32 %s66, 1
    %p70 = scmp.eq.s32.totalorder %s11, 1
    %p71 = scmp.ne.s32.totalorder %s66, %s68
    %p72 = scmp.eq.s32.totalorder %s11, 0
    %p73 = por %p71, %p72
    %p74 = scmp.ne.s32.totalorder %s66, %s68
    %p75 = scmp.eq.s32.totalorder %s16, 1
    %p76 = por %p74, %p75
    %p77 = scmp.ne.s32.totalorder %s68, %s69
    %p78 = scmp.eq.s32.totalorder %s16, 0
    %p79 = por %p77, %p78
    %p80 = scmp.ne.s32.totalorder %s68, %s69
    %p81 = scmp.eq.s32.totalorder %s17, 1
    %p82 = por %p80, %p81
    %p84 = scmp.ne.s32.totalorder %s69, %s83
    %p85 = scmp.eq.s32.totalorder %s17, 0
    %p86 = por %p84, %p85
    %s88 = sadd.s32 %s87, 1
    %p91 = scmp.eq.s32.totalorder %s11, 1
    %p92 = scmp.ne.s32.totalorder %s87, %s89
    %p93 = scmp.eq.s32.totalorder %s11, 0
    %p94 = por %p92, %p93
    %p95 = scmp.ne.s32.totalorder %s87, %s89
    %p96 = scmp.eq.s32.totalorder %s16, 1
    %p97 = por %p95, %p96
    %p98 = scmp.ne.s32.totalorder %s89, %s90
    %p99 = scmp.eq.s32.totalorder %s16, 0
    %p100 = por %p98, %p99
    %p101 = scmp.ne.s32.totalorder %s89, %s90
    %p102 = scmp.eq.s32.totalorder %s17, 1
    %p103 = por %p101, %p102
    %p105 = scmp.ne.s32.totalorder %s90, %s104
    %p106 = scmp.eq.s32.totalorder %s17, 0
    %p107 = por %p105, %p106
    %s109 = sadd.s32 %s108, 1
    %p112 = scmp.eq.s32.totalorder %s11, 1
    %p113 = scmp.ne.s32.totalorder %s108, %s110
    %p114 = scmp.eq.s32.totalorder %s11, 0
    %p115 = por %p113, %p114
    %p116 = scmp.ne.s32.totalorder %s108, %s110
    %p117 = scmp.eq.s32.totalorder %s16, 1
    %p118 = por %p116, %p117
    %p119 = scmp.ne.s32.totalorder %s110, %s111
    %p120 = scmp.eq.s32.totalorder %s16, 0
    %p121 = por %p119, %p120
    %p122 = scmp.ne.s32.totalorder %s110, %s111
    %p123 = scmp.eq.s32.totalorder %s17, 1
    %p124 = por %p122, %p123
    %p126 = scmp.ne.s32.totalorder %s111, %s125
    %p127 = scmp.eq.s32.totalorder %s17, 0
    %p128 = por %p126, %p127
    %s129 = ssub.s32 %s11, %s18
    %p130 = scmp.eq.s32.totalorder %s129, 0
    %s132 = sadd.s32 %s131, 1
    %s133 = scalar_select %p130, %s131, %s132
    %p136 = pneg %p130
    %p137 = scmp.eq.s32.totalorder %s11, 1
    %p138 = por %p136, %p137
    %p139 = scmp.ne.s32.totalorder %s131, %s134
    %p140 = scmp.eq.s32.totalorder %s11, 0
    %p141 = por %p139, %p140
    %p142 = scmp.ne.s32.totalorder %s131, %s134
    %p143 = scmp.eq.s32.totalorder %s16, 1
    %p144 = por %p142, %p143
    %p145 = scmp.ne.s32.totalorder %s134, %s135
    %p146 = scmp.eq.s32.totalorder %s16, 0
    %p147 = por %p145, %p146
    %p148 = scmp.ne.s32.totalorder %s134, %s135
    %p149 = scmp.eq.s32.totalorder %s17, 1
    %p150 = por %p148, %p149
    %p152 = scmp.ne.s32.totalorder %s135, %s151
    %p153 = scmp.eq.s32.totalorder %s17, 0
    %p154 = por %p152, %p153
    %p155 = scmp.le.s32.totalorder 1, %s11
    %p156 = scmp.lt.s32.totalorder %s11, 3
    %p157 = pnand %p155, %p156
    %p158 = pneg %p157
    // Predicated region
    $region9: #{double_conv.1} parent=5 // pred_check
      _
    $region10: #{double_conv.1} parent=5 // pred_check_branch
      %160 = sbr.rel (%p157) target = $region12
    $region11: #{double_conv.1} parent=5 // pred_region
      %s161 = ssub.s32 %s11, 1
      // Predicated region
      $region13: #{double_conv.1} parent=11 // pred_check
        %p162 = pneg %p58
      $region14: #{double_conv.1} parent=11 // pred_check_branch
        %164 = sbr.rel (%p162) target = $region16
      $region15: #{double_conv.1} parent=11 // pred_region
        _
      $region16: #{double_conv.1} parent=11 // pred_fallthru
        _
      // Predicated region
      $region17: #{double_conv.1} parent=11 // pred_check
        %p165 = pneg %p79
      $region18: #{double_conv.1} parent=11 // pred_check_branch
        %167 = sbr.rel (%p165) target = $region20
      $region19: #{double_conv.1} parent=11 // pred_region
        _
      $region20: #{double_conv.1} parent=11 // pred_fallthru
        _
      // Predicated region
      $region21: #{double_conv.1} parent=11 // pred_check
        %p168 = pneg %p100
      $region22: #{double_conv.1} parent=11 // pred_check_branch
        %170 = sbr.rel (%p168) target = $region24
      $region23: #{double_conv.1} parent=11 // pred_region
        _
      $region24: #{double_conv.1} parent=11 // pred_fallthru
        _
      // Predicated region
      $region25: #{double_conv.1} parent=11 // pred_check
        %p171 = pneg %p121
      $region26: #{double_conv.1} parent=11 // pred_check_branch
        %173 = sbr.rel (%p171) target = $region28
      $region27: #{double_conv.1} parent=11 // pred_region
        _
      $region28: #{double_conv.1} parent=11 // pred_fallthru
        _
    $region12: #{double_conv.1} parent=5 // pred_fallthru
      _
    %p174 = scmp.lt.s32.totalorder %s11, 2
    // Predicated region
    $region29: #{double_conv.1} parent=5 // pred_check
      %p175 = pneg %p174
    $region30: #{double_conv.1} parent=5 // pred_check_branch
      %177 = sbr.rel (%p175) target = $region32
    $region31: #{double_conv.1} parent=5 // pred_region
      // Predicated region
      $region33: #{double_conv.1} parent=31 // pred_check
        %p178 = pneg %p31
      $region34: #{double_conv.1} parent=31 // pred_check_branch
        %180 = sbr.rel (%p178) target = $region36
      $region35: #{double_conv.1} parent=31 // pred_region
        %p181 = scmp.lt.s32.totalorder %s11, 1
        %s182 = scalar_select %p181, %s11, 1
        %s183 = smul.addr %s182, 32
        %s184 = smul.addr %s183, 4
        %s185 = scalar_lea.vmem %s0, %s184
      $region36: #{double_conv.1} parent=31 // pred_fallthru
        _
    $region32: #{double_conv.1} parent=5 // pred_fallthru
      _
    %p186 = scmp.le.s32.totalorder 1, %s11
    %p187 = scmp.lt.s32.totalorder %s11, 3
    %p188 = pnand %p186, %p187
    %p189 = pneg %p188
    // Predicated region
    $region37: #{double_conv.1} parent=5 // pred_check
      _
    $region38: #{double_conv.1} parent=5 // pred_check_branch
      %191 = sbr.rel (%p188) target = $region40
    $region39: #{double_conv.1} parent=5 // pred_region
      %s192 = ssub.s32 %s11, 1
      %p193 = scmp.lt.s32.totalorder %s16, 1
      %s194 = scalar_select %p193, %s16, 1
      %s195 = smul.addr %s194, 32
      %s196 = smul.addr %s195, 4
      %s197 = scalar_lea.vmem %s0, %s196
      %p198 = pneg %p37
      %p199 = pneg %p34
      %p200 = pneg %p58
      %p201 = pneg %p55
      %p202 = pneg %p79
      %p203 = pneg %p76
      %p204 = pneg %p100
      %p205 = pneg %p97
      %p206 = pneg %p121
      %p207 = pneg %p118
      %p208 = pneg %p147
      %p209 = pneg %p144
      %p210 = scmp.lt.s32.totalorder %s16, 1
      %s211 = scalar_select %p210, %s16, 1
      %s212 = smul.addr %s211, 32
      %s213 = smul.addr %s212, 8
      %s214 = scalar_lea.vmem %s5, %s213
      %p215 = scmp.lt.s32.totalorder %s16, 1
      %s216 = scalar_select %p215, %s16, 1
      %s217 = smul.addr %s216, 32
      %s218 = smul.addr %s217, 4
      %s219 = scalar_lea.vmem %s0, %s218
      %p220 = scmp.lt.s32.totalorder %s16, 1
      %s221 = scalar_select %p220, %s16, 1
      %s222 = smul.addr %s221, 32
      %s223 = smul.addr %s222, 8
      %s224 = scalar_lea.vmem %s5, %s223
      %v226 = vld [vmem:[%s219] sm:$0xf]
      %v227 = vld [vmem:[%s219 + $0x4] sm:$0xf]
      %v228 = vld [vmem:[%s219 + $0x8] sm:$0xf]
      %v229 = vld [vmem:[%s219 + $0xc] sm:$0xf]
      %v230 = vld [vmem:[%s219 + $0x10] sm:$0xf]
      %v231 = vld [vmem:[%s219 + $0x14] sm:$0xf]
      %v232 = vld [vmem:[%s219 + $0x18] sm:$0xf]
      %v233 = vld [vmem:[%s219 + $0x1c] sm:$0xf]
      %v234 = vld [vmem:[%s219 + $0x20] sm:$0xf]
      %v235 = vld [vmem:[%s219 + $0x24] sm:$0xf]
      %v236 = vld [vmem:[%s219 + $0x28] sm:$0xf]
      %v237 = vld [vmem:[%s219 + $0x2c] sm:$0xf]
      %v238 = vld [vmem:[%s219 + $0x30] sm:$0xf]
      %v239 = vld [vmem:[%s219 + $0x34] sm:$0xf]
      %v240 = vld [vmem:[%s219 + $0x38] sm:$0xf]
      %v241 = vld [vmem:[%s219 + $0x3c] sm:$0xf]
      %v242 = vld [vmem:[%s219 + $0x40] sm:$0xf]
      %v243 = vld [vmem:[%s219 + $0x44] sm:$0xf]
      %v244 = vld [vmem:[%s219 + $0x48] sm:$0xf]
      %v245 = vld [vmem:[%s219 + $0x4c] sm:$0xf]
      %v246 = vld [vmem:[%s219 + $0x50] sm:$0xf]
      %v247 = vld [vmem:[%s219 + $0x54] sm:$0xf]
      %v248 = vld [vmem:[%s219 + $0x58] sm:$0xf]
      %v249 = vld [vmem:[%s219 + $0x5c] sm:$0xf]
      %v250 = vld [vmem:[%s219 + $0x60] sm:$0xf]
      %v251 = vld [vmem:[%s219 + $0x64] sm:$0xf]
      %v252 = vld [vmem:[%s219 + $0x68] sm:$0xf]
      %v253 = vld [vmem:[%s219 + $0x6c] sm:$0xf]
      %v254 = vld [vmem:[%s219 + $0x70] sm:$0xf]
      %v255 = vld [vmem:[%s219 + $0x74] sm:$0xf]
      %v256 = vld [vmem:[%s219 + $0x78] sm:$0xf]
      %v257 = vld [vmem:[%s219 + $0x7c] sm:$0xf]
      %v258 = vld [vmem:[%s1] sm:$0xf]
      %v259 = vld [vmem:[%s1 + $0x4] sm:$0xf]
      %v260 = vld [vmem:[%s1 + $0x8] sm:$0xf]
      %v261 = vld [vmem:[%s1 + $0xc] sm:$0xf]
      %v262 = vld [vmem:[%s1 + $0x10] sm:$0x3]
      %v263 = vld [vmem:[%s2] sm:$0x1]
      %v265 = vlaneseq
      %v266 = vshrl.u32 %v265, 7
      %v267 = vsub.s32 0, %v266
      %v268 = vrot.slane %v263, %v267
      %v302 = vunpack.c.l.b16 %v226
      %v303 = vunpack.c.l.b16 %v227
      %v304 = vunpack.c.l.b16 %v228
      %v305 = vunpack.c.l.b16 %v229
      %v306 = vunpack.c.l.b16 %v230
      %v307 = vunpack.c.l.b16 %v231
      %v308 = vunpack.c.l.b16 %v232
      %v309 = vunpack.c.l.b16 %v233
      %v310 = vunpack.c.l.b16 %v234
      %v311 = vunpack.c.l.b16 %v235
      %v312 = vunpack.c.l.b16 %v236
      %v313 = vunpack.c.l.b16 %v237
      %v314 = vunpack.c.l.b16 %v238
      %v315 = vunpack.c.l.b16 %v239
      %v316 = vunpack.c.l.b16 %v240
      %v317 = vunpack.c.l.b16 %v241
      %v318 = vunpack.c.l.b16 %v242
      %v319 = vunpack.c.l.b16 %v243
      %v320 = vunpack.c.l.b16 %v244
      %v321 = vunpack.c.l.b16 %v245
      %v322 = vunpack.c.l.b16 %v246
      %v323 = vunpack.c.l.b16 %v247
      %v324 = vunpack.c.l.b16 %v248
      %v325 = vunpack.c.l.b16 %v249
      %v326 = vunpack.c.l.b16 %v250
      %v327 = vunpack.c.l.b16 %v251
      %v328 = vunpack.c.l.b16 %v252
      %v329 = vunpack.c.l.b16 %v253
      %v330 = vunpack.c.l.b16 %v254
      %v331 = vunpack.c.l.b16 %v255
      %v332 = vunpack.c.l.b16 %v256
      %v333 = vunpack.c.l.b16 %v257
      %v334 = vpack.c.b16 %v303, %v302
      %v335 = vpack.c.b16 %v305, %v304
      %v336 = vpack.c.b16 %v307, %v306
      %v337 = vpack.c.b16 %v309, %v308
      %v338 = vpack.c.b16 %v311, %v310
      %v339 = vpack.c.b16 %v313, %v312
      %v340 = vpack.c.b16 %v315, %v314
      %v341 = vpack.c.b16 %v317, %v316
      %v342 = vpack.c.b16 %v319, %v318
      %v343 = vpack.c.b16 %v321, %v320
      %v344 = vpack.c.b16 %v323, %v322
      %v345 = vpack.c.b16 %v325, %v324
      %v346 = vpack.c.b16 %v327, %v326
      %v347 = vpack.c.b16 %v329, %v328
      %v348 = vpack.c.b16 %v331, %v330
      %v349 = vpack.c.b16 %v333, %v332
      %v355 = vunpack.c.l.b16 %v258
      %v356 = vunpack.c.l.b16 %v259
      %v357 = vunpack.c.l.b16 %v260
      %v358 = vunpack.c.l.b16 %v261
      %v359 = vunpack.c.l.b16 %v262
      %v360 = vpack.c.b16 %v356, %v355
      %v361 = vpack.c.b16 %v358, %v357
      %v362 = vpack.c.b16 %v359, %v359
      %vm365 = vcmask 293888
      %v367 = vsel %vm365, %v334, 0
      %v370 = vsel %vm365, %v335, 0
      %v373 = vsel %vm365, %v336, 0
      %v376 = vsel %vm365, %v337, 0
      %v379 = vsel %vm365, %v338, 0
      %v382 = vsel %vm365, %v339, 0
      %v385 = vsel %vm365, %v340, 0
      %v388 = vsel %vm365, %v341, 0
      %v391 = vsel %vm365, %v342, 0
      %v394 = vsel %vm365, %v343, 0
      %v397 = vsel %vm365, %v344, 0
      %v400 = vsel %vm365, %v345, 0
      %v403 = vsel %vm365, %v346, 0
      %v406 = vsel %vm365, %v347, 0
      %v409 = vsel %vm365, %v348, 0
      %v412 = vsel %vm365, %v349, 0
      %vm414 = vcmask 1041408
      %v416 = vsel %vm414, %v362, 0
      %418 = vmatprep.subr.bf16.mxu0 0
      %419 = vmatpush1.bf16.msra.mxu0 0
      %420 = vmatprep.subr.bf16.mxu0 0
      %421 = vmatpush1.bf16.msra.mxu0 0
      %422 = vmatprep.subr.bf16.mxu0 0
      %423 = vmatpush1.bf16.msra.mxu0 0
      %424 = vmatprep.subr.bf16.mxu0 0
      %425 = vmatpush1.bf16.msra.mxu0 0
      %426 = vmatprep.subr.bf16.mxu0 0
      %427 = vmatpush1.bf16.msra.mxu0 0
      %428 = vmatprep.subr.bf16.mxu0 0
      %429 = vmatpush1.bf16.msra.mxu0 %v416
      %430 = vmatprep.subr.bf16.mxu0 0
      %431 = vmatpush1.bf16.msra.mxu0 %v361
      %432 = vmatprep.subr.bf16.mxu0 0
      %433 = vmatpush1.bf16.msra.mxu0 %v360
      %434 = vmatprep.subr.bf16.mxu0 0
      %435 = vmatpush2.bf16.msra.mxu0 0
      %436 = vmatprep.subr.bf16.mxu0 0
      %437 = vmatpush2.bf16.msra.mxu0 0
      %438 = vmatprep.subr.bf16.mxu0 0
      %439 = vmatpush2.bf16.msra.mxu0 0
      %440 = vmatprep.subr.bf16.mxu0 0
      %441 = vmatpush2.bf16.msra.mxu0 0
      %442 = vmatprep.subr.bf16.mxu0 0
      %443 = vmatpush2.bf16.msra.mxu0 0
      %444 = vmatprep.subr.bf16.mxu0 0
      %445 = vmatpush2.bf16.msra.mxu0 0
      %446 = vmatprep.subr.bf16.mxu0 0
      %447 = vmatpush2.bf16.msra.mxu0 0
      %448 = vmatprep.subr.bf16.mxu0 0
      %449 = vmatpush2.bf16.msra.mxu0 0
      %450 = vmatprep.mubr.bf16.mxu0 0
      %451 = vmatmul.mubr.bf16.gmra.mxu0 %v367
      %v452 = vpop.f32.mrf.mxu0
      %v453 = vadd.f32 %v268, %v452
      %v454 = vpop.f32.mrf.mxu0
      %v455 = vpop.f32.mrf.mxu0
      %v456 = vadd.f32 %v268, %v455
      %v457 = vpop.f32.mrf.mxu0
      %458 = vmatprep.mubr.bf16.mxu0 0
      %459 = vmatmul.mubr.bf16.gmra.mxu0 %v370
      %v460 = vpop.f32.mrf.mxu0
      %v461 = vadd.f32 %v268, %v460
      %v462 = vpop.f32.mrf.mxu0
      %v463 = vpop.f32.mrf.mxu0
      %v464 = vadd.f32 %v268, %v463
      %v465 = vpop.f32.mrf.mxu0
      %466 = vmatprep.mubr.bf16.mxu0 0
      %467 = vmatmul.mubr.bf16.gmra.mxu0 %v373
      %v468 = vpop.f32.mrf.mxu0
      %v469 = vadd.f32 %v268, %v468
      %v470 = vpop.f32.mrf.mxu0
      %v471 = vpop.f32.mrf.mxu0
      %v472 = vadd.f32 %v268, %v471
      %v473 = vpop.f32.mrf.mxu0
      %474 = vmatprep.mubr.bf16.mxu0 0
      %475 = vmatmul.mubr.bf16.gmra.mxu0 %v376
      %v476 = vpop.f32.mrf.mxu0
      %v477 = vadd.f32 %v268, %v476
      %v478 = vpop.f32.mrf.mxu0
      %v479 = vpop.f32.mrf.mxu0
      %v480 = vadd.f32 %v268, %v479
      %v481 = vpop.f32.mrf.mxu0
      %482 = vmatprep.mubr.bf16.mxu0 0
      %483 = vmatmul.mubr.bf16.gmra.mxu0 %v379
      %v484 = vpop.f32.mrf.mxu0
      %v485 = vadd.f32 %v268, %v484
      %v486 = vpop.f32.mrf.mxu0
      %v487 = vpop.f32.mrf.mxu0
      %v488 = vadd.f32 %v268, %v487
      %v489 = vpop.f32.mrf.mxu0
      %490 = vmatprep.mubr.bf16.mxu0 0
      %491 = vmatmul.mubr.bf16.gmra.mxu0 %v382
      %v492 = vpop.f32.mrf.mxu0
      %v493 = vadd.f32 %v268, %v492
      %v494 = vpop.f32.mrf.mxu0
      %v495 = vpop.f32.mrf.mxu0
      %v496 = vadd.f32 %v268, %v495
      %v497 = vpop.f32.mrf.mxu0
      %498 = vmatprep.mubr.bf16.mxu0 0
      %499 = vmatmul.mubr.bf16.gmra.mxu0 %v385
      %v500 = vpop.f32.mrf.mxu0
      %v501 = vadd.f32 %v268, %v500
      %v502 = vpop.f32.mrf.mxu0
      %v503 = vpop.f32.mrf.mxu0
      %v504 = vadd.f32 %v268, %v503
      %v505 = vpop.f32.mrf.mxu0
      %506 = vmatprep.mubr.bf16.mxu0 0
      %507 = vmatmul.mubr.bf16.gmra.mxu0 %v388
      %v508 = vpop.f32.mrf.mxu0
      %v509 = vadd.f32 %v268, %v508
      %v510 = vpop.f32.mrf.mxu0
      %v511 = vpop.f32.mrf.mxu0
      %v512 = vadd.f32 %v268, %v511
      %v513 = vpop.f32.mrf.mxu0
      %514 = vmatprep.mubr.bf16.mxu0 0
      %515 = vmatmul.mubr.bf16.gmra.mxu0 %v391
      %v516 = vpop.f32.mrf.mxu0
      %v517 = vadd.f32 %v268, %v516
      %v518 = vpop.f32.mrf.mxu0
      %v519 = vpop.f32.mrf.mxu0
      %v520 = vadd.f32 %v268, %v519
      %v521 = vpop.f32.mrf.mxu0
      %522 = vmatprep.mubr.bf16.mxu0 0
      %523 = vmatmul.mubr.bf16.gmra.mxu0 %v394
      %v524 = vpop.f32.mrf.mxu0
      %v525 = vadd.f32 %v268, %v524
      %v526 = vpop.f32.mrf.mxu0
      %v527 = vpop.f32.mrf.mxu0
      %v528 = vadd.f32 %v268, %v527
      %v529 = vpop.f32.mrf.mxu0
      %530 = vmatprep.mubr.bf16.mxu0 0
      %531 = vmatmul.mubr.bf16.gmra.mxu0 %v397
      %v532 = vpop.f32.mrf.mxu0
      %v533 = vadd.f32 %v268, %v532
      %v534 = vpop.f32.mrf.mxu0
      %v535 = vpop.f32.mrf.mxu0
      %v536 = vadd.f32 %v268, %v535
      %v537 = vpop.f32.mrf.mxu0
      %538 = vmatprep.mubr.bf16.mxu0 0
      %539 = vmatmul.mubr.bf16.gmra.mxu0 %v400
      %v540 = vpop.f32.mrf.mxu0
      %v541 = vadd.f32 %v268, %v540
      %v542 = vpop.f32.mrf.mxu0
      %v543 = vpop.f32.mrf.mxu0
      %v544 = vadd.f32 %v268, %v543
      %v545 = vpop.f32.mrf.mxu0
      %546 = vmatprep.mubr.bf16.mxu0 0
      %547 = vmatmul.mubr.bf16.gmra.mxu0 %v403
      %v548 = vpop.f32.mrf.mxu0
      %v549 = vadd.f32 %v268, %v548
      %v550 = vpop.f32.mrf.mxu0
      %v551 = vpop.f32.mrf.mxu0
      %v552 = vadd.f32 %v268, %v551
      %v553 = vpop.f32.mrf.mxu0
      %554 = vmatprep.mubr.bf16.mxu0 0
      %555 = vmatmul.mubr.bf16.gmra.mxu0 %v406
      %v556 = vpop.f32.mrf.mxu0
      %v557 = vadd.f32 %v268, %v556
      %v558 = vpop.f32.mrf.mxu0
      %v559 = vpop.f32.mrf.mxu0
      %v560 = vadd.f32 %v268, %v559
      %v561 = vpop.f32.mrf.mxu0
      %562 = vmatprep.mubr.bf16.mxu0 0
      %563 = vmatmul.mubr.bf16.gmra.mxu0 %v409
      %v564 = vpop.f32.mrf.mxu0
      %v565 = vadd.f32 %v268, %v564
      %v566 = vpop.f32.mrf.mxu0
      %v567 = vpop.f32.mrf.mxu0
      %v568 = vadd.f32 %v268, %v567
      %v569 = vpop.f32.mrf.mxu0
      %570 = vmatprep.mubr.bf16.mxu0 0
      %571 = vmatmul.mubr.bf16.gmra.mxu0 %v412
      %v572 = vpop.f32.mrf.mxu0
      %v573 = vadd.f32 %v268, %v572
      %v574 = vpop.f32.mrf.mxu0
      %v575 = vpop.f32.mrf.mxu0
      %v576 = vadd.f32 %v268, %v575
      %v577 = vpop.f32.mrf.mxu0
      %578 = vdwg.mxu0
      %v579 = vmax.f32 %v453, 0.0
      %v580 = vmax.f32 %v456, 0.0
      %v581 = vmax.f32 %v461, 0.0
      %v582 = vmax.f32 %v464, 0.0
      %v583 = vmax.f32 %v469, 0.0
      %v584 = vmax.f32 %v472, 0.0
      %v585 = vmax.f32 %v477, 0.0
      %v586 = vmax.f32 %v480, 0.0
      %v587 = vmax.f32 %v485, 0.0
      %v588 = vmax.f32 %v488, 0.0
      %v589 = vmax.f32 %v493, 0.0
      %v590 = vmax.f32 %v496, 0.0
      %v591 = vmax.f32 %v501, 0.0
      %v592 = vmax.f32 %v504, 0.0
      %v593 = vmax.f32 %v509, 0.0
      %v594 = vmax.f32 %v512, 0.0
      %v595 = vmax.f32 %v517, 0.0
      %v596 = vmax.f32 %v520, 0.0
      %v597 = vmax.f32 %v525, 0.0
      %v598 = vmax.f32 %v528, 0.0
      %v599 = vmax.f32 %v533, 0.0
      %v600 = vmax.f32 %v536, 0.0
      %v601 = vmax.f32 %v541, 0.0
      %v602 = vmax.f32 %v544, 0.0
      %v603 = vmax.f32 %v549, 0.0
      %v604 = vmax.f32 %v552, 0.0
      %v605 = vmax.f32 %v557, 0.0
      %v606 = vmax.f32 %v560, 0.0
      %v607 = vmax.f32 %v565, 0.0
      %v608 = vmax.f32 %v568, 0.0
      %v609 = vmax.f32 %v573, 0.0
      %v610 = vmax.f32 %v576, 0.0
      %611 = vst [vmem:[#allocation2] sm:$0xf] 0
      %612 = vst [vmem:[#allocation2 + $0x4] sm:$0xf] 0
      %613 = vst [vmem:[#allocation2 + $0x8] sm:$0xf] 0
      %614 = vst [vmem:[#allocation2 + $0xc] sm:$0xf] 0
      %s615 = scalar_lea.vmem [#allocation2], 272
      %616 = vst [vmem:[%s615] sm:$0xf] 0
      %617 = vst [vmem:[%s615 + $0x4] sm:$0xf] 0
      %618 = vst [vmem:[%s615 + $0x8] sm:$0xf] 0
      %619 = vst [vmem:[%s615 + $0xc] sm:$0xf] 0
      %s620 = scalar_lea.vmem [#allocation2], 16
      %621 = vst [vmem:[%s620] sm:$0xf] 0
      %622 = vst [vmem:[%s620 + $0x10] sm:$0xf] 0
      %623 = vst [vmem:[%s620 + $0x20] sm:$0xf] 0
      %624 = vst [vmem:[%s620 + $0x30] sm:$0xf] 0
      %625 = vst [vmem:[%s620 + $0x40] sm:$0xf] 0
      %626 = vst [vmem:[%s620 + $0x50] sm:$0xf] 0
      %627 = vst [vmem:[%s620 + $0x60] sm:$0xf] 0
      %628 = vst [vmem:[%s620 + $0x70] sm:$0xf] 0
      %629 = vst [vmem:[%s620 + $0x80] sm:$0xf] 0
      %630 = vst [vmem:[%s620 + $0x90] sm:$0xf] 0
      %631 = vst [vmem:[%s620 + $0xa0] sm:$0xf] 0
      %632 = vst [vmem:[%s620 + $0xb0] sm:$0xf] 0
      %633 = vst [vmem:[%s620 + $0xc0] sm:$0xf] 0
      %634 = vst [vmem:[%s620 + $0xd0] sm:$0xf] 0
      %635 = vst [vmem:[%s620 + $0xe0] sm:$0xf] 0
      %636 = vst [vmem:[%s620 + $0xf0] sm:$0xf] 0
      %637 = vst [vmem:[%s620 + $0xc] sm:$0xf] 0
      %638 = vst [vmem:[%s620 + $0x1c] sm:$0xf] 0
      %639 = vst [vmem:[%s620 + $0x2c] sm:$0xf] 0
      %640 = vst [vmem:[%s620 + $0x3c] sm:$0xf] 0
      %641 = vst [vmem:[%s620 + $0x4c] sm:$0xf] 0
      %642 = vst [vmem:[%s620 + $0x5c] sm:$0xf] 0
      %643 = vst [vmem:[%s620 + $0x6c] sm:$0xf] 0
      %644 = vst [vmem:[%s620 + $0x7c] sm:$0xf] 0
      %645 = vst [vmem:[%s620 + $0x8c] sm:$0xf] 0
      %646 = vst [vmem:[%s620 + $0x9c] sm:$0xf] 0
      %647 = vst [vmem:[%s620 + $0xac] sm:$0xf] 0
      %648 = vst [vmem:[%s620 + $0xbc] sm:$0xf] 0
      %649 = vst [vmem:[%s620 + $0xcc] sm:$0xf] 0
      %650 = vst [vmem:[%s620 + $0xdc] sm:$0xf] 0
      %651 = vst [vmem:[%s620 + $0xec] sm:$0xf] 0
      %652 = vst [vmem:[%s620 + $0xfc] sm:$0xf] 0
      %v653 = vpack.c.bf16 %v580, %v579
      %v654 = vpack.c.bf16 %v582, %v581
      %v655 = vpack.c.bf16 %v584, %v583
      %v656 = vpack.c.bf16 %v586, %v585
      %v657 = vpack.c.bf16 %v588, %v587
      %v658 = vpack.c.bf16 %v590, %v589
      %v659 = vpack.c.bf16 %v592, %v591
      %v660 = vpack.c.bf16 %v594, %v593
      %v661 = vpack.c.bf16 %v596, %v595
      %v662 = vpack.c.bf16 %v598, %v597
      %v663 = vpack.c.bf16 %v600, %v599
      %v664 = vpack.c.bf16 %v602, %v601
      %v665 = vpack.c.bf16 %v604, %v603
      %v666 = vpack.c.bf16 %v606, %v605
      %v667 = vpack.c.bf16 %v608, %v607
      %v668 = vpack.c.bf16 %v610, %v609
      %v685 = vunpack.c.l.b16 %v653
      %v686 = vunpack.c.h.b16 %v653
      %v687 = vunpack.c.l.b16 %v654
      %v688 = vunpack.c.h.b16 %v654
      %v689 = vunpack.c.l.b16 %v655
      %v690 = vunpack.c.h.b16 %v655
      %v691 = vunpack.c.l.b16 %v656
      %v692 = vunpack.c.h.b16 %v656
      %v693 = vunpack.c.l.b16 %v657
      %v694 = vunpack.c.h.b16 %v657
      %v695 = vunpack.c.l.b16 %v658
      %v696 = vunpack.c.h.b16 %v658
      %v697 = vunpack.c.l.b16 %v659
      %v698 = vunpack.c.h.b16 %v659
      %v699 = vunpack.c.l.b16 %v660
      %v700 = vunpack.c.h.b16 %v660
      %v701 = vunpack.c.l.b16 %v661
      %v702 = vunpack.c.h.b16 %v661
      %v703 = vunpack.c.l.b16 %v662
      %v704 = vunpack.c.h.b16 %v662
      %v705 = vunpack.c.l.b16 %v663
      %v706 = vunpack.c.h.b16 %v663
      %v707 = vunpack.c.l.b16 %v664
      %v708 = vunpack.c.h.b16 %v664
      %v709 = vunpack.c.l.b16 %v665
      %v710 = vunpack.c.h.b16 %v665
      %v711 = vunpack.c.l.b16 %v666
      %v712 = vunpack.c.h.b16 %v666
      %v713 = vunpack.c.l.b16 %v667
      %v714 = vunpack.c.h.b16 %v667
      %v715 = vunpack.c.l.b16 %v668
      %v716 = vunpack.c.h.b16 %v668
      %v717 = vpack.c.b16 %v685, %v685
      %v718 = vpack.c.b16 %v686, %v686
      %v719 = vpack.c.b16 %v687, %v687
      %v720 = vpack.c.b16 %v688, %v688
      %v721 = vpack.c.b16 %v689, %v689
      %v722 = vpack.c.b16 %v690, %v690
      %v723 = vpack.c.b16 %v691, %v691
      %v724 = vpack.c.b16 %v692, %v692
      %v725 = vpack.c.b16 %v693, %v693
      %v726 = vpack.c.b16 %v694, %v694
      %v727 = vpack.c.b16 %v695, %v695
      %v728 = vpack.c.b16 %v696, %v696
      %v729 = vpack.c.b16 %v697, %v697
      %v730 = vpack.c.b16 %v698, %v698
      %v731 = vpack.c.b16 %v699, %v699
      %v732 = vpack.c.b16 %v700, %v700
      %v733 = vpack.c.b16 %v701, %v701
      %v734 = vpack.c.b16 %v702, %v702
      %v735 = vpack.c.b16 %v703, %v703
      %v736 = vpack.c.b16 %v704, %v704
      %v737 = vpack.c.b16 %v705, %v705
      %v738 = vpack.c.b16 %v706, %v706
      %v739 = vpack.c.b16 %v707, %v707
      %v740 = vpack.c.b16 %v708, %v708
      %v741 = vpack.c.b16 %v709, %v709
      %v742 = vpack.c.b16 %v710, %v710
      %v743 = vpack.c.b16 %v711, %v711
      %v744 = vpack.c.b16 %v712, %v712
      %v745 = vpack.c.b16 %v713, %v713
      %v746 = vpack.c.b16 %v714, %v714
      %v747 = vpack.c.b16 %v715, %v715
      %v748 = vpack.c.b16 %v716, %v716
      %781 = vst [vmem:[%s620 + $0x4] sm:$0xf] %v717
      %782 = vst [vmem:[%s620 + $0x8] sm:$0xf] %v718
      %783 = vst [vmem:[%s620 + $0x14] sm:$0xf] %v719
      %784 = vst [vmem:[%s620 + $0x18] sm:$0xf] %v720
      %785 = vst [vmem:[%s620 + $0x24] sm:$0xf] %v721
      %786 = vst [vmem:[%s620 + $0x28] sm:$0xf] %v722
      %787 = vst [vmem:[%s620 + $0x34] sm:$0xf] %v723
      %788 = vst [vmem:[%s620 + $0x38] sm:$0xf] %v724
      %789 = vst [vmem:[%s620 + $0x44] sm:$0xf] %v725
      %790 = vst [vmem:[%s620 + $0x48] sm:$0xf] %v726
      %791 = vst [vmem:[%s620 + $0x54] sm:$0xf] %v727
      %792 = vst [vmem:[%s620 + $0x58] sm:$0xf] %v728
      %793 = vst [vmem:[%s620 + $0x64] sm:$0xf] %v729
      %794 = vst [vmem:[%s620 + $0x68] sm:$0xf] %v730
      %795 = vst [vmem:[%s620 + $0x74] sm:$0xf] %v731
      %796 = vst [vmem:[%s620 + $0x78] sm:$0xf] %v732
      %797 = vst [vmem:[%s620 + $0x84] sm:$0xf] %v733
      %798 = vst [vmem:[%s620 + $0x88] sm:$0xf] %v734
      %799 = vst [vmem:[%s620 + $0x94] sm:$0xf] %v735
      %800 = vst [vmem:[%s620 + $0x98] sm:$0xf] %v736
      %801 = vst [vmem:[%s620 + $0xa4] sm:$0xf] %v737
      %802 = vst [vmem:[%s620 + $0xa8] sm:$0xf] %v738
      %803 = vst [vmem:[%s620 + $0xb4] sm:$0xf] %v739
      %804 = vst [vmem:[%s620 + $0xb8] sm:$0xf] %v740
      %805 = vst [vmem:[%s620 + $0xc4] sm:$0xf] %v741
      %806 = vst [vmem:[%s620 + $0xc8] sm:$0xf] %v742
      %807 = vst [vmem:[%s620 + $0xd4] sm:$0xf] %v743
      %808 = vst [vmem:[%s620 + $0xd8] sm:$0xf] %v744
      %809 = vst [vmem:[%s620 + $0xe4] sm:$0xf] %v745
      %810 = vst [vmem:[%s620 + $0xe8] sm:$0xf] %v746
      %811 = vst [vmem:[%s620 + $0xf4] sm:$0xf] %v747
      %812 = vst [vmem:[%s620 + $0xf8] sm:$0xf] %v748
      %v813 = vld [vmem:[#allocation2] sm:$0x8]
      %v814 = vld [vmem:[#allocation2 + $0x4] sm:$0xf]
      %v815 = vld [vmem:[#allocation2 + $0x8] sm:$0xf]
      %v816 = vld [vmem:[#allocation2 + $0x10] sm:$0x8]
      %v817 = vld [vmem:[#allocation2 + $0x14] sm:$0xf]
      %v818 = vld [vmem:[#allocation2 + $0x18] sm:$0xf]
      %v819 = vld [vmem:[#allocation2 + $0x20] sm:$0x8]
      %v820 = vld [vmem:[#allocation2 + $0x24] sm:$0xf]
      %v821 = vld [vmem:[#allocation2 + $0x28] sm:$0xf]
      %v822 = vld [vmem:[#allocation2 + $0x30] sm:$0x8]
      %v823 = vld [vmem:[#allocation2 + $0x34] sm:$0xf]
      %v824 = vld [vmem:[#allocation2 + $0x38] sm:$0xf]
      %v825 = vld [vmem:[#allocation2 + $0x40] sm:$0x8]
      %v826 = vld [vmem:[#allocation2 + $0x44] sm:$0xf]
      %v827 = vld [vmem:[#allocation2 + $0x48] sm:$0xf]
      %v828 = vld [vmem:[#allocation2 + $0x50] sm:$0x8]
      %v829 = vld [vmem:[#allocation2 + $0x54] sm:$0xf]
      %v830 = vld [vmem:[#allocation2 + $0x58] sm:$0xf]
      %v831 = vld [vmem:[#allocation2 + $0x60] sm:$0x8]
      %v832 = vld [vmem:[#allocation2 + $0x64] sm:$0xf]
      %v833 = vld [vmem:[#allocation2 + $0x68] sm:$0xf]
      %v834 = vld [vmem:[#allocation2 + $0x70] sm:$0x8]
      %v835 = vld [vmem:[#allocation2 + $0x74] sm:$0xf]
      %v836 = vld [vmem:[#allocation2 + $0x78] sm:$0xf]
      %v837 = vld [vmem:[#allocation2 + $0x80] sm:$0x8]
      %v838 = vld [vmem:[#allocation2 + $0x84] sm:$0xf]
      %v839 = vld [vmem:[#allocation2 + $0x88] sm:$0xf]
      %v840 = vld [vmem:[#allocation2 + $0x90] sm:$0x8]
      %v841 = vld [vmem:[#allocation2 + $0x94] sm:$0xf]
      %v842 = vld [vmem:[#allocation2 + $0x98] sm:$0xf]
      %v843 = vld [vmem:[#allocation2 + $0xa0] sm:$0x8]
      %v844 = vld [vmem:[#allocation2 + $0xa4] sm:$0xf]
      %v845 = vld [vmem:[#allocation2 + $0xa8] sm:$0xf]
      %v846 = vld [vmem:[#allocation2 + $0xb0] sm:$0x8]
      %v847 = vld [vmem:[#allocation2 + $0xb4] sm:$0xf]
      %v848 = vld [vmem:[#allocation2 + $0xb8] sm:$0xf]
      %v849 = vld [vmem:[#allocation2 + $0xc0] sm:$0x8]
      %v850 = vld [vmem:[#allocation2 + $0xc4] sm:$0xf]
      %v851 = vld [vmem:[#allocation2 + $0xc8] sm:$0xf]
      %v852 = vld [vmem:[#allocation2 + $0xd0] sm:$0x8]
      %v853 = vld [vmem:[#allocation2 + $0xd4] sm:$0xf]
      %v854 = vld [vmem:[#allocation2 + $0xd8] sm:$0xf]
      %v855 = vld [vmem:[#allocation2 + $0xe0] sm:$0x8]
      %v856 = vld [vmem:[#allocation2 + $0xe4] sm:$0xf]
      %v857 = vld [vmem:[#allocation2 + $0xe8] sm:$0xf]
      %v858 = vld [vmem:[#allocation2 + $0xf0] sm:$0x8]
      %v859 = vld [vmem:[#allocation2 + $0xf4] sm:$0xf]
      %v860 = vld [vmem:[#allocation2 + $0xf8] sm:$0xf]
      %vm861 = vsmask.f32 256
      %vm862 = vsmask.f32 4368
      %vm863 = vmor %vm861, %vm862
      %v865 = vshrl.u32 %v813, 16
      %v867 = vrot.slane %v865, 7
      %v868 = vrot.slane %v867, 4
      %v870 = vshrl.u32 %v814, 16
      %v872 = vrot.slane %v870, 7
      %v873 = vshll.u32 %v814, 16
      %v875 = vor.u32 %v872, %v873
      %v876 = vsel %vm863, %v868, %v875
      %v877 = vrot.slane %v872, 4
      %v879 = vshrl.u32 %v815, 16
      %v881 = vrot.slane %v879, 7
      %v882 = vshll.u32 %v815, 16
      %v884 = vor.u32 %v881, %v882
      %v885 = vsel %vm863, %v877, %v884
      %v887 = vshrl.u32 %v816, 16
      %v889 = vrot.slane %v887, 7
      %v890 = vrot.slane %v889, 4
      %v892 = vshrl.u32 %v817, 16
      %v894 = vrot.slane %v892, 7
      %v895 = vshll.u32 %v817, 16
      %v897 = vor.u32 %v894, %v895
      %v898 = vsel %vm863, %v890, %v897
      %v899 = vrot.slane %v894, 4
      %v901 = vshrl.u32 %v818, 16
      %v903 = vrot.slane %v901, 7
      %v904 = vshll.u32 %v818, 16
      %v906 = vor.u32 %v903, %v904
      %v907 = vsel %vm863, %v899, %v906
      %v909 = vshrl.u32 %v819, 16
      %v911 = vrot.slane %v909, 7
      %v912 = vrot.slane %v911, 4
      %v914 = vshrl.u32 %v820, 16
      %v916 = vrot.slane %v914, 7
      %v917 = vshll.u32 %v820, 16
      %v919 = vor.u32 %v916, %v917
      %v920 = vsel %vm863, %v912, %v919
      %v921 = vrot.slane %v916, 4
      %v923 = vshrl.u32 %v821, 16
      %v925 = vrot.slane %v923, 7
      %v926 = vshll.u32 %v821, 16
      %v928 = vor.u32 %v925, %v926
      %v929 = vsel %vm863, %v921, %v928
      %v931 = vshrl.u32 %v822, 16
      %v933 = vrot.slane %v931, 7
      %v934 = vrot.slane %v933, 4
      %v936 = vshrl.u32 %v823, 16
      %v938 = vrot.slane %v936, 7
      %v939 = vshll.u32 %v823, 16
      %v941 = vor.u32 %v938, %v939
      %v942 = vsel %vm863, %v934, %v941
      %v943 = vrot.slane %v938, 4
      %v945 = vshrl.u32 %v824, 16
      %v947 = vrot.slane %v945, 7
      %v948 = vshll.u32 %v824, 16
      %v950 = vor.u32 %v947, %v948
      %v951 = vsel %vm863, %v943, %v950
      %v953 = vshrl.u32 %v825, 16
      %v955 = vrot.slane %v953, 7
      %v956 = vrot.slane %v955, 4
      %v958 = vshrl.u32 %v826, 16
      %v960 = vrot.slane %v958, 7
      %v961 = vshll.u32 %v826, 16
      %v963 = vor.u32 %v960, %v961
      %v964 = vsel %vm863, %v956, %v963
      %v965 = vrot.slane %v960, 4
      %v967 = vshrl.u32 %v827, 16
      %v969 = vrot.slane %v967, 7
      %v970 = vshll.u32 %v827, 16
      %v972 = vor.u32 %v969, %v970
      %v973 = vsel %vm863, %v965, %v972
      %v975 = vshrl.u32 %v828, 16
      %v977 = vrot.slane %v975, 7
      %v978 = vrot.slane %v977, 4
      %v980 = vshrl.u32 %v829, 16
      %v982 = vrot.slane %v980, 7
      %v983 = vshll.u32 %v829, 16
      %v985 = vor.u32 %v982, %v983
      %v986 = vsel %vm863, %v978, %v985
      %v987 = vrot.slane %v982, 4
      %v989 = vshrl.u32 %v830, 16
      %v991 = vrot.slane %v989, 7
      %v992 = vshll.u32 %v830, 16
      %v994 = vor.u32 %v991, %v992
      %v995 = vsel %vm863, %v987, %v994
      %v997 = vshrl.u32 %v831, 16
      %v999 = vrot.slane %v997, 7
      %v1000 = vrot.slane %v999, 4
      %v1002 = vshrl.u32 %v832, 16
      %v1004 = vrot.slane %v1002, 7
      %v1005 = vshll.u32 %v832, 16
      %v1007 = vor.u32 %v1004, %v1005
      %v1008 = vsel %vm863, %v1000, %v1007
      %v1009 = vrot.slane %v1004, 4
      %v1011 = vshrl.u32 %v833, 16
      %v1013 = vrot.slane %v1011, 7
      %v1014 = vshll.u32 %v833, 16
      %v1016 = vor.u32 %v1013, %v1014
      %v1017 = vsel %vm863, %v1009, %v1016
      %v1019 = vshrl.u32 %v834, 16
      %v1021 = vrot.slane %v1019, 7
      %v1022 = vrot.slane %v1021, 4
      %v1024 = vshrl.u32 %v835, 16
      %v1026 = vrot.slane %v1024, 7
      %v1027 = vshll.u32 %v835, 16
      %v1029 = vor.u32 %v1026, %v1027
      %v1030 = vsel %vm863, %v1022, %v1029
      %v1031 = vrot.slane %v1026, 4
      %v1033 = vshrl.u32 %v836, 16
      %v1035 = vrot.slane %v1033, 7
      %v1036 = vshll.u32 %v836, 16
      %v1038 = vor.u32 %v1035, %v1036
      %v1039 = vsel %vm863, %v1031, %v1038
      %v1041 = vshrl.u32 %v837, 16
      %v1043 = vrot.slane %v1041, 7
      %v1044 = vrot.slane %v1043, 4
      %v1046 = vshrl.u32 %v838, 16
      %v1048 = vrot.slane %v1046, 7
      %v1049 = vshll.u32 %v838, 16
      %v1051 = vor.u32 %v1048, %v1049
      %v1052 = vsel %vm863, %v1044, %v1051
      %v1053 = vrot.slane %v1048, 4
      %v1055 = vshrl.u32 %v839, 16
      %v1057 = vrot.slane %v1055, 7
      %v1058 = vshll.u32 %v839, 16
      %v1060 = vor.u32 %v1057, %v1058
      %v1061 = vsel %vm863, %v1053, %v1060
      %v1063 = vshrl.u32 %v840, 16
      %v1065 = vrot.slane %v1063, 7
      %v1066 = vrot.slane %v1065, 4
      %v1068 = vshrl.u32 %v841, 16
      %v1070 = vrot.slane %v1068, 7
      %v1071 = vshll.u32 %v841, 16
      %v1073 = vor.u32 %v1070, %v1071
      %v1074 = vsel %vm863, %v1066, %v1073
      %v1075 = vrot.slane %v1070, 4
      %v1077 = vshrl.u32 %v842, 16
      %v1079 = vrot.slane %v1077, 7
      %v1080 = vshll.u32 %v842, 16
      %v1082 = vor.u32 %v1079, %v1080
      %v1083 = vsel %vm863, %v1075, %v1082
      %v1085 = vshrl.u32 %v843, 16
      %v1087 = vrot.slane %v1085, 7
      %v1088 = vrot.slane %v1087, 4
      %v1090 = vshrl.u32 %v844, 16
      %v1092 = vrot.slane %v1090, 7
      %v1093 = vshll.u32 %v844, 16
      %v1095 = vor.u32 %v1092, %v1093
      %v1096 = vsel %vm863, %v1088, %v1095
      %v1097 = vrot.slane %v1092, 4
      %v1099 = vshrl.u32 %v845, 16
      %v1101 = vrot.slane %v1099, 7
      %v1102 = vshll.u32 %v845, 16
      %v1104 = vor.u32 %v1101, %v1102
      %v1105 = vsel %vm863, %v1097, %v1104
      %v1107 = vshrl.u32 %v846, 16
      %v1109 = vrot.slane %v1107, 7
      %v1110 = vrot.slane %v1109, 4
      %v1112 = vshrl.u32 %v847, 16
      %v1114 = vrot.slane %v1112, 7
      %v1115 = vshll.u32 %v847, 16
      %v1117 = vor.u32 %v1114, %v1115
      %v1118 = vsel %vm863, %v1110, %v1117
      %v1119 = vrot.slane %v1114, 4
      %v1121 = vshrl.u32 %v848, 16
      %v1123 = vrot.slane %v1121, 7
      %v1124 = vshll.u32 %v848, 16
      %v1126 = vor.u32 %v1123, %v1124
      %v1127 = vsel %vm863, %v1119, %v1126
      %v1129 = vshrl.u32 %v849, 16
      %v1131 = vrot.slane %v1129, 7
      %v1132 = vrot.slane %v1131, 4
      %v1134 = vshrl.u32 %v850, 16
      %v1136 = vrot.slane %v1134, 7
      %v1137 = vshll.u32 %v850, 16
      %v1139 = vor.u32 %v1136, %v1137
      %v1140 = vsel %vm863, %v1132, %v1139
      %v1141 = vrot.slane %v1136, 4
      %v1143 = vshrl.u32 %v851, 16
      %v1145 = vrot.slane %v1143, 7
      %v1146 = vshll.u32 %v851, 16
      %v1148 = vor.u32 %v1145, %v1146
      %v1149 = vsel %vm863, %v1141, %v1148
      %v1151 = vshrl.u32 %v852, 16
      %v1153 = vrot.slane %v1151, 7
      %v1154 = vrot.slane %v1153, 4
      %v1156 = vshrl.u32 %v853, 16
      %v1158 = vrot.slane %v1156, 7
      %v1159 = vshll.u32 %v853, 16
      %v1161 = vor.u32 %v1158, %v1159
      %v1162 = vsel %vm863, %v1154, %v1161
      %v1163 = vrot.slane %v1158, 4
      %v1165 = vshrl.u32 %v854, 16
      %v1167 = vrot.slane %v1165, 7
      %v1168 = vshll.u32 %v854, 16
      %v1170 = vor.u32 %v1167, %v1168
      %v1171 = vsel %vm863, %v1163, %v1170
      %v1173 = vshrl.u32 %v855, 16
      %v1175 = vrot.slane %v1173, 7
      %v1176 = vrot.slane %v1175, 4
      %v1178 = vshrl.u32 %v856, 16
      %v1180 = vrot.slane %v1178, 7
      %v1181 = vshll.u32 %v856, 16
      %v1183 = vor.u32 %v1180, %v1181
      %v1184 = vsel %vm863, %v1176, %v1183
      %v1185 = vrot.slane %v1180, 4
      %v1187 = vshrl.u32 %v857, 16
      %v1189 = vrot.slane %v1187, 7
      %v1190 = vshll.u32 %v857, 16
      %v1192 = vor.u32 %v1189, %v1190
      %v1193 = vsel %vm863, %v1185, %v1192
      %v1195 = vshrl.u32 %v858, 16
      %v1197 = vrot.slane %v1195, 7
      %v1198 = vrot.slane %v1197, 4
      %v1200 = vshrl.u32 %v859, 16
      %v1202 = vrot.slane %v1200, 7
      %v1203 = vshll.u32 %v859, 16
      %v1205 = vor.u32 %v1202, %v1203
      %v1206 = vsel %vm863, %v1198, %v1205
      %v1207 = vrot.slane %v1202, 4
      %v1209 = vshrl.u32 %v860, 16
      %v1211 = vrot.slane %v1209, 7
      %v1212 = vshll.u32 %v860, 16
      %v1214 = vor.u32 %v1211, %v1212
      %v1215 = vsel %vm863, %v1207, %v1214
      %v1216 = vunpack.c.l.b16 %v876
      %v1217 = vunpack.c.l.b16 %v885
      %v1218 = vunpack.c.l.b16 %v898
      %v1219 = vunpack.c.l.b16 %v907
      %v1220 = vunpack.c.l.b16 %v920
      %v1221 = vunpack.c.l.b16 %v929
      %v1222 = vunpack.c.l.b16 %v942
      %v1223 = vunpack.c.l.b16 %v951
      %v1224 = vunpack.c.l.b16 %v964
      %v1225 = vunpack.c.l.b16 %v973
      %v1226 = vunpack.c.l.b16 %v986
      %v1227 = vunpack.c.l.b16 %v995
      %v1228 = vunpack.c.l.b16 %v1008
      %v1229 = vunpack.c.l.b16 %v1017
      %v1230 = vunpack.c.l.b16 %v1030
      %v1231 = vunpack.c.l.b16 %v1039
      %v1232 = vunpack.c.l.b16 %v1052
      %v1233 = vunpack.c.l.b16 %v1061
      %v1234 = vunpack.c.l.b16 %v1074
      %v1235 = vunpack.c.l.b16 %v1083
      %v1236 = vunpack.c.l.b16 %v1096
      %v1237 = vunpack.c.l.b16 %v1105
      %v1238 = vunpack.c.l.b16 %v1118
      %v1239 = vunpack.c.l.b16 %v1127
      %v1240 = vunpack.c.l.b16 %v1140
      %v1241 = vunpack.c.l.b16 %v1149
      %v1242 = vunpack.c.l.b16 %v1162
      %v1243 = vunpack.c.l.b16 %v1171
      %v1244 = vunpack.c.l.b16 %v1184
      %v1245 = vunpack.c.l.b16 %v1193
      %v1246 = vunpack.c.l.b16 %v1206
      %v1247 = vunpack.c.l.b16 %v1215
      %v1248 = vpack.c.b16 %v1217, %v1216
      %v1249 = vpack.c.b16 %v1219, %v1218
      %v1250 = vpack.c.b16 %v1221, %v1220
      %v1251 = vpack.c.b16 %v1223, %v1222
      %v1252 = vpack.c.b16 %v1225, %v1224
      %v1253 = vpack.c.b16 %v1227, %v1226
      %v1254 = vpack.c.b16 %v1229, %v1228
      %v1255 = vpack.c.b16 %v1231, %v1230
      %v1256 = vpack.c.b16 %v1233, %v1232
      %v1257 = vpack.c.b16 %v1235, %v1234
      %v1258 = vpack.c.b16 %v1237, %v1236
      %v1259 = vpack.c.b16 %v1239, %v1238
      %v1260 = vpack.c.b16 %v1241, %v1240
      %v1261 = vpack.c.b16 %v1243, %v1242
      %v1262 = vpack.c.b16 %v1245, %v1244
      %v1263 = vpack.c.b16 %v1247, %v1246
      %v1312 = vunpack.c.l.b16 %v814
      %v1313 = vunpack.c.l.b16 %v815
      %v1314 = vunpack.c.l.b16 %v817
      %v1315 = vunpack.c.l.b16 %v818
      %v1316 = vunpack.c.l.b16 %v820
      %v1317 = vunpack.c.l.b16 %v821
      %v1318 = vunpack.c.l.b16 %v823
      %v1319 = vunpack.c.l.b16 %v824
      %v1320 = vunpack.c.l.b16 %v826
      %v1321 = vunpack.c.l.b16 %v827
      %v1322 = vunpack.c.l.b16 %v829
      %v1323 = vunpack.c.l.b16 %v830
      %v1324 = vunpack.c.l.b16 %v832
      %v1325 = vunpack.c.l.b16 %v833
      %v1326 = vunpack.c.l.b16 %v835
      %v1327 = vunpack.c.l.b16 %v836
      %v1328 = vunpack.c.l.b16 %v838
      %v1329 = vunpack.c.l.b16 %v839
      %v1330 = vunpack.c.l.b16 %v841
      %v1331 = vunpack.c.l.b16 %v842
      %v1332 = vunpack.c.l.b16 %v844
      %v1333 = vunpack.c.l.b16 %v845
      %v1334 = vunpack.c.l.b16 %v847
      %v1335 = vunpack.c.l.b16 %v848
      %v1336 = vunpack.c.l.b16 %v850
      %v1337 = vunpack.c.l.b16 %v851
      %v1338 = vunpack.c.l.b16 %v853
      %v1339 = vunpack.c.l.b16 %v854
      %v1340 = vunpack.c.l.b16 %v856
      %v1341 = vunpack.c.l.b16 %v857
      %v1342 = vunpack.c.l.b16 %v859
      %v1343 = vunpack.c.l.b16 %v860
      %v1344 = vpack.c.b16 %v1313, %v1312
      %v1345 = vpack.c.b16 %v1315, %v1314
      %v1346 = vpack.c.b16 %v1317, %v1316
      %v1347 = vpack.c.b16 %v1319, %v1318
      %v1348 = vpack.c.b16 %v1321, %v1320
      %v1349 = vpack.c.b16 %v1323, %v1322
      %v1350 = vpack.c.b16 %v1325, %v1324
      %v1351 = vpack.c.b16 %v1327, %v1326
      %v1352 = vpack.c.b16 %v1329, %v1328
      %v1353 = vpack.c.b16 %v1331, %v1330
      %v1354 = vpack.c.b16 %v1333, %v1332
      %v1355 = vpack.c.b16 %v1335, %v1334
      %v1356 = vpack.c.b16 %v1337, %v1336
      %v1357 = vpack.c.b16 %v1339, %v1338
      %v1358 = vpack.c.b16 %v1341, %v1340
      %v1359 = vpack.c.b16 %v1343, %v1342
      %v1376 = vld [vmem:[%s3] sm:$0xf]
      %v1377 = vld [vmem:[%s3 + $0x4] sm:$0xf]
      %v1378 = vld [vmem:[%s3 + $0x8] sm:$0xf]
      %v1379 = vld [vmem:[%s3 + $0xc] sm:$0xf]
      %v1380 = vld [vmem:[%s3 + $0x10] sm:$0xf]
      %v1381 = vld [vmem:[%s3 + $0x14] sm:$0xf]
      %v1382 = vld [vmem:[%s3 + $0x18] sm:$0xf]
      %v1383 = vld [vmem:[%s3 + $0x1c] sm:$0xf]
      %v1384 = vld [vmem:[%s3 + $0x20] sm:$0xf]
      %v1385 = vld [vmem:[%s3 + $0x24] sm:$0xf]
      %v1386 = vld [vmem:[%s3 + $0x28] sm:$0xf]
      %v1387 = vld [vmem:[%s3 + $0x2c] sm:$0xf]
      %v1388 = vld [vmem:[%s3 + $0x30] sm:$0xf]
      %v1389 = vld [vmem:[%s3 + $0x34] sm:$0xf]
      %v1390 = vld [vmem:[%s3 + $0x38] sm:$0xf]
      %v1391 = vld [vmem:[%s3 + $0x3c] sm:$0xf]
      %v1392 = vld [vmem:[%s3 + $0x40] sm:$0xf]
      %v1393 = vld [vmem:[%s3 + $0x44] sm:$0xf]
      %v1394 = vld [vmem:[%s3 + $0x48] sm:$0xf]
      %v1395 = vld [vmem:[%s3 + $0x4c] sm:$0xf]
      %v1396 = vld [vmem:[%s3 + $0x50] sm:$0xf]
      %v1397 = vld [vmem:[%s3 + $0x54] sm:$0xf]
      %v1398 = vld [vmem:[%s3 + $0x58] sm:$0xf]
      %v1399 = vld [vmem:[%s3 + $0x5c] sm:$0xf]
      %v1400 = vld [vmem:[%s3 + $0x60] sm:$0xf]
      %v1401 = vld [vmem:[%s3 + $0x64] sm:$0xf]
      %v1402 = vld [vmem:[%s3 + $0x68] sm:$0xf]
      %v1403 = vld [vmem:[%s3 + $0x6c] sm:$0xf]
      %v1404 = vld [vmem:[%s3 + $0x70] sm:$0xf]
      %v1405 = vld [vmem:[%s3 + $0x74] sm:$0xf]
      %v1406 = vld [vmem:[%s3 + $0x78] sm:$0xf]
      %v1407 = vld [vmem:[%s3 + $0x7c] sm:$0xf]
      %v1408 = vld [vmem:[#allocation2 + $0xc] sm:$0x1]
      %v1409 = vld [vmem:[#allocation2 + $0x1c] sm:$0x1]
      %v1410 = vld [vmem:[#allocation2 + $0x2c] sm:$0x1]
      %v1411 = vld [vmem:[#allocation2 + $0x3c] sm:$0x1]
      %v1412 = vld [vmem:[#allocation2 + $0x4c] sm:$0x1]
      %v1413 = vld [vmem:[#allocation2 + $0x5c] sm:$0x1]
      %v1414 = vld [vmem:[#allocation2 + $0x6c] sm:$0x1]
      %v1415 = vld [vmem:[#allocation2 + $0x7c] sm:$0x1]
      %v1416 = vld [vmem:[#allocation2 + $0x8c] sm:$0x1]
      %v1417 = vld [vmem:[#allocation2 + $0x9c] sm:$0x1]
      %v1418 = vld [vmem:[#allocation2 + $0xac] sm:$0x1]
      %v1419 = vld [vmem:[#allocation2 + $0xbc] sm:$0x1]
      %v1420 = vld [vmem:[#allocation2 + $0xcc] sm:$0x1]
      %v1421 = vld [vmem:[#allocation2 + $0xdc] sm:$0x1]
      %v1422 = vld [vmem:[#allocation2 + $0xec] sm:$0x1]
      %v1423 = vld [vmem:[#allocation2 + $0xfc] sm:$0x1]
      %vm1424 = vsmask.f32 3328
      %vm1425 = vsmask.f32 7440
      %vm1426 = vmor %vm1424, %vm1425
      %v1427 = vrot.slane %v870, 4
      %v1428 = vrot.slane %v873, 5
      %v1429 = vor.u32 %v1427, %v1428
      %v1430 = vrot.slane %v1429, 4
      %v1431 = vrot.slane %v882, 5
      %v1432 = vsel %vm1426, %v1430, %v1431
      %v1433 = vrot.slane %v879, 4
      %v1434 = vor.u32 %v1433, %v1431
      %v1435 = vrot.slane %v1434, 4
      %v1437 = vshll.u32 %v1408, 16
      %v1439 = vrot.slane %v1437, 5
      %v1440 = vsel %vm1426, %v1435, %v1439
      %v1441 = vrot.slane %v892, 4
      %v1442 = vrot.slane %v895, 5
      %v1443 = vor.u32 %v1441, %v1442
      %v1444 = vrot.slane %v1443, 4
      %v1445 = vrot.slane %v904, 5
      %v1446 = vsel %vm1426, %v1444, %v1445
      %v1447 = vrot.slane %v901, 4
      %v1448 = vor.u32 %v1447, %v1445
      %v1449 = vrot.slane %v1448, 4
      %v1451 = vshll.u32 %v1409, 16
      %v1453 = vrot.slane %v1451, 5
      %v1454 = vsel %vm1426, %v1449, %v1453
      %v1455 = vrot.slane %v914, 4
      %v1456 = vrot.slane %v917, 5
      %v1457 = vor.u32 %v1455, %v1456
      %v1458 = vrot.slane %v1457, 4
      %v1459 = vrot.slane %v926, 5
      %v1460 = vsel %vm1426, %v1458, %v1459
      %v1461 = vrot.slane %v923, 4
      %v1462 = vor.u32 %v1461, %v1459
      %v1463 = vrot.slane %v1462, 4
      %v1465 = vshll.u32 %v1410, 16
      %v1467 = vrot.slane %v1465, 5
      %v1468 = vsel %vm1426, %v1463, %v1467
      %v1469 = vrot.slane %v936, 4
      %v1470 = vrot.slane %v939, 5
      %v1471 = vor.u32 %v1469, %v1470
      %v1472 = vrot.slane %v1471, 4
      %v1473 = vrot.slane %v948, 5
      %v1474 = vsel %vm1426, %v1472, %v1473
      %v1475 = vrot.slane %v945, 4
      %v1476 = vor.u32 %v1475, %v1473
      %v1477 = vrot.slane %v1476, 4
      %v1479 = vshll.u32 %v1411, 16
      %v1481 = vrot.slane %v1479, 5
      %v1482 = vsel %vm1426, %v1477, %v1481
      %v1483 = vrot.slane %v958, 4
      %v1484 = vrot.slane %v961, 5
      %v1485 = vor.u32 %v1483, %v1484
      %v1486 = vrot.slane %v1485, 4
      %v1487 = vrot.slane %v970, 5
      %v1488 = vsel %vm1426, %v1486, %v1487
      %v1489 = vrot.slane %v967, 4
      %v1490 = vor.u32 %v1489, %v1487
      %v1491 = vrot.slane %v1490, 4
      %v1493 = vshll.u32 %v1412, 16
      %v1495 = vrot.slane %v1493, 5
      %v1496 = vsel %vm1426, %v1491, %v1495
      %v1497 = vrot.slane %v980, 4
      %v1498 = vrot.slane %v983, 5
      %v1499 = vor.u32 %v1497, %v1498
      %v1500 = vrot.slane %v1499, 4
      %v1501 = vrot.slane %v992, 5
      %v1502 = vsel %vm1426, %v1500, %v1501
      %v1503 = vrot.slane %v989, 4
      %v1504 = vor.u32 %v1503, %v1501
      %v1505 = vrot.slane %v1504, 4
      %v1507 = vshll.u32 %v1413, 16
      %v1509 = vrot.slane %v1507, 5
      %v1510 = vsel %vm1426, %v1505, %v1509
      %v1511 = vrot.slane %v1002, 4
      %v1512 = vrot.slane %v1005, 5
      %v1513 = vor.u32 %v1511, %v1512
      %v1514 = vrot.slane %v1513, 4
      %v1515 = vrot.slane %v1014, 5
      %v1516 = vsel %vm1426, %v1514, %v1515
      %v1517 = vrot.slane %v1011, 4
      %v1518 = vor.u32 %v1517, %v1515
      %v1519 = vrot.slane %v1518, 4
      %v1521 = vshll.u32 %v1414, 16
      %v1523 = vrot.slane %v1521, 5
      %v1524 = vsel %vm1426, %v1519, %v1523
      %v1525 = vrot.slane %v1024, 4
      %v1526 = vrot.slane %v1027, 5
      %v1527 = vor.u32 %v1525, %v1526
      %v1528 = vrot.slane %v1527, 4
      %v1529 = vrot.slane %v1036, 5
      %v1530 = vsel %vm1426, %v1528, %v1529
      %v1531 = vrot.slane %v1033, 4
      %v1532 = vor.u32 %v1531, %v1529
      %v1533 = vrot.slane %v1532, 4
      %v1535 = vshll.u32 %v1415, 16
      %v1537 = vrot.slane %v1535, 5
      %v1538 = vsel %vm1426, %v1533, %v1537
      %v1539 = vrot.slane %v1046, 4
      %v1540 = vrot.slane %v1049, 5
      %v1541 = vor.u32 %v1539, %v1540
      %v1542 = vrot.slane %v1541, 4
      %v1543 = vrot.slane %v1058, 5
      %v1544 = vsel %vm1426, %v1542, %v1543
      %v1545 = vrot.slane %v1055, 4
      %v1546 = vor.u32 %v1545, %v1543
      %v1547 = vrot.slane %v1546, 4
      %v1549 = vshll.u32 %v1416, 16
      %v1551 = vrot.slane %v1549, 5
      %v1552 = vsel %vm1426, %v1547, %v1551
      %v1553 = vrot.slane %v1068, 4
      %v1554 = vrot.slane %v1071, 5
      %v1555 = vor.u32 %v1553, %v1554
      %v1556 = vrot.slane %v1555, 4
      %v1557 = vrot.slane %v1080, 5
      %v1558 = vsel %vm1426, %v1556, %v1557
      %v1559 = vrot.slane %v1077, 4
      %v1560 = vor.u32 %v1559, %v1557
      %v1561 = vrot.slane %v1560, 4
      %v1563 = vshll.u32 %v1417, 16
      %v1565 = vrot.slane %v1563, 5
      %v1566 = vsel %vm1426, %v1561, %v1565
      %v1567 = vrot.slane %v1090, 4
      %v1568 = vrot.slane %v1093, 5
      %v1569 = vor.u32 %v1567, %v1568
      %v1570 = vrot.slane %v1569, 4
      %v1571 = vrot.slane %v1102, 5
      %v1572 = vsel %vm1426, %v1570, %v1571
      %v1573 = vrot.slane %v1099, 4
      %v1574 = vor.u32 %v1573, %v1571
      %v1575 = vrot.slane %v1574, 4
      %v1577 = vshll.u32 %v1418, 16
      %v1579 = vrot.slane %v1577, 5
      %v1580 = vsel %vm1426, %v1575, %v1579
      %v1581 = vrot.slane %v1112, 4
      %v1582 = vrot.slane %v1115, 5
      %v1583 = vor.u32 %v1581, %v1582
      %v1584 = vrot.slane %v1583, 4
      %v1585 = vrot.slane %v1124, 5
      %v1586 = vsel %vm1426, %v1584, %v1585
      %v1587 = vrot.slane %v1121, 4
      %v1588 = vor.u32 %v1587, %v1585
      %v1589 = vrot.slane %v1588, 4
      %v1591 = vshll.u32 %v1419, 16
      %v1593 = vrot.slane %v1591, 5
      %v1594 = vsel %vm1426, %v1589, %v1593
      %v1595 = vrot.slane %v1134, 4
      %v1596 = vrot.slane %v1137, 5
      %v1597 = vor.u32 %v1595, %v1596
      %v1598 = vrot.slane %v1597, 4
      %v1599 = vrot.slane %v1146, 5
      %v1600 = vsel %vm1426, %v1598, %v1599
      %v1601 = vrot.slane %v1143, 4
      %v1602 = vor.u32 %v1601, %v1599
      %v1603 = vrot.slane %v1602, 4
      %v1605 = vshll.u32 %v1420, 16
      %v1607 = vrot.slane %v1605, 5
      %v1608 = vsel %vm1426, %v1603, %v1607
      %v1609 = vrot.slane %v1156, 4
      %v1610 = vrot.slane %v1159, 5
      %v1611 = vor.u32 %v1609, %v1610
      %v1612 = vrot.slane %v1611, 4
      %v1613 = vrot.slane %v1168, 5
      %v1614 = vsel %vm1426, %v1612, %v1613
      %v1615 = vrot.slane %v1165, 4
      %v1616 = vor.u32 %v1615, %v1613
      %v1617 = vrot.slane %v1616, 4
      %v1619 = vshll.u32 %v1421, 16
      %v1621 = vrot.slane %v1619, 5
      %v1622 = vsel %vm1426, %v1617, %v1621
      %v1623 = vrot.slane %v1178, 4
      %v1624 = vrot.slane %v1181, 5
      %v1625 = vor.u32 %v1623, %v1624
      %v1626 = vrot.slane %v1625, 4
      %v1627 = vrot.slane %v1190, 5
      %v1628 = vsel %vm1426, %v1626, %v1627
      %v1629 = vrot.slane %v1187, 4
      %v1630 = vor.u32 %v1629, %v1627
      %v1631 = vrot.slane %v1630, 4
      %v1633 = vshll.u32 %v1422, 16
      %v1635 = vrot.slane %v1633, 5
      %v1636 = vsel %vm1426, %v1631, %v1635
      %v1637 = vrot.slane %v1200, 4
      %v1638 = vrot.slane %v1203, 5
      %v1639 = vor.u32 %v1637, %v1638
      %v1640 = vrot.slane %v1639, 4
      %v1641 = vrot.slane %v1212, 5
      %v1642 = vsel %vm1426, %v1640, %v1641
      %v1643 = vrot.slane %v1209, 4
      %v1644 = vor.u32 %v1643, %v1641
      %v1645 = vrot.slane %v1644, 4
      %v1647 = vshll.u32 %v1423, 16
      %v1649 = vrot.slane %v1647, 5
      %v1650 = vsel %vm1426, %v1645, %v1649
      %v1651 = vld [vmem:[%s620] sm:$0x8]
      %v1652 = vld [vmem:[%s620 + $0x4] sm:$0xf]
      %v1653 = vld [vmem:[%s620 + $0x8] sm:$0xf]
      %v1654 = vld [vmem:[%s620 + $0x10] sm:$0x8]
      %v1655 = vld [vmem:[%s620 + $0x14] sm:$0xf]
      %v1656 = vld [vmem:[%s620 + $0x18] sm:$0xf]
      %v1657 = vld [vmem:[%s620 + $0x20] sm:$0x8]
      %v1658 = vld [vmem:[%s620 + $0x24] sm:$0xf]
      %v1659 = vld [vmem:[%s620 + $0x28] sm:$0xf]
      %v1660 = vld [vmem:[%s620 + $0x30] sm:$0x8]
      %v1661 = vld [vmem:[%s620 + $0x34] sm:$0xf]
      %v1662 = vld [vmem:[%s620 + $0x38] sm:$0xf]
      %v1663 = vld [vmem:[%s620 + $0x40] sm:$0x8]
      %v1664 = vld [vmem:[%s620 + $0x44] sm:$0xf]
      %v1665 = vld [vmem:[%s620 + $0x48] sm:$0xf]
      %v1666 = vld [vmem:[%s620 + $0x50] sm:$0x8]
      %v1667 = vld [vmem:[%s620 + $0x54] sm:$0xf]
      %v1668 = vld [vmem:[%s620 + $0x58] sm:$0xf]
      %v1669 = vld [vmem:[%s620 + $0x60] sm:$0x8]
      %v1670 = vld [vmem:[%s620 + $0x64] sm:$0xf]
      %v1671 = vld [vmem:[%s620 + $0x68] sm:$0xf]
      %v1672 = vld [vmem:[%s620 + $0x70] sm:$0x8]
      %v1673 = vld [vmem:[%s620 + $0x74] sm:$0xf]
      %v1674 = vld [vmem:[%s620 + $0x78] sm:$0xf]
      %v1675 = vld [vmem:[%s620 + $0x80] sm:$0x8]
      %v1676 = vld [vmem:[%s620 + $0x84] sm:$0xf]
      %v1677 = vld [vmem:[%s620 + $0x88] sm:$0xf]
      %v1678 = vld [vmem:[%s620 + $0x90] sm:$0x8]
      %v1679 = vld [vmem:[%s620 + $0x94] sm:$0xf]
      %v1680 = vld [vmem:[%s620 + $0x98] sm:$0xf]
      %v1681 = vld [vmem:[%s620 + $0xa0] sm:$0x8]
      %v1682 = vld [vmem:[%s620 + $0xa4] sm:$0xf]
      %v1683 = vld [vmem:[%s620 + $0xa8] sm:$0xf]
      %v1684 = vld [vmem:[%s620 + $0xb0] sm:$0x8]
      %v1685 = vld [vmem:[%s620 + $0xb4] sm:$0xf]
      %v1686 = vld [vmem:[%s620 + $0xb8] sm:$0xf]
      %v1687 = vld [vmem:[%s620 + $0xc0] sm:$0x8]
      %v1688 = vld [vmem:[%s620 + $0xc4] sm:$0xf]
      %v1689 = vld [vmem:[%s620 + $0xc8] sm:$0xf]
      %v1690 = vld [vmem:[%s620 + $0xd0] sm:$0x8]
      %v1691 = vld [vmem:[%s620 + $0xd4] sm:$0xf]
      %v1692 = vld [vmem:[%s620 + $0xd8] sm:$0xf]
      %v1693 = vld [vmem:[%s620 + $0xe0] sm:$0x8]
      %v1694 = vld [vmem:[%s620 + $0xe4] sm:$0xf]
      %v1695 = vld [vmem:[%s620 + $0xe8] sm:$0xf]
      %v1696 = vld [vmem:[%s620 + $0xf0] sm:$0x8]
      %v1697 = vld [vmem:[%s620 + $0xf4] sm:$0xf]
      %v1698 = vld [vmem:[%s620 + $0xf8] sm:$0xf]
      %v1700 = vshrl.u32 %v1651, 16
      %v1702 = vrot.slane %v1700, 7
      %v1703 = vrot.slane %v1702, 4
      %v1705 = vshrl.u32 %v1652, 16
      %v1707 = vrot.slane %v1705, 7
      %v1708 = vshll.u32 %v1652, 16
      %v1710 = vor.u32 %v1707, %v1708
      %v1711 = vsel %vm863, %v1703, %v1710
      %v1712 = vrot.slane %v1707, 4
      %v1714 = vshrl.u32 %v1653, 16
      %v1716 = vrot.slane %v1714, 7
      %v1717 = vshll.u32 %v1653, 16
      %v1719 = vor.u32 %v1716, %v1717
      %v1720 = vsel %vm863, %v1712, %v1719
      %v1722 = vshrl.u32 %v1654, 16
      %v1724 = vrot.slane %v1722, 7
      %v1725 = vrot.slane %v1724, 4
      %v1727 = vshrl.u32 %v1655, 16
      %v1729 = vrot.slane %v1727, 7
      %v1730 = vshll.u32 %v1655, 16
      %v1732 = vor.u32 %v1729, %v1730
      %v1733 = vsel %vm863, %v1725, %v1732
      %v1734 = vrot.slane %v1729, 4
      %v1736 = vshrl.u32 %v1656, 16
      %v1738 = vrot.slane %v1736, 7
      %v1739 = vshll.u32 %v1656, 16
      %v1741 = vor.u32 %v1738, %v1739
      %v1742 = vsel %vm863, %v1734, %v1741
      %v1744 = vshrl.u32 %v1657, 16
      %v1746 = vrot.slane %v1744, 7
      %v1747 = vrot.slane %v1746, 4
      %v1749 = vshrl.u32 %v1658, 16
      %v1751 = vrot.slane %v1749, 7
      %v1752 = vshll.u32 %v1658, 16
      %v1754 = vor.u32 %v1751, %v1752
      %v1755 = vsel %vm863, %v1747, %v1754
      %v1756 = vrot.slane %v1751, 4
      %v1758 = vshrl.u32 %v1659, 16
      %v1760 = vrot.slane %v1758, 7
      %v1761 = vshll.u32 %v1659, 16
      %v1763 = vor.u32 %v1760, %v1761
      %v1764 = vsel %vm863, %v1756, %v1763
      %v1766 = vshrl.u32 %v1660, 16
      %v1768 = vrot.slane %v1766, 7
      %v1769 = vrot.slane %v1768, 4
      %v1771 = vshrl.u32 %v1661, 16
      %v1773 = vrot.slane %v1771, 7
      %v1774 = vshll.u32 %v1661, 16
      %v1776 = vor.u32 %v1773, %v1774
      %v1777 = vsel %vm863, %v1769, %v1776
      %v1778 = vrot.slane %v1773, 4
      %v1780 = vshrl.u32 %v1662, 16
      %v1782 = vrot.slane %v1780, 7
      %v1783 = vshll.u32 %v1662, 16
      %v1785 = vor.u32 %v1782, %v1783
      %v1786 = vsel %vm863, %v1778, %v1785
      %v1788 = vshrl.u32 %v1663, 16
      %v1790 = vrot.slane %v1788, 7
      %v1791 = vrot.slane %v1790, 4
      %v1793 = vshrl.u32 %v1664, 16
      %v1795 = vrot.slane %v1793, 7
      %v1796 = vshll.u32 %v1664, 16
      %v1798 = vor.u32 %v1795, %v1796
      %v1799 = vsel %vm863, %v1791, %v1798
      %v1800 = vrot.slane %v1795, 4
      %v1802 = vshrl.u32 %v1665, 16
      %v1804 = vrot.slane %v1802, 7
      %v1805 = vshll.u32 %v1665, 16
      %v1807 = vor.u32 %v1804, %v1805
      %v1808 = vsel %vm863, %v1800, %v1807
      %v1810 = vshrl.u32 %v1666, 16
      %v1812 = vrot.slane %v1810, 7
      %v1813 = vrot.slane %v1812, 4
      %v1815 = vshrl.u32 %v1667, 16
      %v1817 = vrot.slane %v1815, 7
      %v1818 = vshll.u32 %v1667, 16
      %v1820 = vor.u32 %v1817, %v1818
      %v1821 = vsel %vm863, %v1813, %v1820
      %v1822 = vrot.slane %v1817, 4
      %v1824 = vshrl.u32 %v1668, 16
      %v1826 = vrot.slane %v1824, 7
      %v1827 = vshll.u32 %v1668, 16
      %v1829 = vor.u32 %v1826, %v1827
      %v1830 = vsel %vm863, %v1822, %v1829
      %v1832 = vshrl.u32 %v1669, 16
      %v1834 = vrot.slane %v1832, 7
      %v1835 = vrot.slane %v1834, 4
      %v1837 = vshrl.u32 %v1670, 16
      %v1839 = vrot.slane %v1837, 7
      %v1840 = vshll.u32 %v1670, 16
      %v1842 = vor.u32 %v1839, %v1840
      %v1843 = vsel %vm863, %v1835, %v1842
      %v1844 = vrot.slane %v1839, 4
      %v1846 = vshrl.u32 %v1671, 16
      %v1848 = vrot.slane %v1846, 7
      %v1849 = vshll.u32 %v1671, 16
      %v1851 = vor.u32 %v1848, %v1849
      %v1852 = vsel %vm863, %v1844, %v1851
      %v1854 = vshrl.u32 %v1672, 16
      %v1856 = vrot.slane %v1854, 7
      %v1857 = vrot.slane %v1856, 4
      %v1859 = vshrl.u32 %v1673, 16
      %v1861 = vrot.slane %v1859, 7
      %v1862 = vshll.u32 %v1673, 16
      %v1864 = vor.u32 %v1861, %v1862
      %v1865 = vsel %vm863, %v1857, %v1864
      %v1866 = vrot.slane %v1861, 4
      %v1868 = vshrl.u32 %v1674, 16
      %v1870 = vrot.slane %v1868, 7
      %v1871 = vshll.u32 %v1674, 16
      %v1873 = vor.u32 %v1870, %v1871
      %v1874 = vsel %vm863, %v1866, %v1873
      %v1876 = vshrl.u32 %v1675, 16
      %v1878 = vrot.slane %v1876, 7
      %v1879 = vrot.slane %v1878, 4
      %v1881 = vshrl.u32 %v1676, 16
      %v1883 = vrot.slane %v1881, 7
      %v1884 = vshll.u32 %v1676, 16
      %v1886 = vor.u32 %v1883, %v1884
      %v1887 = vsel %vm863, %v1879, %v1886
      %v1888 = vrot.slane %v1883, 4
      %v1890 = vshrl.u32 %v1677, 16
      %v1892 = vrot.slane %v1890, 7
      %v1893 = vshll.u32 %v1677, 16
      %v1895 = vor.u32 %v1892, %v1893
      %v1896 = vsel %vm863, %v1888, %v1895
      %v1898 = vshrl.u32 %v1678, 16
      %v1900 = vrot.slane %v1898, 7
      %v1901 = vrot.slane %v1900, 4
      %v1903 = vshrl.u32 %v1679, 16
      %v1905 = vrot.slane %v1903, 7
      %v1906 = vshll.u32 %v1679, 16
      %v1908 = vor.u32 %v1905, %v1906
      %v1909 = vsel %vm863, %v1901, %v1908
      %v1910 = vrot.slane %v1905, 4
      %v1912 = vshrl.u32 %v1680, 16
      %v1914 = vrot.slane %v1912, 7
      %v1915 = vshll.u32 %v1680, 16
      %v1917 = vor.u32 %v1914, %v1915
      %v1918 = vsel %vm863, %v1910, %v1917
      %v1920 = vshrl.u32 %v1681, 16
      %v1922 = vrot.slane %v1920, 7
      %v1923 = vrot.slane %v1922, 4
      %v1925 = vshrl.u32 %v1682, 16
      %v1927 = vrot.slane %v1925, 7
      %v1928 = vshll.u32 %v1682, 16
      %v1930 = vor.u32 %v1927, %v1928
      %v1931 = vsel %vm863, %v1923, %v1930
      %v1932 = vrot.slane %v1927, 4
      %v1934 = vshrl.u32 %v1683, 16
      %v1936 = vrot.slane %v1934, 7
      %v1937 = vshll.u32 %v1683, 16
      %v1939 = vor.u32 %v1936, %v1937
      %v1940 = vsel %vm863, %v1932, %v1939
      %v1942 = vshrl.u32 %v1684, 16
      %v1944 = vrot.slane %v1942, 7
      %v1945 = vrot.slane %v1944, 4
      %v1947 = vshrl.u32 %v1685, 16
      %v1949 = vrot.slane %v1947, 7
      %v1950 = vshll.u32 %v1685, 16
      %v1952 = vor.u32 %v1949, %v1950
      %v1953 = vsel %vm863, %v1945, %v1952
      %v1954 = vrot.slane %v1949, 4
      %v1956 = vshrl.u32 %v1686, 16
      %v1958 = vrot.slane %v1956, 7
      %v1959 = vshll.u32 %v1686, 16
      %v1961 = vor.u32 %v1958, %v1959
      %v1962 = vsel %vm863, %v1954, %v1961
      %v1964 = vshrl.u32 %v1687, 16
      %v1966 = vrot.slane %v1964, 7
      %v1967 = vrot.slane %v1966, 4
      %v1969 = vshrl.u32 %v1688, 16
      %v1971 = vrot.slane %v1969, 7
      %v1972 = vshll.u32 %v1688, 16
      %v1974 = vor.u32 %v1971, %v1972
      %v1975 = vsel %vm863, %v1967, %v1974
      %v1976 = vrot.slane %v1971, 4
      %v1978 = vshrl.u32 %v1689, 16
      %v1980 = vrot.slane %v1978, 7
      %v1981 = vshll.u32 %v1689, 16
      %v1983 = vor.u32 %v1980, %v1981
      %v1984 = vsel %vm863, %v1976, %v1983
      %v1986 = vshrl.u32 %v1690, 16
      %v1988 = vrot.slane %v1986, 7
      %v1989 = vrot.slane %v1988, 4
      %v1991 = vshrl.u32 %v1691, 16
      %v1993 = vrot.slane %v1991, 7
      %v1994 = vshll.u32 %v1691, 16
      %v1996 = vor.u32 %v1993, %v1994
      %v1997 = vsel %vm863, %v1989, %v1996
      %v1998 = vrot.slane %v1993, 4
      %v2000 = vshrl.u32 %v1692, 16
      %v2002 = vrot.slane %v2000, 7
      %v2003 = vshll.u32 %v1692, 16
      %v2005 = vor.u32 %v2002, %v2003
      %v2006 = vsel %vm863, %v1998, %v2005
      %v2008 = vshrl.u32 %v1693, 16
      %v2010 = vrot.slane %v2008, 7
      %v2011 = vrot.slane %v2010, 4
      %v2013 = vshrl.u32 %v1694, 16
      %v2015 = vrot.slane %v2013, 7
      %v2016 = vshll.u32 %v1694, 16
      %v2018 = vor.u32 %v2015, %v2016
      %v2019 = vsel %vm863, %v2011, %v2018
      %v2020 = vrot.slane %v2015, 4
      %v2022 = vshrl.u32 %v1695, 16
      %v2024 = vrot.slane %v2022, 7
      %v2025 = vshll.u32 %v1695, 16
      %v2027 = vor.u32 %v2024, %v2025
      %v2028 = vsel %vm863, %v2020, %v2027
      %v2030 = vshrl.u32 %v1696, 16
      %v2032 = vrot.slane %v2030, 7
      %v2033 = vrot.slane %v2032, 4
      %v2035 = vshrl.u32 %v1697, 16
      %v2037 = vrot.slane %v2035, 7
      %v2038 = vshll.u32 %v1697, 16
      %v2040 = vor.u32 %v2037, %v2038
      %v2041 = vsel %vm863, %v2033, %v2040
      %v2042 = vrot.slane %v2037, 4
      %v2044 = vshrl.u32 %v1698, 16
      %v2046 = vrot.slane %v2044, 7
      %v2047 = vshll.u32 %v1698, 16
      %v2049 = vor.u32 %v2046, %v2047
      %v2050 = vsel %vm863, %v2042, %v2049
      %v2051 = vunpack.c.l.b16 %v1432
      %v2052 = vunpack.c.l.b16 %v1440
      %v2053 = vunpack.c.l.b16 %v1446
      %v2054 = vunpack.c.l.b16 %v1454
      %v2055 = vunpack.c.l.b16 %v1460
      %v2056 = vunpack.c.l.b16 %v1468
      %v2057 = vunpack.c.l.b16 %v1474
      %v2058 = vunpack.c.l.b16 %v1482
      %v2059 = vunpack.c.l.b16 %v1488
      %v2060 = vunpack.c.l.b16 %v1496
      %v2061 = vunpack.c.l.b16 %v1502
      %v2062 = vunpack.c.l.b16 %v1510
      %v2063 = vunpack.c.l.b16 %v1516
      %v2064 = vunpack.c.l.b16 %v1524
      %v2065 = vunpack.c.l.b16 %v1530
      %v2066 = vunpack.c.l.b16 %v1538
      %v2067 = vunpack.c.l.b16 %v1544
      %v2068 = vunpack.c.l.b16 %v1552
      %v2069 = vunpack.c.l.b16 %v1558
      %v2070 = vunpack.c.l.b16 %v1566
      %v2071 = vunpack.c.l.b16 %v1572
      %v2072 = vunpack.c.l.b16 %v1580
      %v2073 = vunpack.c.l.b16 %v1586
      %v2074 = vunpack.c.l.b16 %v1594
      %v2075 = vunpack.c.l.b16 %v1600
      %v2076 = vunpack.c.l.b16 %v1608
      %v2077 = vunpack.c.l.b16 %v1614
      %v2078 = vunpack.c.l.b16 %v1622
      %v2079 = vunpack.c.l.b16 %v1628
      %v2080 = vunpack.c.l.b16 %v1636
      %v2081 = vunpack.c.l.b16 %v1642
      %v2082 = vunpack.c.l.b16 %v1650
      %v2083 = vpack.c.b16 %v2052, %v2051
      %v2084 = vpack.c.b16 %v2054, %v2053
      %v2085 = vpack.c.b16 %v2056, %v2055
      %v2086 = vpack.c.b16 %v2058, %v2057
      %v2087 = vpack.c.b16 %v2060, %v2059
      %v2088 = vpack.c.b16 %v2062, %v2061
      %v2089 = vpack.c.b16 %v2064, %v2063
      %v2090 = vpack.c.b16 %v2066, %v2065
      %v2091 = vpack.c.b16 %v2068, %v2067
      %v2092 = vpack.c.b16 %v2070, %v2069
      %v2093 = vpack.c.b16 %v2072, %v2071
      %v2094 = vpack.c.b16 %v2074, %v2073
      %v2095 = vpack.c.b16 %v2076, %v2075
      %v2096 = vpack.c.b16 %v2078, %v2077
      %v2097 = vpack.c.b16 %v2080, %v2079
      %v2098 = vpack.c.b16 %v2082, %v2081
      %v2115 = vunpack.c.l.b16 %v1711
      %v2116 = vunpack.c.l.b16 %v1720
      %v2117 = vunpack.c.l.b16 %v1733
      %v2118 = vunpack.c.l.b16 %v1742
      %v2119 = vunpack.c.l.b16 %v1755
      %v2120 = vunpack.c.l.b16 %v1764
      %v2121 = vunpack.c.l.b16 %v1777
      %v2122 = vunpack.c.l.b16 %v1786
      %v2123 = vunpack.c.l.b16 %v1799
      %v2124 = vunpack.c.l.b16 %v1808
      %v2125 = vunpack.c.l.b16 %v1821
      %v2126 = vunpack.c.l.b16 %v1830
      %v2127 = vunpack.c.l.b16 %v1843
      %v2128 = vunpack.c.l.b16 %v1852
      %v2129 = vunpack.c.l.b16 %v1865
      %v2130 = vunpack.c.l.b16 %v1874
      %v2131 = vunpack.c.l.b16 %v1887
      %v2132 = vunpack.c.l.b16 %v1896
      %v2133 = vunpack.c.l.b16 %v1909
      %v2134 = vunpack.c.l.b16 %v1918
      %v2135 = vunpack.c.l.b16 %v1931
      %v2136 = vunpack.c.l.b16 %v1940
      %v2137 = vunpack.c.l.b16 %v1953
      %v2138 = vunpack.c.l.b16 %v1962
      %v2139 = vunpack.c.l.b16 %v1975
      %v2140 = vunpack.c.l.b16 %v1984
      %v2141 = vunpack.c.l.b16 %v1997
      %v2142 = vunpack.c.l.b16 %v2006
      %v2143 = vunpack.c.l.b16 %v2019
      %v2144 = vunpack.c.l.b16 %v2028
      %v2145 = vunpack.c.l.b16 %v2041
      %v2146 = vunpack.c.l.b16 %v2050
      %v2147 = vpack.c.b16 %v2116, %v2115
      %v2148 = vpack.c.b16 %v2118, %v2117
      %v2149 = vpack.c.b16 %v2120, %v2119
      %v2150 = vpack.c.b16 %v2122, %v2121
      %v2151 = vpack.c.b16 %v2124, %v2123
      %v2152 = vpack.c.b16 %v2126, %v2125
      %v2153 = vpack.c.b16 %v2128, %v2127
      %v2154 = vpack.c.b16 %v2130, %v2129
      %v2155 = vpack.c.b16 %v2132, %v2131
      %v2156 = vpack.c.b16 %v2134, %v2133
      %v2157 = vpack.c.b16 %v2136, %v2135
      %v2158 = vpack.c.b16 %v2138, %v2137
      %v2159 = vpack.c.b16 %v2140, %v2139
      %v2160 = vpack.c.b16 %v2142, %v2141
      %v2161 = vpack.c.b16 %v2144, %v2143
      %v2162 = vpack.c.b16 %v2146, %v2145
      %s2179 = scalar_lea.vmem %s3, 128
      %v2180 = vld [vmem:[%s2179] sm:$0xf]
      %v2181 = vld [vmem:[%s2179 + $0x4] sm:$0xf]
      %v2182 = vld [vmem:[%s2179 + $0x8] sm:$0xf]
      %v2183 = vld [vmem:[%s2179 + $0xc] sm:$0xf]
      %v2184 = vld [vmem:[%s2179 + $0x10] sm:$0xf]
      %v2185 = vld [vmem:[%s2179 + $0x14] sm:$0xf]
      %v2186 = vld [vmem:[%s2179 + $0x18] sm:$0xf]
      %v2187 = vld [vmem:[%s2179 + $0x1c] sm:$0xf]
      %v2188 = vld [vmem:[%s2179 + $0x20] sm:$0xf]
      %v2189 = vld [vmem:[%s2179 + $0x24] sm:$0xf]
      %v2190 = vld [vmem:[%s2179 + $0x28] sm:$0xf]
      %v2191 = vld [vmem:[%s2179 + $0x2c] sm:$0xf]
      %v2192 = vld [vmem:[%s2179 + $0x30] sm:$0xf]
      %v2193 = vld [vmem:[%s2179 + $0x34] sm:$0xf]
      %v2194 = vld [vmem:[%s2179 + $0x38] sm:$0xf]
      %v2195 = vld [vmem:[%s2179 + $0x3c] sm:$0xf]
      %v2196 = vld [vmem:[%s2179 + $0x40] sm:$0xf]
      %v2197 = vld [vmem:[%s2179 + $0x44] sm:$0xf]
      %v2198 = vld [vmem:[%s2179 + $0x48] sm:$0xf]
      %v2199 = vld [vmem:[%s2179 + $0x4c] sm:$0xf]
      %v2200 = vld [vmem:[%s2179 + $0x50] sm:$0xf]
      %v2201 = vld [vmem:[%s2179 + $0x54] sm:$0xf]
      %v2202 = vld [vmem:[%s2179 + $0x58] sm:$0xf]
      %v2203 = vld [vmem:[%s2179 + $0x5c] sm:$0xf]
      %v2204 = vld [vmem:[%s2179 + $0x60] sm:$0xf]
      %v2205 = vld [vmem:[%s2179 + $0x64] sm:$0xf]
      %v2206 = vld [vmem:[%s2179 + $0x68] sm:$0xf]
      %v2207 = vld [vmem:[%s2179 + $0x6c] sm:$0xf]
      %v2208 = vld [vmem:[%s2179 + $0x70] sm:$0xf]
      %v2209 = vld [vmem:[%s2179 + $0x74] sm:$0xf]
      %v2210 = vld [vmem:[%s2179 + $0x78] sm:$0xf]
      %v2211 = vld [vmem:[%s2179 + $0x7c] sm:$0xf]
      %v2244 = vunpack.c.l.b16 %v2180
      %v2245 = vunpack.c.l.b16 %v2181
      %v2246 = vunpack.c.l.b16 %v2182
      %v2247 = vunpack.c.l.b16 %v2183
      %v2248 = vunpack.c.l.b16 %v2184
      %v2249 = vunpack.c.l.b16 %v2185
      %v2250 = vunpack.c.l.b16 %v2186
      %v2251 = vunpack.c.l.b16 %v2187
      %v2252 = vunpack.c.l.b16 %v2188
      %v2253 = vunpack.c.l.b16 %v2189
      %v2254 = vunpack.c.l.b16 %v2190
      %v2255 = vunpack.c.l.b16 %v2191
      %v2256 = vunpack.c.l.b16 %v2192
      %v2257 = vunpack.c.l.b16 %v2193
      %v2258 = vunpack.c.l.b16 %v2194
      %v2259 = vunpack.c.l.b16 %v2195
      %v2260 = vunpack.c.l.b16 %v2196
      %v2261 = vunpack.c.l.b16 %v2197
      %v2262 = vunpack.c.l.b16 %v2198
      %v2263 = vunpack.c.l.b16 %v2199
      %v2264 = vunpack.c.l.b16 %v2200
      %v2265 = vunpack.c.l.b16 %v2201
      %v2266 = vunpack.c.l.b16 %v2202
      %v2267 = vunpack.c.l.b16 %v2203
      %v2268 = vunpack.c.l.b16 %v2204
      %v2269 = vunpack.c.l.b16 %v2205
      %v2270 = vunpack.c.l.b16 %v2206
      %v2271 = vunpack.c.l.b16 %v2207
      %v2272 = vunpack.c.l.b16 %v2208
      %v2273 = vunpack.c.l.b16 %v2209
      %v2274 = vunpack.c.l.b16 %v2210
      %v2275 = vunpack.c.l.b16 %v2211
      %v2276 = vpack.c.b16 %v2245, %v2244
      %v2277 = vpack.c.b16 %v2247, %v2246
      %v2278 = vpack.c.b16 %v2249, %v2248
      %v2279 = vpack.c.b16 %v2251, %v2250
      %v2280 = vpack.c.b16 %v2253, %v2252
      %v2281 = vpack.c.b16 %v2255, %v2254
      %v2282 = vpack.c.b16 %v2257, %v2256
      %v2283 = vpack.c.b16 %v2259, %v2258
      %v2284 = vpack.c.b16 %v2261, %v2260
      %v2285 = vpack.c.b16 %v2263, %v2262
      %v2286 = vpack.c.b16 %v2265, %v2264
      %v2287 = vpack.c.b16 %v2267, %v2266
      %v2288 = vpack.c.b16 %v2269, %v2268
      %v2289 = vpack.c.b16 %v2271, %v2270
      %v2290 = vpack.c.b16 %v2273, %v2272
      %v2291 = vpack.c.b16 %v2275, %v2274
      %2308 = vmatprep.subr.bf16.mxu0 0
      %2309 = vmatpush1.bf16.msra.mxu0 %v2283
      %2310 = vmatprep.subr.bf16.mxu0 0
      %2311 = vmatpush1.bf16.msra.mxu0 %v2282
      %2312 = vmatprep.subr.bf16.mxu0 0
      %2313 = vmatpush1.bf16.msra.mxu0 %v2281
      %2314 = vmatprep.subr.bf16.mxu0 0
      %2315 = vmatpush1.bf16.msra.mxu0 %v2280
      %2316 = vmatprep.subr.bf16.mxu0 0
      %2317 = vmatpush1.bf16.msra.mxu0 %v2279
      %2318 = vmatprep.subr.bf16.mxu0 0
      %2319 = vmatpush1.bf16.msra.mxu0 %v2278
      %2320 = vmatprep.subr.bf16.mxu0 0
      %2321 = vmatpush1.bf16.msra.mxu0 %v2277
      %2322 = vmatprep.subr.bf16.mxu0 0
      %2323 = vmatpush1.bf16.msra.mxu0 %v2276
      %2324 = vmatprep.subr.bf16.mxu0 0
      %2325 = vmatpush2.bf16.msra.mxu0 %v2291
      %2326 = vmatprep.subr.bf16.mxu0 0
      %2327 = vmatpush2.bf16.msra.mxu0 %v2290
      %2328 = vmatprep.subr.bf16.mxu0 0
      %2329 = vmatpush2.bf16.msra.mxu0 %v2289
      %2330 = vmatprep.subr.bf16.mxu0 0
      %2331 = vmatpush2.bf16.msra.mxu0 %v2288
      %2332 = vmatprep.subr.bf16.mxu0 0
      %2333 = vmatpush2.bf16.msra.mxu0 %v2287
      %2334 = vmatprep.subr.bf16.mxu0 0
      %2335 = vmatpush2.bf16.msra.mxu0 %v2286
      %2336 = vmatprep.subr.bf16.mxu0 0
      %2337 = vmatpush2.bf16.msra.mxu0 %v2285
      %2338 = vmatprep.subr.bf16.mxu0 0
      %2339 = vmatpush2.bf16.msra.mxu0 %v2284
      %2340 = vmatprep.mubr.bf16.mxu0 %v2147
      %2341 = vmatmul.mubr.bf16.gmra.mxu0 %v2083
      %v2342 = vpop.f32.mrf.mxu0
      %v2343 = vadd.f32 0.0, %v2342
      %v2344 = vpop.f32.mrf.mxu0
      %v2345 = vpop.f32.mrf.mxu0
      %v2346 = vadd.f32 0.0, %v2345
      %v2347 = vpop.f32.mrf.mxu0
      %2348 = vmatprep.mubr.bf16.mxu0 %v2148
      %2349 = vmatmul.mubr.bf16.gmra.mxu0 %v2084
      %v2350 = vpop.f32.mrf.mxu0
      %v2351 = vadd.f32 0.0, %v2350
      %v2352 = vpop.f32.mrf.mxu0
      %v2353 = vpop.f32.mrf.mxu0
      %v2354 = vadd.f32 0.0, %v2353
      %v2355 = vpop.f32.mrf.mxu0
      %2356 = vmatprep.mubr.bf16.mxu0 %v2149
      %2357 = vmatmul.mubr.bf16.gmra.mxu0 %v2085
      %v2358 = vpop.f32.mrf.mxu0
      %v2359 = vadd.f32 0.0, %v2358
      %v2360 = vpop.f32.mrf.mxu0
      %v2361 = vpop.f32.mrf.mxu0
      %v2362 = vadd.f32 0.0, %v2361
      %v2363 = vpop.f32.mrf.mxu0
      %2364 = vmatprep.mubr.bf16.mxu0 %v2150
      %2365 = vmatmul.mubr.bf16.gmra.mxu0 %v2086
      %v2366 = vpop.f32.mrf.mxu0
      %v2367 = vadd.f32 0.0, %v2366
      %v2368 = vpop.f32.mrf.mxu0
      %v2369 = vpop.f32.mrf.mxu0
      %v2370 = vadd.f32 0.0, %v2369
      %v2371 = vpop.f32.mrf.mxu0
      %2372 = vmatprep.mubr.bf16.mxu0 %v2151
      %2373 = vmatmul.mubr.bf16.gmra.mxu0 %v2087
      %v2374 = vpop.f32.mrf.mxu0
      %v2375 = vadd.f32 0.0, %v2374
      %v2376 = vpop.f32.mrf.mxu0
      %v2377 = vpop.f32.mrf.mxu0
      %v2378 = vadd.f32 0.0, %v2377
      %v2379 = vpop.f32.mrf.mxu0
      %2380 = vmatprep.mubr.bf16.mxu0 %v2152
      %2381 = vmatmul.mubr.bf16.gmra.mxu0 %v2088
      %v2382 = vpop.f32.mrf.mxu0
      %v2383 = vadd.f32 0.0, %v2382
      %v2384 = vpop.f32.mrf.mxu0
      %v2385 = vpop.f32.mrf.mxu0
      %v2386 = vadd.f32 0.0, %v2385
      %v2387 = vpop.f32.mrf.mxu0
      %2388 = vmatprep.mubr.bf16.mxu0 %v2153
      %2389 = vmatmul.mubr.bf16.gmra.mxu0 %v2089
      %v2390 = vpop.f32.mrf.mxu0
      %v2391 = vadd.f32 0.0, %v2390
      %v2392 = vpop.f32.mrf.mxu0
      %v2393 = vpop.f32.mrf.mxu0
      %v2394 = vadd.f32 0.0, %v2393
      %v2395 = vpop.f32.mrf.mxu0
      %2396 = vmatprep.mubr.bf16.mxu0 %v2154
      %2397 = vmatmul.mubr.bf16.gmra.mxu0 %v2090
      %v2398 = vpop.f32.mrf.mxu0
      %v2399 = vadd.f32 0.0, %v2398
      %v2400 = vpop.f32.mrf.mxu0
      %v2401 = vpop.f32.mrf.mxu0
      %v2402 = vadd.f32 0.0, %v2401
      %v2403 = vpop.f32.mrf.mxu0
      %2404 = vmatprep.mubr.bf16.mxu0 %v2155
      %2405 = vmatmul.mubr.bf16.gmra.mxu0 %v2091
      %v2406 = vpop.f32.mrf.mxu0
      %v2407 = vadd.f32 0.0, %v2406
      %v2408 = vpop.f32.mrf.mxu0
      %v2409 = vpop.f32.mrf.mxu0
      %v2410 = vadd.f32 0.0, %v2409
      %v2411 = vpop.f32.mrf.mxu0
      %2412 = vmatprep.mubr.bf16.mxu0 %v2156
      %2413 = vmatmul.mubr.bf16.gmra.mxu0 %v2092
      %v2414 = vpop.f32.mrf.mxu0
      %v2415 = vadd.f32 0.0, %v2414
      %v2416 = vpop.f32.mrf.mxu0
      %v2417 = vpop.f32.mrf.mxu0
      %v2418 = vadd.f32 0.0, %v2417
      %v2419 = vpop.f32.mrf.mxu0
      %2420 = vmatprep.mubr.bf16.mxu0 %v2157
      %2421 = vmatmul.mubr.bf16.gmra.mxu0 %v2093
      %v2422 = vpop.f32.mrf.mxu0
      %v2423 = vadd.f32 0.0, %v2422
      %v2424 = vpop.f32.mrf.mxu0
      %v2425 = vpop.f32.mrf.mxu0
      %v2426 = vadd.f32 0.0, %v2425
      %v2427 = vpop.f32.mrf.mxu0
      %2428 = vmatprep.mubr.bf16.mxu0 %v2158
      %2429 = vmatmul.mubr.bf16.gmra.mxu0 %v2094
      %v2430 = vpop.f32.mrf.mxu0
      %v2431 = vadd.f32 0.0, %v2430
      %v2432 = vpop.f32.mrf.mxu0
      %v2433 = vpop.f32.mrf.mxu0
      %v2434 = vadd.f32 0.0, %v2433
      %v2435 = vpop.f32.mrf.mxu0
      %2436 = vmatprep.mubr.bf16.mxu0 %v2159
      %2437 = vmatmul.mubr.bf16.gmra.mxu0 %v2095
      %v2438 = vpop.f32.mrf.mxu0
      %v2439 = vadd.f32 0.0, %v2438
      %v2440 = vpop.f32.mrf.mxu0
      %v2441 = vpop.f32.mrf.mxu0
      %v2442 = vadd.f32 0.0, %v2441
      %v2443 = vpop.f32.mrf.mxu0
      %2444 = vmatprep.mubr.bf16.mxu0 %v2160
      %2445 = vmatmul.mubr.bf16.gmra.mxu0 %v2096
      %v2446 = vpop.f32.mrf.mxu0
      %v2447 = vadd.f32 0.0, %v2446
      %v2448 = vpop.f32.mrf.mxu0
      %v2449 = vpop.f32.mrf.mxu0
      %v2450 = vadd.f32 0.0, %v2449
      %v2451 = vpop.f32.mrf.mxu0
      %2452 = vmatprep.mubr.bf16.mxu0 %v2161
      %2453 = vmatmul.mubr.bf16.gmra.mxu0 %v2097
      %v2454 = vpop.f32.mrf.mxu0
      %v2455 = vadd.f32 0.0, %v2454
      %v2456 = vpop.f32.mrf.mxu0
      %v2457 = vpop.f32.mrf.mxu0
      %v2458 = vadd.f32 0.0, %v2457
      %v2459 = vpop.f32.mrf.mxu0
      %2460 = vmatprep.mubr.bf16.mxu0 %v2162
      %2461 = vmatmul.mubr.bf16.gmra.mxu0 %v2098
      %v2462 = vpop.f32.mrf.mxu0
      %v2463 = vadd.f32 0.0, %v2462
      %v2464 = vpop.f32.mrf.mxu0
      %v2465 = vpop.f32.mrf.mxu0
      %v2466 = vadd.f32 0.0, %v2465
      %v2467 = vpop.f32.mrf.mxu0
      %2468 = vdwg.mxu0
      %v2501 = vunpack.c.l.b16 %v1376
      %v2502 = vunpack.c.l.b16 %v1377
      %v2503 = vunpack.c.l.b16 %v1378
      %v2504 = vunpack.c.l.b16 %v1379
      %v2505 = vunpack.c.l.b16 %v1380
      %v2506 = vunpack.c.l.b16 %v1381
      %v2507 = vunpack.c.l.b16 %v1382
      %v2508 = vunpack.c.l.b16 %v1383
      %v2509 = vunpack.c.l.b16 %v1384
      %v2510 = vunpack.c.l.b16 %v1385
      %v2511 = vunpack.c.l.b16 %v1386
      %v2512 = vunpack.c.l.b16 %v1387
      %v2513 = vunpack.c.l.b16 %v1388
      %v2514 = vunpack.c.l.b16 %v1389
      %v2515 = vunpack.c.l.b16 %v1390
      %v2516 = vunpack.c.l.b16 %v1391
      %v2517 = vunpack.c.l.b16 %v1392
      %v2518 = vunpack.c.l.b16 %v1393
      %v2519 = vunpack.c.l.b16 %v1394
      %v2520 = vunpack.c.l.b16 %v1395
      %v2521 = vunpack.c.l.b16 %v1396
      %v2522 = vunpack.c.l.b16 %v1397
      %v2523 = vunpack.c.l.b16 %v1398
      %v2524 = vunpack.c.l.b16 %v1399
      %v2525 = vunpack.c.l.b16 %v1400
      %v2526 = vunpack.c.l.b16 %v1401
      %v2527 = vunpack.c.l.b16 %v1402
      %v2528 = vunpack.c.l.b16 %v1403
      %v2529 = vunpack.c.l.b16 %v1404
      %v2530 = vunpack.c.l.b16 %v1405
      %v2531 = vunpack.c.l.b16 %v1406
      %v2532 = vunpack.c.l.b16 %v1407
      %v2533 = vpack.c.b16 %v2502, %v2501
      %v2534 = vpack.c.b16 %v2504, %v2503
      %v2535 = vpack.c.b16 %v2506, %v2505
      %v2536 = vpack.c.b16 %v2508, %v2507
      %v2537 = vpack.c.b16 %v2510, %v2509
      %v2538 = vpack.c.b16 %v2512, %v2511
      %v2539 = vpack.c.b16 %v2514, %v2513
      %v2540 = vpack.c.b16 %v2516, %v2515
      %v2541 = vpack.c.b16 %v2518, %v2517
      %v2542 = vpack.c.b16 %v2520, %v2519
      %v2543 = vpack.c.b16 %v2522, %v2521
      %v2544 = vpack.c.b16 %v2524, %v2523
      %v2545 = vpack.c.b16 %v2526, %v2525
      %v2546 = vpack.c.b16 %v2528, %v2527
      %v2547 = vpack.c.b16 %v2530, %v2529
      %v2548 = vpack.c.b16 %v2532, %v2531
      %2565 = vmatprep.subr.bf16.mxu0 0
      %2566 = vmatpush1.bf16.msra.mxu0 %v2540
      %2567 = vmatprep.subr.bf16.mxu0 0
      %2568 = vmatpush1.bf16.msra.mxu0 %v2539
      %2569 = vmatprep.subr.bf16.mxu0 0
      %2570 = vmatpush1.bf16.msra.mxu0 %v2538
      %2571 = vmatprep.subr.bf16.mxu0 0
      %2572 = vmatpush1.bf16.msra.mxu0 %v2537
      %2573 = vmatprep.subr.bf16.mxu0 0
      %2574 = vmatpush1.bf16.msra.mxu0 %v2536
      %2575 = vmatprep.subr.bf16.mxu0 0
      %2576 = vmatpush1.bf16.msra.mxu0 %v2535
      %2577 = vmatprep.subr.bf16.mxu0 0
      %2578 = vmatpush1.bf16.msra.mxu0 %v2534
      %2579 = vmatprep.subr.bf16.mxu0 0
      %2580 = vmatpush1.bf16.msra.mxu0 %v2533
      %2581 = vmatprep.subr.bf16.mxu0 0
      %2582 = vmatpush2.bf16.msra.mxu0 %v2548
      %2583 = vmatprep.subr.bf16.mxu0 0
      %2584 = vmatpush2.bf16.msra.mxu0 %v2547
      %2585 = vmatprep.subr.bf16.mxu0 0
      %2586 = vmatpush2.bf16.msra.mxu0 %v2546
      %2587 = vmatprep.subr.bf16.mxu0 0
      %2588 = vmatpush2.bf16.msra.mxu0 %v2545
      %2589 = vmatprep.subr.bf16.mxu0 0
      %2590 = vmatpush2.bf16.msra.mxu0 %v2544
      %2591 = vmatprep.subr.bf16.mxu0 0
      %2592 = vmatpush2.bf16.msra.mxu0 %v2543
      %2593 = vmatprep.subr.bf16.mxu0 0
      %2594 = vmatpush2.bf16.msra.mxu0 %v2542
      %2595 = vmatprep.subr.bf16.mxu0 0
      %2596 = vmatpush2.bf16.msra.mxu0 %v2541
      %2597 = vmatprep.mubr.bf16.mxu0 %v1344
      %2598 = vmatmul.mubr.bf16.gmra.mxu0 %v1248
      %v2599 = vpop.f32.mrf.mxu0
      %v2600 = vadd.f32 %v2343, %v2599
      %v2601 = vpop.f32.mrf.mxu0
      %v2602 = vpop.f32.mrf.mxu0
      %v2603 = vadd.f32 %v2346, %v2602
      %v2604 = vpop.f32.mrf.mxu0
      %2605 = vmatprep.mubr.bf16.mxu0 %v1345
      %2606 = vmatmul.mubr.bf16.gmra.mxu0 %v1249
      %v2607 = vpop.f32.mrf.mxu0
      %v2608 = vadd.f32 %v2351, %v2607
      %v2609 = vpop.f32.mrf.mxu0
      %v2610 = vpop.f32.mrf.mxu0
      %v2611 = vadd.f32 %v2354, %v2610
      %v2612 = vpop.f32.mrf.mxu0
      %2613 = vmatprep.mubr.bf16.mxu0 %v1346
      %2614 = vmatmul.mubr.bf16.gmra.mxu0 %v1250
      %v2615 = vpop.f32.mrf.mxu0
      %v2616 = vadd.f32 %v2359, %v2615
      %v2617 = vpop.f32.mrf.mxu0
      %v2618 = vpop.f32.mrf.mxu0
      %v2619 = vadd.f32 %v2362, %v2618
      %v2620 = vpop.f32.mrf.mxu0
      %2621 = vmatprep.mubr.bf16.mxu0 %v1347
      %2622 = vmatmul.mubr.bf16.gmra.mxu0 %v1251
      %v2623 = vpop.f32.mrf.mxu0
      %v2624 = vadd.f32 %v2367, %v2623
      %v2625 = vpop.f32.mrf.mxu0
      %v2626 = vpop.f32.mrf.mxu0
      %v2627 = vadd.f32 %v2370, %v2626
      %v2628 = vpop.f32.mrf.mxu0
      %2629 = vmatprep.mubr.bf16.mxu0 %v1348
      %2630 = vmatmul.mubr.bf16.gmra.mxu0 %v1252
      %v2631 = vpop.f32.mrf.mxu0
      %v2632 = vadd.f32 %v2375, %v2631
      %v2633 = vpop.f32.mrf.mxu0
      %v2634 = vpop.f32.mrf.mxu0
      %v2635 = vadd.f32 %v2378, %v2634
      %v2636 = vpop.f32.mrf.mxu0
      %2637 = vmatprep.mubr.bf16.mxu0 %v1349
      %2638 = vmatmul.mubr.bf16.gmra.mxu0 %v1253
      %v2639 = vpop.f32.mrf.mxu0
      %v2640 = vadd.f32 %v2383, %v2639
      %v2641 = vpop.f32.mrf.mxu0
      %v2642 = vpop.f32.mrf.mxu0
      %v2643 = vadd.f32 %v2386, %v2642
      %v2644 = vpop.f32.mrf.mxu0
      %2645 = vmatprep.mubr.bf16.mxu0 %v1350
      %2646 = vmatmul.mubr.bf16.gmra.mxu0 %v1254
      %v2647 = vpop.f32.mrf.mxu0
      %v2648 = vadd.f32 %v2391, %v2647
      %v2649 = vpop.f32.mrf.mxu0
      %v2650 = vpop.f32.mrf.mxu0
      %v2651 = vadd.f32 %v2394, %v2650
      %v2652 = vpop.f32.mrf.mxu0
      %2653 = vmatprep.mubr.bf16.mxu0 %v1351
      %2654 = vmatmul.mubr.bf16.gmra.mxu0 %v1255
      %v2655 = vpop.f32.mrf.mxu0
      %v2656 = vadd.f32 %v2399, %v2655
      %v2657 = vpop.f32.mrf.mxu0
      %v2658 = vpop.f32.mrf.mxu0
      %v2659 = vadd.f32 %v2402, %v2658
      %v2660 = vpop.f32.mrf.mxu0
      %2661 = vmatprep.mubr.bf16.mxu0 %v1352
      %2662 = vmatmul.mubr.bf16.gmra.mxu0 %v1256
      %v2663 = vpop.f32.mrf.mxu0
      %v2664 = vadd.f32 %v2407, %v2663
      %v2665 = vpop.f32.mrf.mxu0
      %v2666 = vpop.f32.mrf.mxu0
      %v2667 = vadd.f32 %v2410, %v2666
      %v2668 = vpop.f32.mrf.mxu0
      %2669 = vmatprep.mubr.bf16.mxu0 %v1353
      %2670 = vmatmul.mubr.bf16.gmra.mxu0 %v1257
      %v2671 = vpop.f32.mrf.mxu0
      %v2672 = vadd.f32 %v2415, %v2671
      %v2673 = vpop.f32.mrf.mxu0
      %v2674 = vpop.f32.mrf.mxu0
      %v2675 = vadd.f32 %v2418, %v2674
      %v2676 = vpop.f32.mrf.mxu0
      %2677 = vmatprep.mubr.bf16.mxu0 %v1354
      %2678 = vmatmul.mubr.bf16.gmra.mxu0 %v1258
      %v2679 = vpop.f32.mrf.mxu0
      %v2680 = vadd.f32 %v2423, %v2679
      %v2681 = vpop.f32.mrf.mxu0
      %v2682 = vpop.f32.mrf.mxu0
      %v2683 = vadd.f32 %v2426, %v2682
      %v2684 = vpop.f32.mrf.mxu0
      %2685 = vmatprep.mubr.bf16.mxu0 %v1355
      %2686 = vmatmul.mubr.bf16.gmra.mxu0 %v1259
      %v2687 = vpop.f32.mrf.mxu0
      %v2688 = vadd.f32 %v2431, %v2687
      %v2689 = vpop.f32.mrf.mxu0
      %v2690 = vpop.f32.mrf.mxu0
      %v2691 = vadd.f32 %v2434, %v2690
      %v2692 = vpop.f32.mrf.mxu0
      %2693 = vmatprep.mubr.bf16.mxu0 %v1356
      %2694 = vmatmul.mubr.bf16.gmra.mxu0 %v1260
      %v2695 = vpop.f32.mrf.mxu0
      %v2696 = vadd.f32 %v2439, %v2695
      %v2697 = vpop.f32.mrf.mxu0
      %v2698 = vpop.f32.mrf.mxu0
      %v2699 = vadd.f32 %v2442, %v2698
      %v2700 = vpop.f32.mrf.mxu0
      %2701 = vmatprep.mubr.bf16.mxu0 %v1357
      %2702 = vmatmul.mubr.bf16.gmra.mxu0 %v1261
      %v2703 = vpop.f32.mrf.mxu0
      %v2704 = vadd.f32 %v2447, %v2703
      %v2705 = vpop.f32.mrf.mxu0
      %v2706 = vpop.f32.mrf.mxu0
      %v2707 = vadd.f32 %v2450, %v2706
      %v2708 = vpop.f32.mrf.mxu0
      %2709 = vmatprep.mubr.bf16.mxu0 %v1358
      %2710 = vmatmul.mubr.bf16.gmra.mxu0 %v1262
      %v2711 = vpop.f32.mrf.mxu0
      %v2712 = vadd.f32 %v2455, %v2711
      %v2713 = vpop.f32.mrf.mxu0
      %v2714 = vpop.f32.mrf.mxu0
      %v2715 = vadd.f32 %v2458, %v2714
      %v2716 = vpop.f32.mrf.mxu0
      %2717 = vmatprep.mubr.bf16.mxu0 %v1359
      %2718 = vmatmul.mubr.bf16.gmra.mxu0 %v1263
      %v2719 = vpop.f32.mrf.mxu0
      %v2720 = vadd.f32 %v2463, %v2719
      %v2721 = vpop.f32.mrf.mxu0
      %v2722 = vpop.f32.mrf.mxu0
      %v2723 = vadd.f32 %v2466, %v2722
      %v2724 = vpop.f32.mrf.mxu0
      %2725 = vdwg.mxu0
      %v2726 = vld [vmem:[%s620 + $0x4] sm:$0xf]
      %v2727 = vld [vmem:[%s620 + $0x8] sm:$0xf]
      %v2728 = vld [vmem:[%s620 + $0xc] sm:$0x1]
      %v2729 = vld [vmem:[%s620 + $0x14] sm:$0xf]
      %v2730 = vld [vmem:[%s620 + $0x18] sm:$0xf]
      %v2731 = vld [vmem:[%s620 + $0x1c] sm:$0x1]
      %v2732 = vld [vmem:[%s620 + $0x24] sm:$0xf]
      %v2733 = vld [vmem:[%s620 + $0x28] sm:$0xf]
      %v2734 = vld [vmem:[%s620 + $0x2c] sm:$0x1]
      %v2735 = vld [vmem:[%s620 + $0x34] sm:$0xf]
      %v2736 = vld [vmem:[%s620 + $0x38] sm:$0xf]
      %v2737 = vld [vmem:[%s620 + $0x3c] sm:$0x1]
      %v2738 = vld [vmem:[%s620 + $0x44] sm:$0xf]
      %v2739 = vld [vmem:[%s620 + $0x48] sm:$0xf]
      %v2740 = vld [vmem:[%s620 + $0x4c] sm:$0x1]
      %v2741 = vld [vmem:[%s620 + $0x54] sm:$0xf]
      %v2742 = vld [vmem:[%s620 + $0x58] sm:$0xf]
      %v2743 = vld [vmem:[%s620 + $0x5c] sm:$0x1]
      %v2744 = vld [vmem:[%s620 + $0x64] sm:$0xf]
      %v2745 = vld [vmem:[%s620 + $0x68] sm:$0xf]
      %v2746 = vld [vmem:[%s620 + $0x6c] sm:$0x1]
      %v2747 = vld [vmem:[%s620 + $0x74] sm:$0xf]
      %v2748 = vld [vmem:[%s620 + $0x78] sm:$0xf]
      %v2749 = vld [vmem:[%s620 + $0x7c] sm:$0x1]
      %v2750 = vld [vmem:[%s620 + $0x84] sm:$0xf]
      %v2751 = vld [vmem:[%s620 + $0x88] sm:$0xf]
      %v2752 = vld [vmem:[%s620 + $0x8c] sm:$0x1]
      %v2753 = vld [vmem:[%s620 + $0x94] sm:$0xf]
      %v2754 = vld [vmem:[%s620 + $0x98] sm:$0xf]
      %v2755 = vld [vmem:[%s620 + $0x9c] sm:$0x1]
      %v2756 = vld [vmem:[%s620 + $0xa4] sm:$0xf]
      %v2757 = vld [vmem:[%s620 + $0xa8] sm:$0xf]
      %v2758 = vld [vmem:[%s620 + $0xac] sm:$0x1]
      %v2759 = vld [vmem:[%s620 + $0xb4] sm:$0xf]
      %v2760 = vld [vmem:[%s620 + $0xb8] sm:$0xf]
      %v2761 = vld [vmem:[%s620 + $0xbc] sm:$0x1]
      %v2762 = vld [vmem:[%s620 + $0xc4] sm:$0xf]
      %v2763 = vld [vmem:[%s620 + $0xc8] sm:$0xf]
      %v2764 = vld [vmem:[%s620 + $0xcc] sm:$0x1]
      %v2765 = vld [vmem:[%s620 + $0xd4] sm:$0xf]
      %v2766 = vld [vmem:[%s620 + $0xd8] sm:$0xf]
      %v2767 = vld [vmem:[%s620 + $0xdc] sm:$0x1]
      %v2768 = vld [vmem:[%s620 + $0xe4] sm:$0xf]
      %v2769 = vld [vmem:[%s620 + $0xe8] sm:$0xf]
      %v2770 = vld [vmem:[%s620 + $0xec] sm:$0x1]
      %v2771 = vld [vmem:[%s620 + $0xf4] sm:$0xf]
      %v2772 = vld [vmem:[%s620 + $0xf8] sm:$0xf]
      %v2773 = vld [vmem:[%s620 + $0xfc] sm:$0x1]
      %v2775 = vshrl.u32 %v2726, 16
      %v2777 = vrot.slane %v2775, 4
      %v2778 = vshll.u32 %v2726, 16
      %v2780 = vrot.slane %v2778, 5
      %v2781 = vor.u32 %v2777, %v2780
      %v2782 = vrot.slane %v2781, 4
      %v2784 = vshll.u32 %v2727, 16
      %v2786 = vrot.slane %v2784, 5
      %v2787 = vsel %vm1426, %v2782, %v2786
      %v2788 = vshrl.u32 %v2727, 16
      %v2790 = vrot.slane %v2788, 4
      %v2791 = vor.u32 %v2790, %v2786
      %v2792 = vrot.slane %v2791, 4
      %v2794 = vshll.u32 %v2728, 16
      %v2796 = vrot.slane %v2794, 5
      %v2797 = vsel %vm1426, %v2792, %v2796
      %v2799 = vshrl.u32 %v2729, 16
      %v2801 = vrot.slane %v2799, 4
      %v2802 = vshll.u32 %v2729, 16
      %v2804 = vrot.slane %v2802, 5
      %v2805 = vor.u32 %v2801, %v2804
      %v2806 = vrot.slane %v2805, 4
      %v2808 = vshll.u32 %v2730, 16
      %v2810 = vrot.slane %v2808, 5
      %v2811 = vsel %vm1426, %v2806, %v2810
      %v2812 = vshrl.u32 %v2730, 16
      %v2814 = vrot.slane %v2812, 4
      %v2815 = vor.u32 %v2814, %v2810
      %v2816 = vrot.slane %v2815, 4
      %v2818 = vshll.u32 %v2731, 16
      %v2820 = vrot.slane %v2818, 5
      %v2821 = vsel %vm1426, %v2816, %v2820
      %v2823 = vshrl.u32 %v2732, 16
      %v2825 = vrot.slane %v2823, 4
      %v2826 = vshll.u32 %v2732, 16
      %v2828 = vrot.slane %v2826, 5
      %v2829 = vor.u32 %v2825, %v2828
      %v2830 = vrot.slane %v2829, 4
      %v2832 = vshll.u32 %v2733, 16
      %v2834 = vrot.slane %v2832, 5
      %v2835 = vsel %vm1426, %v2830, %v2834
      %v2836 = vshrl.u32 %v2733, 16
      %v2838 = vrot.slane %v2836, 4
      %v2839 = vor.u32 %v2838, %v2834
      %v2840 = vrot.slane %v2839, 4
      %v2842 = vshll.u32 %v2734, 16
      %v2844 = vrot.slane %v2842, 5
      %v2845 = vsel %vm1426, %v2840, %v2844
      %v2847 = vshrl.u32 %v2735, 16
      %v2849 = vrot.slane %v2847, 4
      %v2850 = vshll.u32 %v2735, 16
      %v2852 = vrot.slane %v2850, 5
      %v2853 = vor.u32 %v2849, %v2852
      %v2854 = vrot.slane %v2853, 4
      %v2856 = vshll.u32 %v2736, 16
      %v2858 = vrot.slane %v2856, 5
      %v2859 = vsel %vm1426, %v2854, %v2858
      %v2860 = vshrl.u32 %v2736, 16
      %v2862 = vrot.slane %v2860, 4
      %v2863 = vor.u32 %v2862, %v2858
      %v2864 = vrot.slane %v2863, 4
      %v2866 = vshll.u32 %v2737, 16
      %v2868 = vrot.slane %v2866, 5
      %v2869 = vsel %vm1426, %v2864, %v2868
      %v2871 = vshrl.u32 %v2738, 16
      %v2873 = vrot.slane %v2871, 4
      %v2874 = vshll.u32 %v2738, 16
      %v2876 = vrot.slane %v2874, 5
      %v2877 = vor.u32 %v2873, %v2876
      %v2878 = vrot.slane %v2877, 4
      %v2880 = vshll.u32 %v2739, 16
      %v2882 = vrot.slane %v2880, 5
      %v2883 = vsel %vm1426, %v2878, %v2882
      %v2884 = vshrl.u32 %v2739, 16
      %v2886 = vrot.slane %v2884, 4
      %v2887 = vor.u32 %v2886, %v2882
      %v2888 = vrot.slane %v2887, 4
      %v2890 = vshll.u32 %v2740, 16
      %v2892 = vrot.slane %v2890, 5
      %v2893 = vsel %vm1426, %v2888, %v2892
      %v2895 = vshrl.u32 %v2741, 16
      %v2897 = vrot.slane %v2895, 4
      %v2898 = vshll.u32 %v2741, 16
      %v2900 = vrot.slane %v2898, 5
      %v2901 = vor.u32 %v2897, %v2900
      %v2902 = vrot.slane %v2901, 4
      %v2904 = vshll.u32 %v2742, 16
      %v2906 = vrot.slane %v2904, 5
      %v2907 = vsel %vm1426, %v2902, %v2906
      %v2908 = vshrl.u32 %v2742, 16
      %v2910 = vrot.slane %v2908, 4
      %v2911 = vor.u32 %v2910, %v2906
      %v2912 = vrot.slane %v2911, 4
      %v2914 = vshll.u32 %v2743, 16
      %v2916 = vrot.slane %v2914, 5
      %v2917 = vsel %vm1426, %v2912, %v2916
      %v2919 = vshrl.u32 %v2744, 16
      %v2921 = vrot.slane %v2919, 4
      %v2922 = vshll.u32 %v2744, 16
      %v2924 = vrot.slane %v2922, 5
      %v2925 = vor.u32 %v2921, %v2924
      %v2926 = vrot.slane %v2925, 4
      %v2928 = vshll.u32 %v2745, 16
      %v2930 = vrot.slane %v2928, 5
      %v2931 = vsel %vm1426, %v2926, %v2930
      %v2932 = vshrl.u32 %v2745, 16
      %v2934 = vrot.slane %v2932, 4
      %v2935 = vor.u32 %v2934, %v2930
      %v2936 = vrot.slane %v2935, 4
      %v2938 = vshll.u32 %v2746, 16
      %v2940 = vrot.slane %v2938, 5
      %v2941 = vsel %vm1426, %v2936, %v2940
      %v2943 = vshrl.u32 %v2747, 16
      %v2945 = vrot.slane %v2943, 4
      %v2946 = vshll.u32 %v2747, 16
      %v2948 = vrot.slane %v2946, 5
      %v2949 = vor.u32 %v2945, %v2948
      %v2950 = vrot.slane %v2949, 4
      %v2952 = vshll.u32 %v2748, 16
      %v2954 = vrot.slane %v2952, 5
      %v2955 = vsel %vm1426, %v2950, %v2954
      %v2956 = vshrl.u32 %v2748, 16
      %v2958 = vrot.slane %v2956, 4
      %v2959 = vor.u32 %v2958, %v2954
      %v2960 = vrot.slane %v2959, 4
      %v2962 = vshll.u32 %v2749, 16
      %v2964 = vrot.slane %v2962, 5
      %v2965 = vsel %vm1426, %v2960, %v2964
      %v2967 = vshrl.u32 %v2750, 16
      %v2969 = vrot.slane %v2967, 4
      %v2970 = vshll.u32 %v2750, 16
      %v2972 = vrot.slane %v2970, 5
      %v2973 = vor.u32 %v2969, %v2972
      %v2974 = vrot.slane %v2973, 4
      %v2976 = vshll.u32 %v2751, 16
      %v2978 = vrot.slane %v2976, 5
      %v2979 = vsel %vm1426, %v2974, %v2978
      %v2980 = vshrl.u32 %v2751, 16
      %v2982 = vrot.slane %v2980, 4
      %v2983 = vor.u32 %v2982, %v2978
      %v2984 = vrot.slane %v2983, 4
      %v2986 = vshll.u32 %v2752, 16
      %v2988 = vrot.slane %v2986, 5
      %v2989 = vsel %vm1426, %v2984, %v2988
      %v2991 = vshrl.u32 %v2753, 16
      %v2993 = vrot.slane %v2991, 4
      %v2994 = vshll.u32 %v2753, 16
      %v2996 = vrot.slane %v2994, 5
      %v2997 = vor.u32 %v2993, %v2996
      %v2998 = vrot.slane %v2997, 4
      %v3000 = vshll.u32 %v2754, 16
      %v3002 = vrot.slane %v3000, 5
      %v3003 = vsel %vm1426, %v2998, %v3002
      %v3004 = vshrl.u32 %v2754, 16
      %v3006 = vrot.slane %v3004, 4
      %v3007 = vor.u32 %v3006, %v3002
      %v3008 = vrot.slane %v3007, 4
      %v3010 = vshll.u32 %v2755, 16
      %v3012 = vrot.slane %v3010, 5
      %v3013 = vsel %vm1426, %v3008, %v3012
      %v3015 = vshrl.u32 %v2756, 16
      %v3017 = vrot.slane %v3015, 4
      %v3018 = vshll.u32 %v2756, 16
      %v3020 = vrot.slane %v3018, 5
      %v3021 = vor.u32 %v3017, %v3020
      %v3022 = vrot.slane %v3021, 4
      %v3024 = vshll.u32 %v2757, 16
      %v3026 = vrot.slane %v3024, 5
      %v3027 = vsel %vm1426, %v3022, %v3026
      %v3028 = vshrl.u32 %v2757, 16
      %v3030 = vrot.slane %v3028, 4
      %v3031 = vor.u32 %v3030, %v3026
      %v3032 = vrot.slane %v3031, 4
      %v3034 = vshll.u32 %v2758, 16
      %v3036 = vrot.slane %v3034, 5
      %v3037 = vsel %vm1426, %v3032, %v3036
      %v3039 = vshrl.u32 %v2759, 16
      %v3041 = vrot.slane %v3039, 4
      %v3042 = vshll.u32 %v2759, 16
      %v3044 = vrot.slane %v3042, 5
      %v3045 = vor.u32 %v3041, %v3044
      %v3046 = vrot.slane %v3045, 4
      %v3048 = vshll.u32 %v2760, 16
      %v3050 = vrot.slane %v3048, 5
      %v3051 = vsel %vm1426, %v3046, %v3050
      %v3052 = vshrl.u32 %v2760, 16
      %v3054 = vrot.slane %v3052, 4
      %v3055 = vor.u32 %v3054, %v3050
      %v3056 = vrot.slane %v3055, 4
      %v3058 = vshll.u32 %v2761, 16
      %v3060 = vrot.slane %v3058, 5
      %v3061 = vsel %vm1426, %v3056, %v3060
      %v3063 = vshrl.u32 %v2762, 16
      %v3065 = vrot.slane %v3063, 4
      %v3066 = vshll.u32 %v2762, 16
      %v3068 = vrot.slane %v3066, 5
      %v3069 = vor.u32 %v3065, %v3068
      %v3070 = vrot.slane %v3069, 4
      %v3072 = vshll.u32 %v2763, 16
      %v3074 = vrot.slane %v3072, 5
      %v3075 = vsel %vm1426, %v3070, %v3074
      %v3076 = vshrl.u32 %v2763, 16
      %v3078 = vrot.slane %v3076, 4
      %v3079 = vor.u32 %v3078, %v3074
      %v3080 = vrot.slane %v3079, 4
      %v3082 = vshll.u32 %v2764, 16
      %v3084 = vrot.slane %v3082, 5
      %v3085 = vsel %vm1426, %v3080, %v3084
      %v3087 = vshrl.u32 %v2765, 16
      %v3089 = vrot.slane %v3087, 4
      %v3090 = vshll.u32 %v2765, 16
      %v3092 = vrot.slane %v3090, 5
      %v3093 = vor.u32 %v3089, %v3092
      %v3094 = vrot.slane %v3093, 4
      %v3096 = vshll.u32 %v2766, 16
      %v3098 = vrot.slane %v3096, 5
      %v3099 = vsel %vm1426, %v3094, %v3098
      %v3100 = vshrl.u32 %v2766, 16
      %v3102 = vrot.slane %v3100, 4
      %v3103 = vor.u32 %v3102, %v3098
      %v3104 = vrot.slane %v3103, 4
      %v3106 = vshll.u32 %v2767, 16
      %v3108 = vrot.slane %v3106, 5
      %v3109 = vsel %vm1426, %v3104, %v3108
      %v3111 = vshrl.u32 %v2768, 16
      %v3113 = vrot.slane %v3111, 4
      %v3114 = vshll.u32 %v2768, 16
      %v3116 = vrot.slane %v3114, 5
      %v3117 = vor.u32 %v3113, %v3116
      %v3118 = vrot.slane %v3117, 4
      %v3120 = vshll.u32 %v2769, 16
      %v3122 = vrot.slane %v3120, 5
      %v3123 = vsel %vm1426, %v3118, %v3122
      %v3124 = vshrl.u32 %v2769, 16
      %v3126 = vrot.slane %v3124, 4
      %v3127 = vor.u32 %v3126, %v3122
      %v3128 = vrot.slane %v3127, 4
      %v3130 = vshll.u32 %v2770, 16
      %v3132 = vrot.slane %v3130, 5
      %v3133 = vsel %vm1426, %v3128, %v3132
      %v3135 = vshrl.u32 %v2771, 16
      %v3137 = vrot.slane %v3135, 4
      %v3138 = vshll.u32 %v2771, 16
      %v3140 = vrot.slane %v3138, 5
      %v3141 = vor.u32 %v3137, %v3140
      %v3142 = vrot.slane %v3141, 4
      %v3144 = vshll.u32 %v2772, 16
      %v3146 = vrot.slane %v3144, 5
      %v3147 = vsel %vm1426, %v3142, %v3146
      %v3148 = vshrl.u32 %v2772, 16
      %v3150 = vrot.slane %v3148, 4
      %v3151 = vor.u32 %v3150, %v3146
      %v3152 = vrot.slane %v3151, 4
      %v3154 = vshll.u32 %v2773, 16
      %v3156 = vrot.slane %v3154, 5
      %v3157 = vsel %vm1426, %v3152, %v3156
      %v3190 = vunpack.c.l.b16 %v1652
      %v3191 = vunpack.c.l.b16 %v1653
      %v3192 = vunpack.c.l.b16 %v1655
      %v3193 = vunpack.c.l.b16 %v1656
      %v3194 = vunpack.c.l.b16 %v1658
      %v3195 = vunpack.c.l.b16 %v1659
      %v3196 = vunpack.c.l.b16 %v1661
      %v3197 = vunpack.c.l.b16 %v1662
      %v3198 = vunpack.c.l.b16 %v1664
      %v3199 = vunpack.c.l.b16 %v1665
      %v3200 = vunpack.c.l.b16 %v1667
      %v3201 = vunpack.c.l.b16 %v1668
      %v3202 = vunpack.c.l.b16 %v1670
      %v3203 = vunpack.c.l.b16 %v1671
      %v3204 = vunpack.c.l.b16 %v1673
      %v3205 = vunpack.c.l.b16 %v1674
      %v3206 = vunpack.c.l.b16 %v1676
      %v3207 = vunpack.c.l.b16 %v1677
      %v3208 = vunpack.c.l.b16 %v1679
      %v3209 = vunpack.c.l.b16 %v1680
      %v3210 = vunpack.c.l.b16 %v1682
      %v3211 = vunpack.c.l.b16 %v1683
      %v3212 = vunpack.c.l.b16 %v1685
      %v3213 = vunpack.c.l.b16 %v1686
      %v3214 = vunpack.c.l.b16 %v1688
      %v3215 = vunpack.c.l.b16 %v1689
      %v3216 = vunpack.c.l.b16 %v1691
      %v3217 = vunpack.c.l.b16 %v1692
      %v3218 = vunpack.c.l.b16 %v1694
      %v3219 = vunpack.c.l.b16 %v1695
      %v3220 = vunpack.c.l.b16 %v1697
      %v3221 = vunpack.c.l.b16 %v1698
      %v3222 = vpack.c.b16 %v3191, %v3190
      %v3223 = vpack.c.b16 %v3193, %v3192
      %v3224 = vpack.c.b16 %v3195, %v3194
      %v3225 = vpack.c.b16 %v3197, %v3196
      %v3226 = vpack.c.b16 %v3199, %v3198
      %v3227 = vpack.c.b16 %v3201, %v3200
      %v3228 = vpack.c.b16 %v3203, %v3202
      %v3229 = vpack.c.b16 %v3205, %v3204
      %v3230 = vpack.c.b16 %v3207, %v3206
      %v3231 = vpack.c.b16 %v3209, %v3208
      %v3232 = vpack.c.b16 %v3211, %v3210
      %v3233 = vpack.c.b16 %v3213, %v3212
      %v3234 = vpack.c.b16 %v3215, %v3214
      %v3235 = vpack.c.b16 %v3217, %v3216
      %v3236 = vpack.c.b16 %v3219, %v3218
      %v3237 = vpack.c.b16 %v3221, %v3220
      %v3254 = vunpack.c.l.b16 %v2787
      %v3255 = vunpack.c.l.b16 %v2797
      %v3256 = vunpack.c.l.b16 %v2811
      %v3257 = vunpack.c.l.b16 %v2821
      %v3258 = vunpack.c.l.b16 %v2835
      %v3259 = vunpack.c.l.b16 %v2845
      %v3260 = vunpack.c.l.b16 %v2859
      %v3261 = vunpack.c.l.b16 %v2869
      %v3262 = vunpack.c.l.b16 %v2883
      %v3263 = vunpack.c.l.b16 %v2893
      %v3264 = vunpack.c.l.b16 %v2907
      %v3265 = vunpack.c.l.b16 %v2917
      %v3266 = vunpack.c.l.b16 %v2931
      %v3267 = vunpack.c.l.b16 %v2941
      %v3268 = vunpack.c.l.b16 %v2955
      %v3269 = vunpack.c.l.b16 %v2965
      %v3270 = vunpack.c.l.b16 %v2979
      %v3271 = vunpack.c.l.b16 %v2989
      %v3272 = vunpack.c.l.b16 %v3003
      %v3273 = vunpack.c.l.b16 %v3013
      %v3274 = vunpack.c.l.b16 %v3027
      %v3275 = vunpack.c.l.b16 %v3037
      %v3276 = vunpack.c.l.b16 %v3051
      %v3277 = vunpack.c.l.b16 %v3061
      %v3278 = vunpack.c.l.b16 %v3075
      %v3279 = vunpack.c.l.b16 %v3085
      %v3280 = vunpack.c.l.b16 %v3099
      %v3281 = vunpack.c.l.b16 %v3109
      %v3282 = vunpack.c.l.b16 %v3123
      %v3283 = vunpack.c.l.b16 %v3133
      %v3284 = vunpack.c.l.b16 %v3147
      %v3285 = vunpack.c.l.b16 %v3157
      %v3286 = vpack.c.b16 %v3255, %v3254
      %v3287 = vpack.c.b16 %v3257, %v3256
      %v3288 = vpack.c.b16 %v3259, %v3258
      %v3289 = vpack.c.b16 %v3261, %v3260
      %v3290 = vpack.c.b16 %v3263, %v3262
      %v3291 = vpack.c.b16 %v3265, %v3264
      %v3292 = vpack.c.b16 %v3267, %v3266
      %v3293 = vpack.c.b16 %v3269, %v3268
      %v3294 = vpack.c.b16 %v3271, %v3270
      %v3295 = vpack.c.b16 %v3273, %v3272
      %v3296 = vpack.c.b16 %v3275, %v3274
      %v3297 = vpack.c.b16 %v3277, %v3276
      %v3298 = vpack.c.b16 %v3279, %v3278
      %v3299 = vpack.c.b16 %v3281, %v3280
      %v3300 = vpack.c.b16 %v3283, %v3282
      %v3301 = vpack.c.b16 %v3285, %v3284
      %s3318 = scalar_lea.vmem %s3, 256
      %v3319 = vld [vmem:[%s3318] sm:$0xf]
      %v3320 = vld [vmem:[%s3318 + $0x4] sm:$0xf]
      %v3321 = vld [vmem:[%s3318 + $0x8] sm:$0xf]
      %v3322 = vld [vmem:[%s3318 + $0xc] sm:$0xf]
      %v3323 = vld [vmem:[%s3318 + $0x10] sm:$0xf]
      %v3324 = vld [vmem:[%s3318 + $0x14] sm:$0xf]
      %v3325 = vld [vmem:[%s3318 + $0x18] sm:$0xf]
      %v3326 = vld [vmem:[%s3318 + $0x1c] sm:$0xf]
      %v3327 = vld [vmem:[%s3318 + $0x20] sm:$0xf]
      %v3328 = vld [vmem:[%s3318 + $0x24] sm:$0xf]
      %v3329 = vld [vmem:[%s3318 + $0x28] sm:$0xf]
      %v3330 = vld [vmem:[%s3318 + $0x2c] sm:$0xf]
      %v3331 = vld [vmem:[%s3318 + $0x30] sm:$0xf]
      %v3332 = vld [vmem:[%s3318 + $0x34] sm:$0xf]
      %v3333 = vld [vmem:[%s3318 + $0x38] sm:$0xf]
      %v3334 = vld [vmem:[%s3318 + $0x3c] sm:$0xf]
      %v3335 = vld [vmem:[%s3318 + $0x40] sm:$0xf]
      %v3336 = vld [vmem:[%s3318 + $0x44] sm:$0xf]
      %v3337 = vld [vmem:[%s3318 + $0x48] sm:$0xf]
      %v3338 = vld [vmem:[%s3318 + $0x4c] sm:$0xf]
      %v3339 = vld [vmem:[%s3318 + $0x50] sm:$0xf]
      %v3340 = vld [vmem:[%s3318 + $0x54] sm:$0xf]
      %v3341 = vld [vmem:[%s3318 + $0x58] sm:$0xf]
      %v3342 = vld [vmem:[%s3318 + $0x5c] sm:$0xf]
      %v3343 = vld [vmem:[%s3318 + $0x60] sm:$0xf]
      %v3344 = vld [vmem:[%s3318 + $0x64] sm:$0xf]
      %v3345 = vld [vmem:[%s3318 + $0x68] sm:$0xf]
      %v3346 = vld [vmem:[%s3318 + $0x6c] sm:$0xf]
      %v3347 = vld [vmem:[%s3318 + $0x70] sm:$0xf]
      %v3348 = vld [vmem:[%s3318 + $0x74] sm:$0xf]
      %v3349 = vld [vmem:[%s3318 + $0x78] sm:$0xf]
      %v3350 = vld [vmem:[%s3318 + $0x7c] sm:$0xf]
      %v3383 = vunpack.c.l.b16 %v3319
      %v3384 = vunpack.c.l.b16 %v3320
      %v3385 = vunpack.c.l.b16 %v3321
      %v3386 = vunpack.c.l.b16 %v3322
      %v3387 = vunpack.c.l.b16 %v3323
      %v3388 = vunpack.c.l.b16 %v3324
      %v3389 = vunpack.c.l.b16 %v3325
      %v3390 = vunpack.c.l.b16 %v3326
      %v3391 = vunpack.c.l.b16 %v3327
      %v3392 = vunpack.c.l.b16 %v3328
      %v3393 = vunpack.c.l.b16 %v3329
      %v3394 = vunpack.c.l.b16 %v3330
      %v3395 = vunpack.c.l.b16 %v3331
      %v3396 = vunpack.c.l.b16 %v3332
      %v3397 = vunpack.c.l.b16 %v3333
      %v3398 = vunpack.c.l.b16 %v3334
      %v3399 = vunpack.c.l.b16 %v3335
      %v3400 = vunpack.c.l.b16 %v3336
      %v3401 = vunpack.c.l.b16 %v3337
      %v3402 = vunpack.c.l.b16 %v3338
      %v3403 = vunpack.c.l.b16 %v3339
      %v3404 = vunpack.c.l.b16 %v3340
      %v3405 = vunpack.c.l.b16 %v3341
      %v3406 = vunpack.c.l.b16 %v3342
      %v3407 = vunpack.c.l.b16 %v3343
      %v3408 = vunpack.c.l.b16 %v3344
      %v3409 = vunpack.c.l.b16 %v3345
      %v3410 = vunpack.c.l.b16 %v3346
      %v3411 = vunpack.c.l.b16 %v3347
      %v3412 = vunpack.c.l.b16 %v3348
      %v3413 = vunpack.c.l.b16 %v3349
      %v3414 = vunpack.c.l.b16 %v3350
      %v3415 = vpack.c.b16 %v3384, %v3383
      %v3416 = vpack.c.b16 %v3386, %v3385
      %v3417 = vpack.c.b16 %v3388, %v3387
      %v3418 = vpack.c.b16 %v3390, %v3389
      %v3419 = vpack.c.b16 %v3392, %v3391
      %v3420 = vpack.c.b16 %v3394, %v3393
      %v3421 = vpack.c.b16 %v3396, %v3395
      %v3422 = vpack.c.b16 %v3398, %v3397
      %v3423 = vpack.c.b16 %v3400, %v3399
      %v3424 = vpack.c.b16 %v3402, %v3401
      %v3425 = vpack.c.b16 %v3404, %v3403
      %v3426 = vpack.c.b16 %v3406, %v3405
      %v3427 = vpack.c.b16 %v3408, %v3407
      %v3428 = vpack.c.b16 %v3410, %v3409
      %v3429 = vpack.c.b16 %v3412, %v3411
      %v3430 = vpack.c.b16 %v3414, %v3413
      %3447 = vmatprep.subr.bf16.mxu0 0
      %3448 = vmatpush1.bf16.msra.mxu0 %v3422
      %3449 = vmatprep.subr.bf16.mxu0 0
      %3450 = vmatpush1.bf16.msra.mxu0 %v3421
      %3451 = vmatprep.subr.bf16.mxu0 0
      %3452 = vmatpush1.bf16.msra.mxu0 %v3420
      %3453 = vmatprep.subr.bf16.mxu0 0
      %3454 = vmatpush1.bf16.msra.mxu0 %v3419
      %3455 = vmatprep.subr.bf16.mxu0 0
      %3456 = vmatpush1.bf16.msra.mxu0 %v3418
      %3457 = vmatprep.subr.bf16.mxu0 0
      %3458 = vmatpush1.bf16.msra.mxu0 %v3417
      %3459 = vmatprep.subr.bf16.mxu0 0
      %3460 = vmatpush1.bf16.msra.mxu0 %v3416
      %3461 = vmatprep.subr.bf16.mxu0 0
      %3462 = vmatpush1.bf16.msra.mxu0 %v3415
      %3463 = vmatprep.subr.bf16.mxu0 0
      %3464 = vmatpush2.bf16.msra.mxu0 %v3430
      %3465 = vmatprep.subr.bf16.mxu0 0
      %3466 = vmatpush2.bf16.msra.mxu0 %v3429
      %3467 = vmatprep.subr.bf16.mxu0 0
      %3468 = vmatpush2.bf16.msra.mxu0 %v3428
      %3469 = vmatprep.subr.bf16.mxu0 0
      %3470 = vmatpush2.bf16.msra.mxu0 %v3427
      %3471 = vmatprep.subr.bf16.mxu0 0
      %3472 = vmatpush2.bf16.msra.mxu0 %v3426
      %3473 = vmatprep.subr.bf16.mxu0 0
      %3474 = vmatpush2.bf16.msra.mxu0 %v3425
      %3475 = vmatprep.subr.bf16.mxu0 0
      %3476 = vmatpush2.bf16.msra.mxu0 %v3424
      %3477 = vmatprep.subr.bf16.mxu0 0
      %3478 = vmatpush2.bf16.msra.mxu0 %v3423
      %3479 = vmatprep.mubr.bf16.mxu0 %v3286
      %3480 = vmatmul.mubr.bf16.gmra.mxu0 %v3222
      %v3481 = vpop.f32.mrf.mxu0
      %v3482 = vadd.f32 0.0, %v3481
      %v3483 = vpop.f32.mrf.mxu0
      %v3484 = vpop.f32.mrf.mxu0
      %v3485 = vadd.f32 0.0, %v3484
      %v3486 = vpop.f32.mrf.mxu0
      %3487 = vmatprep.mubr.bf16.mxu0 %v3287
      %3488 = vmatmul.mubr.bf16.gmra.mxu0 %v3223
      %v3489 = vpop.f32.mrf.mxu0
      %v3490 = vadd.f32 0.0, %v3489
      %v3491 = vpop.f32.mrf.mxu0
      %v3492 = vpop.f32.mrf.mxu0
      %v3493 = vadd.f32 0.0, %v3492
      %v3494 = vpop.f32.mrf.mxu0
      %3495 = vmatprep.mubr.bf16.mxu0 %v3288
      %3496 = vmatmul.mubr.bf16.gmra.mxu0 %v3224
      %v3497 = vpop.f32.mrf.mxu0
      %v3498 = vadd.f32 0.0, %v3497
      %v3499 = vpop.f32.mrf.mxu0
      %v3500 = vpop.f32.mrf.mxu0
      %v3501 = vadd.f32 0.0, %v3500
      %v3502 = vpop.f32.mrf.mxu0
      %3503 = vmatprep.mubr.bf16.mxu0 %v3289
      %3504 = vmatmul.mubr.bf16.gmra.mxu0 %v3225
      %v3505 = vpop.f32.mrf.mxu0
      %v3506 = vadd.f32 0.0, %v3505
      %v3507 = vpop.f32.mrf.mxu0
      %v3508 = vpop.f32.mrf.mxu0
      %v3509 = vadd.f32 0.0, %v3508
      %v3510 = vpop.f32.mrf.mxu0
      %3511 = vmatprep.mubr.bf16.mxu0 %v3290
      %3512 = vmatmul.mubr.bf16.gmra.mxu0 %v3226
      %v3513 = vpop.f32.mrf.mxu0
      %v3514 = vadd.f32 0.0, %v3513
      %v3515 = vpop.f32.mrf.mxu0
      %v3516 = vpop.f32.mrf.mxu0
      %v3517 = vadd.f32 0.0, %v3516
      %v3518 = vpop.f32.mrf.mxu0
      %3519 = vmatprep.mubr.bf16.mxu0 %v3291
      %3520 = vmatmul.mubr.bf16.gmra.mxu0 %v3227
      %v3521 = vpop.f32.mrf.mxu0
      %v3522 = vadd.f32 0.0, %v3521
      %v3523 = vpop.f32.mrf.mxu0
      %v3524 = vpop.f32.mrf.mxu0
      %v3525 = vadd.f32 0.0, %v3524
      %v3526 = vpop.f32.mrf.mxu0
      %3527 = vmatprep.mubr.bf16.mxu0 %v3292
      %3528 = vmatmul.mubr.bf16.gmra.mxu0 %v3228
      %v3529 = vpop.f32.mrf.mxu0
      %v3530 = vadd.f32 0.0, %v3529
      %v3531 = vpop.f32.mrf.mxu0
      %v3532 = vpop.f32.mrf.mxu0
      %v3533 = vadd.f32 0.0, %v3532
      %v3534 = vpop.f32.mrf.mxu0
      %3535 = vmatprep.mubr.bf16.mxu0 %v3293
      %3536 = vmatmul.mubr.bf16.gmra.mxu0 %v3229
      %v3537 = vpop.f32.mrf.mxu0
      %v3538 = vadd.f32 0.0, %v3537
      %v3539 = vpop.f32.mrf.mxu0
      %v3540 = vpop.f32.mrf.mxu0
      %v3541 = vadd.f32 0.0, %v3540
      %v3542 = vpop.f32.mrf.mxu0
      %3543 = vmatprep.mubr.bf16.mxu0 %v3294
      %3544 = vmatmul.mubr.bf16.gmra.mxu0 %v3230
      %v3545 = vpop.f32.mrf.mxu0
      %v3546 = vadd.f32 0.0, %v3545
      %v3547 = vpop.f32.mrf.mxu0
      %v3548 = vpop.f32.mrf.mxu0
      %v3549 = vadd.f32 0.0, %v3548
      %v3550 = vpop.f32.mrf.mxu0
      %3551 = vmatprep.mubr.bf16.mxu0 %v3295
      %3552 = vmatmul.mubr.bf16.gmra.mxu0 %v3231
      %v3553 = vpop.f32.mrf.mxu0
      %v3554 = vadd.f32 0.0, %v3553
      %v3555 = vpop.f32.mrf.mxu0
      %v3556 = vpop.f32.mrf.mxu0
      %v3557 = vadd.f32 0.0, %v3556
      %v3558 = vpop.f32.mrf.mxu0
      %3559 = vmatprep.mubr.bf16.mxu0 %v3296
      %3560 = vmatmul.mubr.bf16.gmra.mxu0 %v3232
      %v3561 = vpop.f32.mrf.mxu0
      %v3562 = vadd.f32 0.0, %v3561
      %v3563 = vpop.f32.mrf.mxu0
      %v3564 = vpop.f32.mrf.mxu0
      %v3565 = vadd.f32 0.0, %v3564
      %v3566 = vpop.f32.mrf.mxu0
      %3567 = vmatprep.mubr.bf16.mxu0 %v3297
      %3568 = vmatmul.mubr.bf16.gmra.mxu0 %v3233
      %v3569 = vpop.f32.mrf.mxu0
      %v3570 = vadd.f32 0.0, %v3569
      %v3571 = vpop.f32.mrf.mxu0
      %v3572 = vpop.f32.mrf.mxu0
      %v3573 = vadd.f32 0.0, %v3572
      %v3574 = vpop.f32.mrf.mxu0
      %3575 = vmatprep.mubr.bf16.mxu0 %v3298
      %3576 = vmatmul.mubr.bf16.gmra.mxu0 %v3234
      %v3577 = vpop.f32.mrf.mxu0
      %v3578 = vadd.f32 0.0, %v3577
      %v3579 = vpop.f32.mrf.mxu0
      %v3580 = vpop.f32.mrf.mxu0
      %v3581 = vadd.f32 0.0, %v3580
      %v3582 = vpop.f32.mrf.mxu0
      %3583 = vmatprep.mubr.bf16.mxu0 %v3299
      %3584 = vmatmul.mubr.bf16.gmra.mxu0 %v3235
      %v3585 = vpop.f32.mrf.mxu0
      %v3586 = vadd.f32 0.0, %v3585
      %v3587 = vpop.f32.mrf.mxu0
      %v3588 = vpop.f32.mrf.mxu0
      %v3589 = vadd.f32 0.0, %v3588
      %v3590 = vpop.f32.mrf.mxu0
      %3591 = vmatprep.mubr.bf16.mxu0 %v3300
      %3592 = vmatmul.mubr.bf16.gmra.mxu0 %v3236
      %v3593 = vpop.f32.mrf.mxu0
      %v3594 = vadd.f32 0.0, %v3593
      %v3595 = vpop.f32.mrf.mxu0
      %v3596 = vpop.f32.mrf.mxu0
      %v3597 = vadd.f32 0.0, %v3596
      %v3598 = vpop.f32.mrf.mxu0
      %3599 = vmatprep.mubr.bf16.mxu0 %v3301
      %3600 = vmatmul.mubr.bf16.gmra.mxu0 %v3237
      %v3601 = vpop.f32.mrf.mxu0
      %v3602 = vadd.f32 0.0, %v3601
      %v3603 = vpop.f32.mrf.mxu0
      %v3604 = vpop.f32.mrf.mxu0
      %v3605 = vadd.f32 0.0, %v3604
      %v3606 = vpop.f32.mrf.mxu0
      %3607 = vdwg.mxu0
      %v3608 = vadd.f32 %v2600, %v3482
      %v3609 = vadd.f32 %v2603, %v3485
      %v3610 = vadd.f32 %v2608, %v3490
      %v3611 = vadd.f32 %v2611, %v3493
      %v3612 = vadd.f32 %v2616, %v3498
      %v3613 = vadd.f32 %v2619, %v3501
      %v3614 = vadd.f32 %v2624, %v3506
      %v3615 = vadd.f32 %v2627, %v3509
      %v3616 = vadd.f32 %v2632, %v3514
      %v3617 = vadd.f32 %v2635, %v3517
      %v3618 = vadd.f32 %v2640, %v3522
      %v3619 = vadd.f32 %v2643, %v3525
      %v3620 = vadd.f32 %v2648, %v3530
      %v3621 = vadd.f32 %v2651, %v3533
      %v3622 = vadd.f32 %v2656, %v3538
      %v3623 = vadd.f32 %v2659, %v3541
      %v3624 = vadd.f32 %v2664, %v3546
      %v3625 = vadd.f32 %v2667, %v3549
      %v3626 = vadd.f32 %v2672, %v3554
      %v3627 = vadd.f32 %v2675, %v3557
      %v3628 = vadd.f32 %v2680, %v3562
      %v3629 = vadd.f32 %v2683, %v3565
      %v3630 = vadd.f32 %v2688, %v3570
      %v3631 = vadd.f32 %v2691, %v3573
      %v3632 = vadd.f32 %v2696, %v3578
      %v3633 = vadd.f32 %v2699, %v3581
      %v3634 = vadd.f32 %v2704, %v3586
      %v3635 = vadd.f32 %v2707, %v3589
      %v3636 = vadd.f32 %v2712, %v3594
      %v3637 = vadd.f32 %v2715, %v3597
      %v3638 = vadd.f32 %v2720, %v3602
      %v3639 = vadd.f32 %v2723, %v3605
      %s3640 = scalar_lea.vmem [#allocation2], 32
      %v3641 = vld [vmem:[%s3640] sm:$0x8]
      %v3642 = vld [vmem:[%s3640 + $0x4] sm:$0xf]
      %v3643 = vld [vmem:[%s3640 + $0x8] sm:$0xf]
      %v3644 = vld [vmem:[%s3640 + $0x10] sm:$0x8]
      %v3645 = vld [vmem:[%s3640 + $0x14] sm:$0xf]
      %v3646 = vld [vmem:[%s3640 + $0x18] sm:$0xf]
      %v3647 = vld [vmem:[%s3640 + $0x20] sm:$0x8]
      %v3648 = vld [vmem:[%s3640 + $0x24] sm:$0xf]
      %v3649 = vld [vmem:[%s3640 + $0x28] sm:$0xf]
      %v3650 = vld [vmem:[%s3640 + $0x30] sm:$0x8]
      %v3651 = vld [vmem:[%s3640 + $0x34] sm:$0xf]
      %v3652 = vld [vmem:[%s3640 + $0x38] sm:$0xf]
      %v3653 = vld [vmem:[%s3640 + $0x40] sm:$0x8]
      %v3654 = vld [vmem:[%s3640 + $0x44] sm:$0xf]
      %v3655 = vld [vmem:[%s3640 + $0x48] sm:$0xf]
      %v3656 = vld [vmem:[%s3640 + $0x50] sm:$0x8]
      %v3657 = vld [vmem:[%s3640 + $0x54] sm:$0xf]
      %v3658 = vld [vmem:[%s3640 + $0x58] sm:$0xf]
      %v3659 = vld [vmem:[%s3640 + $0x60] sm:$0x8]
      %v3660 = vld [vmem:[%s3640 + $0x64] sm:$0xf]
      %v3661 = vld [vmem:[%s3640 + $0x68] sm:$0xf]
      %v3662 = vld [vmem:[%s3640 + $0x70] sm:$0x8]
      %v3663 = vld [vmem:[%s3640 + $0x74] sm:$0xf]
      %v3664 = vld [vmem:[%s3640 + $0x78] sm:$0xf]
      %v3665 = vld [vmem:[%s3640 + $0x80] sm:$0x8]
      %v3666 = vld [vmem:[%s3640 + $0x84] sm:$0xf]
      %v3667 = vld [vmem:[%s3640 + $0x88] sm:$0xf]
      %v3668 = vld [vmem:[%s3640 + $0x90] sm:$0x8]
      %v3669 = vld [vmem:[%s3640 + $0x94] sm:$0xf]
      %v3670 = vld [vmem:[%s3640 + $0x98] sm:$0xf]
      %v3671 = vld [vmem:[%s3640 + $0xa0] sm:$0x8]
      %v3672 = vld [vmem:[%s3640 + $0xa4] sm:$0xf]
      %v3673 = vld [vmem:[%s3640 + $0xa8] sm:$0xf]
      %v3674 = vld [vmem:[%s3640 + $0xb0] sm:$0x8]
      %v3675 = vld [vmem:[%s3640 + $0xb4] sm:$0xf]
      %v3676 = vld [vmem:[%s3640 + $0xb8] sm:$0xf]
      %v3677 = vld [vmem:[%s3640 + $0xc0] sm:$0x8]
      %v3678 = vld [vmem:[%s3640 + $0xc4] sm:$0xf]
      %v3679 = vld [vmem:[%s3640 + $0xc8] sm:$0xf]
      %v3680 = vld [vmem:[%s3640 + $0xd0] sm:$0x8]
      %v3681 = vld [vmem:[%s3640 + $0xd4] sm:$0xf]
      %v3682 = vld [vmem:[%s3640 + $0xd8] sm:$0xf]
      %v3683 = vld [vmem:[%s3640 + $0xe0] sm:$0x8]
      %v3684 = vld [vmem:[%s3640 + $0xe4] sm:$0xf]
      %v3685 = vld [vmem:[%s3640 + $0xe8] sm:$0xf]
      %v3686 = vld [vmem:[%s3640 + $0xf0] sm:$0x8]
      %v3687 = vld [vmem:[%s3640 + $0xf4] sm:$0xf]
      %v3688 = vld [vmem:[%s3640 + $0xf8] sm:$0xf]
      %v3690 = vshrl.u32 %v3641, 16
      %v3692 = vrot.slane %v3690, 7
      %v3693 = vrot.slane %v3692, 4
      %v3695 = vshrl.u32 %v3642, 16
      %v3697 = vrot.slane %v3695, 7
      %v3698 = vshll.u32 %v3642, 16
      %v3700 = vor.u32 %v3697, %v3698
      %v3701 = vsel %vm863, %v3693, %v3700
      %v3702 = vrot.slane %v3697, 4
      %v3704 = vshrl.u32 %v3643, 16
      %v3706 = vrot.slane %v3704, 7
      %v3707 = vshll.u32 %v3643, 16
      %v3709 = vor.u32 %v3706, %v3707
      %v3710 = vsel %vm863, %v3702, %v3709
      %v3712 = vshrl.u32 %v3644, 16
      %v3714 = vrot.slane %v3712, 7
      %v3715 = vrot.slane %v3714, 4
      %v3717 = vshrl.u32 %v3645, 16
      %v3719 = vrot.slane %v3717, 7
      %v3720 = vshll.u32 %v3645, 16
      %v3722 = vor.u32 %v3719, %v3720
      %v3723 = vsel %vm863, %v3715, %v3722
      %v3724 = vrot.slane %v3719, 4
      %v3726 = vshrl.u32 %v3646, 16
      %v3728 = vrot.slane %v3726, 7
      %v3729 = vshll.u32 %v3646, 16
      %v3731 = vor.u32 %v3728, %v3729
      %v3732 = vsel %vm863, %v3724, %v3731
      %v3734 = vshrl.u32 %v3647, 16
      %v3736 = vrot.slane %v3734, 7
      %v3737 = vrot.slane %v3736, 4
      %v3739 = vshrl.u32 %v3648, 16
      %v3741 = vrot.slane %v3739, 7
      %v3742 = vshll.u32 %v3648, 16
      %v3744 = vor.u32 %v3741, %v3742
      %v3745 = vsel %vm863, %v3737, %v3744
      %v3746 = vrot.slane %v3741, 4
      %v3748 = vshrl.u32 %v3649, 16
      %v3750 = vrot.slane %v3748, 7
      %v3751 = vshll.u32 %v3649, 16
      %v3753 = vor.u32 %v3750, %v3751
      %v3754 = vsel %vm863, %v3746, %v3753
      %v3756 = vshrl.u32 %v3650, 16
      %v3758 = vrot.slane %v3756, 7
      %v3759 = vrot.slane %v3758, 4
      %v3761 = vshrl.u32 %v3651, 16
      %v3763 = vrot.slane %v3761, 7
      %v3764 = vshll.u32 %v3651, 16
      %v3766 = vor.u32 %v3763, %v3764
      %v3767 = vsel %vm863, %v3759, %v3766
      %v3768 = vrot.slane %v3763, 4
      %v3770 = vshrl.u32 %v3652, 16
      %v3772 = vrot.slane %v3770, 7
      %v3773 = vshll.u32 %v3652, 16
      %v3775 = vor.u32 %v3772, %v3773
      %v3776 = vsel %vm863, %v3768, %v3775
      %v3778 = vshrl.u32 %v3653, 16
      %v3780 = vrot.slane %v3778, 7
      %v3781 = vrot.slane %v3780, 4
      %v3783 = vshrl.u32 %v3654, 16
      %v3785 = vrot.slane %v3783, 7
      %v3786 = vshll.u32 %v3654, 16
      %v3788 = vor.u32 %v3785, %v3786
      %v3789 = vsel %vm863, %v3781, %v3788
      %v3790 = vrot.slane %v3785, 4
      %v3792 = vshrl.u32 %v3655, 16
      %v3794 = vrot.slane %v3792, 7
      %v3795 = vshll.u32 %v3655, 16
      %v3797 = vor.u32 %v3794, %v3795
      %v3798 = vsel %vm863, %v3790, %v3797
      %v3800 = vshrl.u32 %v3656, 16
      %v3802 = vrot.slane %v3800, 7
      %v3803 = vrot.slane %v3802, 4
      %v3805 = vshrl.u32 %v3657, 16
      %v3807 = vrot.slane %v3805, 7
      %v3808 = vshll.u32 %v3657, 16
      %v3810 = vor.u32 %v3807, %v3808
      %v3811 = vsel %vm863, %v3803, %v3810
      %v3812 = vrot.slane %v3807, 4
      %v3814 = vshrl.u32 %v3658, 16
      %v3816 = vrot.slane %v3814, 7
      %v3817 = vshll.u32 %v3658, 16
      %v3819 = vor.u32 %v3816, %v3817
      %v3820 = vsel %vm863, %v3812, %v3819
      %v3822 = vshrl.u32 %v3659, 16
      %v3824 = vrot.slane %v3822, 7
      %v3825 = vrot.slane %v3824, 4
      %v3827 = vshrl.u32 %v3660, 16
      %v3829 = vrot.slane %v3827, 7
      %v3830 = vshll.u32 %v3660, 16
      %v3832 = vor.u32 %v3829, %v3830
      %v3833 = vsel %vm863, %v3825, %v3832
      %v3834 = vrot.slane %v3829, 4
      %v3836 = vshrl.u32 %v3661, 16
      %v3838 = vrot.slane %v3836, 7
      %v3839 = vshll.u32 %v3661, 16
      %v3841 = vor.u32 %v3838, %v3839
      %v3842 = vsel %vm863, %v3834, %v3841
      %v3844 = vshrl.u32 %v3662, 16
      %v3846 = vrot.slane %v3844, 7
      %v3847 = vrot.slane %v3846, 4
      %v3849 = vshrl.u32 %v3663, 16
      %v3851 = vrot.slane %v3849, 7
      %v3852 = vshll.u32 %v3663, 16
      %v3854 = vor.u32 %v3851, %v3852
      %v3855 = vsel %vm863, %v3847, %v3854
      %v3856 = vrot.slane %v3851, 4
      %v3858 = vshrl.u32 %v3664, 16
      %v3860 = vrot.slane %v3858, 7
      %v3861 = vshll.u32 %v3664, 16
      %v3863 = vor.u32 %v3860, %v3861
      %v3864 = vsel %vm863, %v3856, %v3863
      %v3866 = vshrl.u32 %v3665, 16
      %v3868 = vrot.slane %v3866, 7
      %v3869 = vrot.slane %v3868, 4
      %v3871 = vshrl.u32 %v3666, 16
      %v3873 = vrot.slane %v3871, 7
      %v3874 = vshll.u32 %v3666, 16
      %v3876 = vor.u32 %v3873, %v3874
      %v3877 = vsel %vm863, %v3869, %v3876
      %v3878 = vrot.slane %v3873, 4
      %v3880 = vshrl.u32 %v3667, 16
      %v3882 = vrot.slane %v3880, 7
      %v3883 = vshll.u32 %v3667, 16
      %v3885 = vor.u32 %v3882, %v3883
      %v3886 = vsel %vm863, %v3878, %v3885
      %v3888 = vshrl.u32 %v3668, 16
      %v3890 = vrot.slane %v3888, 7
      %v3891 = vrot.slane %v3890, 4
      %v3893 = vshrl.u32 %v3669, 16
      %v3895 = vrot.slane %v3893, 7
      %v3896 = vshll.u32 %v3669, 16
      %v3898 = vor.u32 %v3895, %v3896
      %v3899 = vsel %vm863, %v3891, %v3898
      %v3900 = vrot.slane %v3895, 4
      %v3902 = vshrl.u32 %v3670, 16
      %v3904 = vrot.slane %v3902, 7
      %v3905 = vshll.u32 %v3670, 16
      %v3907 = vor.u32 %v3904, %v3905
      %v3908 = vsel %vm863, %v3900, %v3907
      %v3910 = vshrl.u32 %v3671, 16
      %v3912 = vrot.slane %v3910, 7
      %v3913 = vrot.slane %v3912, 4
      %v3915 = vshrl.u32 %v3672, 16
      %v3917 = vrot.slane %v3915, 7
      %v3918 = vshll.u32 %v3672, 16
      %v3920 = vor.u32 %v3917, %v3918
      %v3921 = vsel %vm863, %v3913, %v3920
      %v3922 = vrot.slane %v3917, 4
      %v3924 = vshrl.u32 %v3673, 16
      %v3926 = vrot.slane %v3924, 7
      %v3927 = vshll.u32 %v3673, 16
      %v3929 = vor.u32 %v3926, %v3927
      %v3930 = vsel %vm863, %v3922, %v3929
      %v3932 = vshrl.u32 %v3674, 16
      %v3934 = vrot.slane %v3932, 7
      %v3935 = vrot.slane %v3934, 4
      %v3937 = vshrl.u32 %v3675, 16
      %v3939 = vrot.slane %v3937, 7
      %v3940 = vshll.u32 %v3675, 16
      %v3942 = vor.u32 %v3939, %v3940
      %v3943 = vsel %vm863, %v3935, %v3942
      %v3944 = vrot.slane %v3939, 4
      %v3946 = vshrl.u32 %v3676, 16
      %v3948 = vrot.slane %v3946, 7
      %v3949 = vshll.u32 %v3676, 16
      %v3951 = vor.u32 %v3948, %v3949
      %v3952 = vsel %vm863, %v3944, %v3951
      %v3954 = vshrl.u32 %v3677, 16
      %v3956 = vrot.slane %v3954, 7
      %v3957 = vrot.slane %v3956, 4
      %v3959 = vshrl.u32 %v3678, 16
      %v3961 = vrot.slane %v3959, 7
      %v3962 = vshll.u32 %v3678, 16
      %v3964 = vor.u32 %v3961, %v3962
      %v3965 = vsel %vm863, %v3957, %v3964
      %v3966 = vrot.slane %v3961, 4
      %v3968 = vshrl.u32 %v3679, 16
      %v3970 = vrot.slane %v3968, 7
      %v3971 = vshll.u32 %v3679, 16
      %v3973 = vor.u32 %v3970, %v3971
      %v3974 = vsel %vm863, %v3966, %v3973
      %v3976 = vshrl.u32 %v3680, 16
      %v3978 = vrot.slane %v3976, 7
      %v3979 = vrot.slane %v3978, 4
      %v3981 = vshrl.u32 %v3681, 16
      %v3983 = vrot.slane %v3981, 7
      %v3984 = vshll.u32 %v3681, 16
      %v3986 = vor.u32 %v3983, %v3984
      %v3987 = vsel %vm863, %v3979, %v3986
      %v3988 = vrot.slane %v3983, 4
      %v3990 = vshrl.u32 %v3682, 16
      %v3992 = vrot.slane %v3990, 7
      %v3993 = vshll.u32 %v3682, 16
      %v3995 = vor.u32 %v3992, %v3993
      %v3996 = vsel %vm863, %v3988, %v3995
      %v3998 = vshrl.u32 %v3683, 16
      %v4000 = vrot.slane %v3998, 7
      %v4001 = vrot.slane %v4000, 4
      %v4003 = vshrl.u32 %v3684, 16
      %v4005 = vrot.slane %v4003, 7
      %v4006 = vshll.u32 %v3684, 16
      %v4008 = vor.u32 %v4005, %v4006
      %v4009 = vsel %vm863, %v4001, %v4008
      %v4010 = vrot.slane %v4005, 4
      %v4012 = vshrl.u32 %v3685, 16
      %v4014 = vrot.slane %v4012, 7
      %v4015 = vshll.u32 %v3685, 16
      %v4017 = vor.u32 %v4014, %v4015
      %v4018 = vsel %vm863, %v4010, %v4017
      %v4020 = vshrl.u32 %v3686, 16
      %v4022 = vrot.slane %v4020, 7
      %v4023 = vrot.slane %v4022, 4
      %v4025 = vshrl.u32 %v3687, 16
      %v4027 = vrot.slane %v4025, 7
      %v4028 = vshll.u32 %v3687, 16
      %v4030 = vor.u32 %v4027, %v4028
      %v4031 = vsel %vm863, %v4023, %v4030
      %v4032 = vrot.slane %v4027, 4
      %v4034 = vshrl.u32 %v3688, 16
      %v4036 = vrot.slane %v4034, 7
      %v4037 = vshll.u32 %v3688, 16
      %v4039 = vor.u32 %v4036, %v4037
      %v4040 = vsel %vm863, %v4032, %v4039
      %v4041 = vunpack.c.l.b16 %v3701
      %v4042 = vunpack.c.l.b16 %v3710
      %v4043 = vunpack.c.l.b16 %v3723
      %v4044 = vunpack.c.l.b16 %v3732
      %v4045 = vunpack.c.l.b16 %v3745
      %v4046 = vunpack.c.l.b16 %v3754
      %v4047 = vunpack.c.l.b16 %v3767
      %v4048 = vunpack.c.l.b16 %v3776
      %v4049 = vunpack.c.l.b16 %v3789
      %v4050 = vunpack.c.l.b16 %v3798
      %v4051 = vunpack.c.l.b16 %v3811
      %v4052 = vunpack.c.l.b16 %v3820
      %v4053 = vunpack.c.l.b16 %v3833
      %v4054 = vunpack.c.l.b16 %v3842
      %v4055 = vunpack.c.l.b16 %v3855
      %v4056 = vunpack.c.l.b16 %v3864
      %v4057 = vunpack.c.l.b16 %v3877
      %v4058 = vunpack.c.l.b16 %v3886
      %v4059 = vunpack.c.l.b16 %v3899
      %v4060 = vunpack.c.l.b16 %v3908
      %v4061 = vunpack.c.l.b16 %v3921
      %v4062 = vunpack.c.l.b16 %v3930
      %v4063 = vunpack.c.l.b16 %v3943
      %v4064 = vunpack.c.l.b16 %v3952
      %v4065 = vunpack.c.l.b16 %v3965
      %v4066 = vunpack.c.l.b16 %v3974
      %v4067 = vunpack.c.l.b16 %v3987
      %v4068 = vunpack.c.l.b16 %v3996
      %v4069 = vunpack.c.l.b16 %v4009
      %v4070 = vunpack.c.l.b16 %v4018
      %v4071 = vunpack.c.l.b16 %v4031
      %v4072 = vunpack.c.l.b16 %v4040
      %v4073 = vpack.c.b16 %v4042, %v4041
      %v4074 = vpack.c.b16 %v4044, %v4043
      %v4075 = vpack.c.b16 %v4046, %v4045
      %v4076 = vpack.c.b16 %v4048, %v4047
      %v4077 = vpack.c.b16 %v4050, %v4049
      %v4078 = vpack.c.b16 %v4052, %v4051
      %v4079 = vpack.c.b16 %v4054, %v4053
      %v4080 = vpack.c.b16 %v4056, %v4055
      %v4081 = vpack.c.b16 %v4058, %v4057
      %v4082 = vpack.c.b16 %v4060, %v4059
      %v4083 = vpack.c.b16 %v4062, %v4061
      %v4084 = vpack.c.b16 %v4064, %v4063
      %v4085 = vpack.c.b16 %v4066, %v4065
      %v4086 = vpack.c.b16 %v4068, %v4067
      %v4087 = vpack.c.b16 %v4070, %v4069
      %v4088 = vpack.c.b16 %v4072, %v4071
      %v4137 = vunpack.c.l.b16 %v3642
      %v4138 = vunpack.c.l.b16 %v3643
      %v4139 = vunpack.c.l.b16 %v3645
      %v4140 = vunpack.c.l.b16 %v3646
      %v4141 = vunpack.c.l.b16 %v3648
      %v4142 = vunpack.c.l.b16 %v3649
      %v4143 = vunpack.c.l.b16 %v3651
      %v4144 = vunpack.c.l.b16 %v3652
      %v4145 = vunpack.c.l.b16 %v3654
      %v4146 = vunpack.c.l.b16 %v3655
      %v4147 = vunpack.c.l.b16 %v3657
      %v4148 = vunpack.c.l.b16 %v3658
      %v4149 = vunpack.c.l.b16 %v3660
      %v4150 = vunpack.c.l.b16 %v3661
      %v4151 = vunpack.c.l.b16 %v3663
      %v4152 = vunpack.c.l.b16 %v3664
      %v4153 = vunpack.c.l.b16 %v3666
      %v4154 = vunpack.c.l.b16 %v3667
      %v4155 = vunpack.c.l.b16 %v3669
      %v4156 = vunpack.c.l.b16 %v3670
      %v4157 = vunpack.c.l.b16 %v3672
      %v4158 = vunpack.c.l.b16 %v3673
      %v4159 = vunpack.c.l.b16 %v3675
      %v4160 = vunpack.c.l.b16 %v3676
      %v4161 = vunpack.c.l.b16 %v3678
      %v4162 = vunpack.c.l.b16 %v3679
      %v4163 = vunpack.c.l.b16 %v3681
      %v4164 = vunpack.c.l.b16 %v3682
      %v4165 = vunpack.c.l.b16 %v3684
      %v4166 = vunpack.c.l.b16 %v3685
      %v4167 = vunpack.c.l.b16 %v3687
      %v4168 = vunpack.c.l.b16 %v3688
      %v4169 = vpack.c.b16 %v4138, %v4137
      %v4170 = vpack.c.b16 %v4140, %v4139
      %v4171 = vpack.c.b16 %v4142, %v4141
      %v4172 = vpack.c.b16 %v4144, %v4143
      %v4173 = vpack.c.b16 %v4146, %v4145
      %v4174 = vpack.c.b16 %v4148, %v4147
      %v4175 = vpack.c.b16 %v4150, %v4149
      %v4176 = vpack.c.b16 %v4152, %v4151
      %v4177 = vpack.c.b16 %v4154, %v4153
      %v4178 = vpack.c.b16 %v4156, %v4155
      %v4179 = vpack.c.b16 %v4158, %v4157
      %v4180 = vpack.c.b16 %v4160, %v4159
      %v4181 = vpack.c.b16 %v4162, %v4161
      %v4182 = vpack.c.b16 %v4164, %v4163
      %v4183 = vpack.c.b16 %v4166, %v4165
      %v4184 = vpack.c.b16 %v4168, %v4167
      %s4201 = scalar_lea.vmem %s3, 384
      %v4202 = vld [vmem:[%s4201] sm:$0xf]
      %v4203 = vld [vmem:[%s4201 + $0x4] sm:$0xf]
      %v4204 = vld [vmem:[%s4201 + $0x8] sm:$0xf]
      %v4205 = vld [vmem:[%s4201 + $0xc] sm:$0xf]
      %v4206 = vld [vmem:[%s4201 + $0x10] sm:$0xf]
      %v4207 = vld [vmem:[%s4201 + $0x14] sm:$0xf]
      %v4208 = vld [vmem:[%s4201 + $0x18] sm:$0xf]
      %v4209 = vld [vmem:[%s4201 + $0x1c] sm:$0xf]
      %v4210 = vld [vmem:[%s4201 + $0x20] sm:$0xf]
      %v4211 = vld [vmem:[%s4201 + $0x24] sm:$0xf]
      %v4212 = vld [vmem:[%s4201 + $0x28] sm:$0xf]
      %v4213 = vld [vmem:[%s4201 + $0x2c] sm:$0xf]
      %v4214 = vld [vmem:[%s4201 + $0x30] sm:$0xf]
      %v4215 = vld [vmem:[%s4201 + $0x34] sm:$0xf]
      %v4216 = vld [vmem:[%s4201 + $0x38] sm:$0xf]
      %v4217 = vld [vmem:[%s4201 + $0x3c] sm:$0xf]
      %v4218 = vld [vmem:[%s4201 + $0x40] sm:$0xf]
      %v4219 = vld [vmem:[%s4201 + $0x44] sm:$0xf]
      %v4220 = vld [vmem:[%s4201 + $0x48] sm:$0xf]
      %v4221 = vld [vmem:[%s4201 + $0x4c] sm:$0xf]
      %v4222 = vld [vmem:[%s4201 + $0x50] sm:$0xf]
      %v4223 = vld [vmem:[%s4201 + $0x54] sm:$0xf]
      %v4224 = vld [vmem:[%s4201 + $0x58] sm:$0xf]
      %v4225 = vld [vmem:[%s4201 + $0x5c] sm:$0xf]
      %v4226 = vld [vmem:[%s4201 + $0x60] sm:$0xf]
      %v4227 = vld [vmem:[%s4201 + $0x64] sm:$0xf]
      %v4228 = vld [vmem:[%s4201 + $0x68] sm:$0xf]
      %v4229 = vld [vmem:[%s4201 + $0x6c] sm:$0xf]
      %v4230 = vld [vmem:[%s4201 + $0x70] sm:$0xf]
      %v4231 = vld [vmem:[%s4201 + $0x74] sm:$0xf]
      %v4232 = vld [vmem:[%s4201 + $0x78] sm:$0xf]
      %v4233 = vld [vmem:[%s4201 + $0x7c] sm:$0xf]
      %v4266 = vunpack.c.l.b16 %v4202
      %v4267 = vunpack.c.l.b16 %v4203
      %v4268 = vunpack.c.l.b16 %v4204
      %v4269 = vunpack.c.l.b16 %v4205
      %v4270 = vunpack.c.l.b16 %v4206
      %v4271 = vunpack.c.l.b16 %v4207
      %v4272 = vunpack.c.l.b16 %v4208
      %v4273 = vunpack.c.l.b16 %v4209
      %v4274 = vunpack.c.l.b16 %v4210
      %v4275 = vunpack.c.l.b16 %v4211
      %v4276 = vunpack.c.l.b16 %v4212
      %v4277 = vunpack.c.l.b16 %v4213
      %v4278 = vunpack.c.l.b16 %v4214
      %v4279 = vunpack.c.l.b16 %v4215
      %v4280 = vunpack.c.l.b16 %v4216
      %v4281 = vunpack.c.l.b16 %v4217
      %v4282 = vunpack.c.l.b16 %v4218
      %v4283 = vunpack.c.l.b16 %v4219
      %v4284 = vunpack.c.l.b16 %v4220
      %v4285 = vunpack.c.l.b16 %v4221
      %v4286 = vunpack.c.l.b16 %v4222
      %v4287 = vunpack.c.l.b16 %v4223
      %v4288 = vunpack.c.l.b16 %v4224
      %v4289 = vunpack.c.l.b16 %v4225
      %v4290 = vunpack.c.l.b16 %v4226
      %v4291 = vunpack.c.l.b16 %v4227
      %v4292 = vunpack.c.l.b16 %v4228
      %v4293 = vunpack.c.l.b16 %v4229
      %v4294 = vunpack.c.l.b16 %v4230
      %v4295 = vunpack.c.l.b16 %v4231
      %v4296 = vunpack.c.l.b16 %v4232
      %v4297 = vunpack.c.l.b16 %v4233
      %v4298 = vpack.c.b16 %v4267, %v4266
      %v4299 = vpack.c.b16 %v4269, %v4268
      %v4300 = vpack.c.b16 %v4271, %v4270
      %v4301 = vpack.c.b16 %v4273, %v4272
      %v4302 = vpack.c.b16 %v4275, %v4274
      %v4303 = vpack.c.b16 %v4277, %v4276
      %v4304 = vpack.c.b16 %v4279, %v4278
      %v4305 = vpack.c.b16 %v4281, %v4280
      %v4306 = vpack.c.b16 %v4283, %v4282
      %v4307 = vpack.c.b16 %v4285, %v4284
      %v4308 = vpack.c.b16 %v4287, %v4286
      %v4309 = vpack.c.b16 %v4289, %v4288
      %v4310 = vpack.c.b16 %v4291, %v4290
      %v4311 = vpack.c.b16 %v4293, %v4292
      %v4312 = vpack.c.b16 %v4295, %v4294
      %v4313 = vpack.c.b16 %v4297, %v4296
      %4330 = vmatprep.subr.bf16.mxu0 0
      %4331 = vmatpush1.bf16.msra.mxu0 %v4305
      %4332 = vmatprep.subr.bf16.mxu0 0
      %4333 = vmatpush1.bf16.msra.mxu0 %v4304
      %4334 = vmatprep.subr.bf16.mxu0 0
      %4335 = vmatpush1.bf16.msra.mxu0 %v4303
      %4336 = vmatprep.subr.bf16.mxu0 0
      %4337 = vmatpush1.bf16.msra.mxu0 %v4302
      %4338 = vmatprep.subr.bf16.mxu0 0
      %4339 = vmatpush1.bf16.msra.mxu0 %v4301
      %4340 = vmatprep.subr.bf16.mxu0 0
      %4341 = vmatpush1.bf16.msra.mxu0 %v4300
      %4342 = vmatprep.subr.bf16.mxu0 0
      %4343 = vmatpush1.bf16.msra.mxu0 %v4299
      %4344 = vmatprep.subr.bf16.mxu0 0
      %4345 = vmatpush1.bf16.msra.mxu0 %v4298
      %4346 = vmatprep.subr.bf16.mxu0 0
      %4347 = vmatpush2.bf16.msra.mxu0 %v4313
      %4348 = vmatprep.subr.bf16.mxu0 0
      %4349 = vmatpush2.bf16.msra.mxu0 %v4312
      %4350 = vmatprep.subr.bf16.mxu0 0
      %4351 = vmatpush2.bf16.msra.mxu0 %v4311
      %4352 = vmatprep.subr.bf16.mxu0 0
      %4353 = vmatpush2.bf16.msra.mxu0 %v4310
      %4354 = vmatprep.subr.bf16.mxu0 0
      %4355 = vmatpush2.bf16.msra.mxu0 %v4309
      %4356 = vmatprep.subr.bf16.mxu0 0
      %4357 = vmatpush2.bf16.msra.mxu0 %v4308
      %4358 = vmatprep.subr.bf16.mxu0 0
      %4359 = vmatpush2.bf16.msra.mxu0 %v4307
      %4360 = vmatprep.subr.bf16.mxu0 0
      %4361 = vmatpush2.bf16.msra.mxu0 %v4306
      %4362 = vmatprep.mubr.bf16.mxu0 %v4169
      %4363 = vmatmul.mubr.bf16.gmra.mxu0 %v4073
      %v4364 = vpop.f32.mrf.mxu0
      %v4365 = vadd.f32 0.0, %v4364
      %v4366 = vpop.f32.mrf.mxu0
      %v4367 = vpop.f32.mrf.mxu0
      %v4368 = vadd.f32 0.0, %v4367
      %v4369 = vpop.f32.mrf.mxu0
      %4370 = vmatprep.mubr.bf16.mxu0 %v4170
      %4371 = vmatmul.mubr.bf16.gmra.mxu0 %v4074
      %v4372 = vpop.f32.mrf.mxu0
      %v4373 = vadd.f32 0.0, %v4372
      %v4374 = vpop.f32.mrf.mxu0
      %v4375 = vpop.f32.mrf.mxu0
      %v4376 = vadd.f32 0.0, %v4375
      %v4377 = vpop.f32.mrf.mxu0
      %4378 = vmatprep.mubr.bf16.mxu0 %v4171
      %4379 = vmatmul.mubr.bf16.gmra.mxu0 %v4075
      %v4380 = vpop.f32.mrf.mxu0
      %v4381 = vadd.f32 0.0, %v4380
      %v4382 = vpop.f32.mrf.mxu0
      %v4383 = vpop.f32.mrf.mxu0
      %v4384 = vadd.f32 0.0, %v4383
      %v4385 = vpop.f32.mrf.mxu0
      %4386 = vmatprep.mubr.bf16.mxu0 %v4172
      %4387 = vmatmul.mubr.bf16.gmra.mxu0 %v4076
      %v4388 = vpop.f32.mrf.mxu0
      %v4389 = vadd.f32 0.0, %v4388
      %v4390 = vpop.f32.mrf.mxu0
      %v4391 = vpop.f32.mrf.mxu0
      %v4392 = vadd.f32 0.0, %v4391
      %v4393 = vpop.f32.mrf.mxu0
      %4394 = vmatprep.mubr.bf16.mxu0 %v4173
      %4395 = vmatmul.mubr.bf16.gmra.mxu0 %v4077
      %v4396 = vpop.f32.mrf.mxu0
      %v4397 = vadd.f32 0.0, %v4396
      %v4398 = vpop.f32.mrf.mxu0
      %v4399 = vpop.f32.mrf.mxu0
      %v4400 = vadd.f32 0.0, %v4399
      %v4401 = vpop.f32.mrf.mxu0
      %4402 = vmatprep.mubr.bf16.mxu0 %v4174
      %4403 = vmatmul.mubr.bf16.gmra.mxu0 %v4078
      %v4404 = vpop.f32.mrf.mxu0
      %v4405 = vadd.f32 0.0, %v4404
      %v4406 = vpop.f32.mrf.mxu0
      %v4407 = vpop.f32.mrf.mxu0
      %v4408 = vadd.f32 0.0, %v4407
      %v4409 = vpop.f32.mrf.mxu0
      %4410 = vmatprep.mubr.bf16.mxu0 %v4175
      %4411 = vmatmul.mubr.bf16.gmra.mxu0 %v4079
      %v4412 = vpop.f32.mrf.mxu0
      %v4413 = vadd.f32 0.0, %v4412
      %v4414 = vpop.f32.mrf.mxu0
      %v4415 = vpop.f32.mrf.mxu0
      %v4416 = vadd.f32 0.0, %v4415
      %v4417 = vpop.f32.mrf.mxu0
      %4418 = vmatprep.mubr.bf16.mxu0 %v4176
      %4419 = vmatmul.mubr.bf16.gmra.mxu0 %v4080
      %v4420 = vpop.f32.mrf.mxu0
      %v4421 = vadd.f32 0.0, %v4420
      %v4422 = vpop.f32.mrf.mxu0
      %v4423 = vpop.f32.mrf.mxu0
      %v4424 = vadd.f32 0.0, %v4423
      %v4425 = vpop.f32.mrf.mxu0
      %4426 = vmatprep.mubr.bf16.mxu0 %v4177
      %4427 = vmatmul.mubr.bf16.gmra.mxu0 %v4081
      %v4428 = vpop.f32.mrf.mxu0
      %v4429 = vadd.f32 0.0, %v4428
      %v4430 = vpop.f32.mrf.mxu0
      %v4431 = vpop.f32.mrf.mxu0
      %v4432 = vadd.f32 0.0, %v4431
      %v4433 = vpop.f32.mrf.mxu0
      %4434 = vmatprep.mubr.bf16.mxu0 %v4178
      %4435 = vmatmul.mubr.bf16.gmra.mxu0 %v4082
      %v4436 = vpop.f32.mrf.mxu0
      %v4437 = vadd.f32 0.0, %v4436
      %v4438 = vpop.f32.mrf.mxu0
      %v4439 = vpop.f32.mrf.mxu0
      %v4440 = vadd.f32 0.0, %v4439
      %v4441 = vpop.f32.mrf.mxu0
      %4442 = vmatprep.mubr.bf16.mxu0 %v4179
      %4443 = vmatmul.mubr.bf16.gmra.mxu0 %v4083
      %v4444 = vpop.f32.mrf.mxu0
      %v4445 = vadd.f32 0.0, %v4444
      %v4446 = vpop.f32.mrf.mxu0
      %v4447 = vpop.f32.mrf.mxu0
      %v4448 = vadd.f32 0.0, %v4447
      %v4449 = vpop.f32.mrf.mxu0
      %4450 = vmatprep.mubr.bf16.mxu0 %v4180
      %4451 = vmatmul.mubr.bf16.gmra.mxu0 %v4084
      %v4452 = vpop.f32.mrf.mxu0
      %v4453 = vadd.f32 0.0, %v4452
      %v4454 = vpop.f32.mrf.mxu0
      %v4455 = vpop.f32.mrf.mxu0
      %v4456 = vadd.f32 0.0, %v4455
      %v4457 = vpop.f32.mrf.mxu0
      %4458 = vmatprep.mubr.bf16.mxu0 %v4181
      %4459 = vmatmul.mubr.bf16.gmra.mxu0 %v4085
      %v4460 = vpop.f32.mrf.mxu0
      %v4461 = vadd.f32 0.0, %v4460
      %v4462 = vpop.f32.mrf.mxu0
      %v4463 = vpop.f32.mrf.mxu0
      %v4464 = vadd.f32 0.0, %v4463
      %v4465 = vpop.f32.mrf.mxu0
      %4466 = vmatprep.mubr.bf16.mxu0 %v4182
      %4467 = vmatmul.mubr.bf16.gmra.mxu0 %v4086
      %v4468 = vpop.f32.mrf.mxu0
      %v4469 = vadd.f32 0.0, %v4468
      %v4470 = vpop.f32.mrf.mxu0
      %v4471 = vpop.f32.mrf.mxu0
      %v4472 = vadd.f32 0.0, %v4471
      %v4473 = vpop.f32.mrf.mxu0
      %4474 = vmatprep.mubr.bf16.mxu0 %v4183
      %4475 = vmatmul.mubr.bf16.gmra.mxu0 %v4087
      %v4476 = vpop.f32.mrf.mxu0
      %v4477 = vadd.f32 0.0, %v4476
      %v4478 = vpop.f32.mrf.mxu0
      %v4479 = vpop.f32.mrf.mxu0
      %v4480 = vadd.f32 0.0, %v4479
      %v4481 = vpop.f32.mrf.mxu0
      %4482 = vmatprep.mubr.bf16.mxu0 %v4184
      %4483 = vmatmul.mubr.bf16.gmra.mxu0 %v4088
      %v4484 = vpop.f32.mrf.mxu0
      %v4485 = vadd.f32 0.0, %v4484
      %v4486 = vpop.f32.mrf.mxu0
      %v4487 = vpop.f32.mrf.mxu0
      %v4488 = vadd.f32 0.0, %v4487
      %v4489 = vpop.f32.mrf.mxu0
      %4490 = vdwg.mxu0
      %v4491 = vadd.f32 %v3608, %v4365
      %v4492 = vadd.f32 %v3609, %v4368
      %v4493 = vadd.f32 %v3610, %v4373
      %v4494 = vadd.f32 %v3611, %v4376
      %v4495 = vadd.f32 %v3612, %v4381
      %v4496 = vadd.f32 %v3613, %v4384
      %v4497 = vadd.f32 %v3614, %v4389
      %v4498 = vadd.f32 %v3615, %v4392
      %v4499 = vadd.f32 %v3616, %v4397
      %v4500 = vadd.f32 %v3617, %v4400
      %v4501 = vadd.f32 %v3618, %v4405
      %v4502 = vadd.f32 %v3619, %v4408
      %v4503 = vadd.f32 %v3620, %v4413
      %v4504 = vadd.f32 %v3621, %v4416
      %v4505 = vadd.f32 %v3622, %v4421
      %v4506 = vadd.f32 %v3623, %v4424
      %v4507 = vadd.f32 %v3624, %v4429
      %v4508 = vadd.f32 %v3625, %v4432
      %v4509 = vadd.f32 %v3626, %v4437
      %v4510 = vadd.f32 %v3627, %v4440
      %v4511 = vadd.f32 %v3628, %v4445
      %v4512 = vadd.f32 %v3629, %v4448
      %v4513 = vadd.f32 %v3630, %v4453
      %v4514 = vadd.f32 %v3631, %v4456
      %v4515 = vadd.f32 %v3632, %v4461
      %v4516 = vadd.f32 %v3633, %v4464
      %v4517 = vadd.f32 %v3634, %v4469
      %v4518 = vadd.f32 %v3635, %v4472
      %v4519 = vadd.f32 %v3636, %v4477
      %v4520 = vadd.f32 %v3637, %v4480
      %v4521 = vadd.f32 %v3638, %v4485
      %v4522 = vadd.f32 %v3639, %v4488
      %v4523 = vld [vmem:[%s3640 + $0x4] sm:$0xf]
      %v4524 = vld [vmem:[%s3640 + $0x8] sm:$0xf]
      %v4525 = vld [vmem:[%s3640 + $0xc] sm:$0x1]
      %v4526 = vld [vmem:[%s3640 + $0x14] sm:$0xf]
      %v4527 = vld [vmem:[%s3640 + $0x18] sm:$0xf]
      %v4528 = vld [vmem:[%s3640 + $0x1c] sm:$0x1]
      %v4529 = vld [vmem:[%s3640 + $0x24] sm:$0xf]
      %v4530 = vld [vmem:[%s3640 + $0x28] sm:$0xf]
      %v4531 = vld [vmem:[%s3640 + $0x2c] sm:$0x1]
      %v4532 = vld [vmem:[%s3640 + $0x34] sm:$0xf]
      %v4533 = vld [vmem:[%s3640 + $0x38] sm:$0xf]
      %v4534 = vld [vmem:[%s3640 + $0x3c] sm:$0x1]
      %v4535 = vld [vmem:[%s3640 + $0x44] sm:$0xf]
      %v4536 = vld [vmem:[%s3640 + $0x48] sm:$0xf]
      %v4537 = vld [vmem:[%s3640 + $0x4c] sm:$0x1]
      %v4538 = vld [vmem:[%s3640 + $0x54] sm:$0xf]
      %v4539 = vld [vmem:[%s3640 + $0x58] sm:$0xf]
      %v4540 = vld [vmem:[%s3640 + $0x5c] sm:$0x1]
      %v4541 = vld [vmem:[%s3640 + $0x64] sm:$0xf]
      %v4542 = vld [vmem:[%s3640 + $0x68] sm:$0xf]
      %v4543 = vld [vmem:[%s3640 + $0x6c] sm:$0x1]
      %v4544 = vld [vmem:[%s3640 + $0x74] sm:$0xf]
      %v4545 = vld [vmem:[%s3640 + $0x78] sm:$0xf]
      %v4546 = vld [vmem:[%s3640 + $0x7c] sm:$0x1]
      %v4547 = vld [vmem:[%s3640 + $0x84] sm:$0xf]
      %v4548 = vld [vmem:[%s3640 + $0x88] sm:$0xf]
      %v4549 = vld [vmem:[%s3640 + $0x8c] sm:$0x1]
      %v4550 = vld [vmem:[%s3640 + $0x94] sm:$0xf]
      %v4551 = vld [vmem:[%s3640 + $0x98] sm:$0xf]
      %v4552 = vld [vmem:[%s3640 + $0x9c] sm:$0x1]
      %v4553 = vld [vmem:[%s3640 + $0xa4] sm:$0xf]
      %v4554 = vld [vmem:[%s3640 + $0xa8] sm:$0xf]
      %v4555 = vld [vmem:[%s3640 + $0xac] sm:$0x1]
      %v4556 = vld [vmem:[%s3640 + $0xb4] sm:$0xf]
      %v4557 = vld [vmem:[%s3640 + $0xb8] sm:$0xf]
      %v4558 = vld [vmem:[%s3640 + $0xbc] sm:$0x1]
      %v4559 = vld [vmem:[%s3640 + $0xc4] sm:$0xf]
      %v4560 = vld [vmem:[%s3640 + $0xc8] sm:$0xf]
      %v4561 = vld [vmem:[%s3640 + $0xcc] sm:$0x1]
      %v4562 = vld [vmem:[%s3640 + $0xd4] sm:$0xf]
      %v4563 = vld [vmem:[%s3640 + $0xd8] sm:$0xf]
      %v4564 = vld [vmem:[%s3640 + $0xdc] sm:$0x1]
      %v4565 = vld [vmem:[%s3640 + $0xe4] sm:$0xf]
      %v4566 = vld [vmem:[%s3640 + $0xe8] sm:$0xf]
      %v4567 = vld [vmem:[%s3640 + $0xec] sm:$0x1]
      %v4568 = vld [vmem:[%s3640 + $0xf4] sm:$0xf]
      %v4569 = vld [vmem:[%s3640 + $0xf8] sm:$0xf]
      %v4570 = vld [vmem:[%s3640 + $0xfc] sm:$0x1]
      %v4572 = vshrl.u32 %v4523, 16
      %v4574 = vrot.slane %v4572, 4
      %v4575 = vshll.u32 %v4523, 16
      %v4577 = vrot.slane %v4575, 5
      %v4578 = vor.u32 %v4574, %v4577
      %v4579 = vrot.slane %v4578, 4
      %v4581 = vshll.u32 %v4524, 16
      %v4583 = vrot.slane %v4581, 5
      %v4584 = vsel %vm1426, %v4579, %v4583
      %v4585 = vshrl.u32 %v4524, 16
      %v4587 = vrot.slane %v4585, 4
      %v4588 = vor.u32 %v4587, %v4583
      %v4589 = vrot.slane %v4588, 4
      %v4591 = vshll.u32 %v4525, 16
      %v4593 = vrot.slane %v4591, 5
      %v4594 = vsel %vm1426, %v4589, %v4593
      %v4596 = vshrl.u32 %v4526, 16
      %v4598 = vrot.slane %v4596, 4
      %v4599 = vshll.u32 %v4526, 16
      %v4601 = vrot.slane %v4599, 5
      %v4602 = vor.u32 %v4598, %v4601
      %v4603 = vrot.slane %v4602, 4
      %v4605 = vshll.u32 %v4527, 16
      %v4607 = vrot.slane %v4605, 5
      %v4608 = vsel %vm1426, %v4603, %v4607
      %v4609 = vshrl.u32 %v4527, 16
      %v4611 = vrot.slane %v4609, 4
      %v4612 = vor.u32 %v4611, %v4607
      %v4613 = vrot.slane %v4612, 4
      %v4615 = vshll.u32 %v4528, 16
      %v4617 = vrot.slane %v4615, 5
      %v4618 = vsel %vm1426, %v4613, %v4617
      %v4620 = vshrl.u32 %v4529, 16
      %v4622 = vrot.slane %v4620, 4
      %v4623 = vshll.u32 %v4529, 16
      %v4625 = vrot.slane %v4623, 5
      %v4626 = vor.u32 %v4622, %v4625
      %v4627 = vrot.slane %v4626, 4
      %v4629 = vshll.u32 %v4530, 16
      %v4631 = vrot.slane %v4629, 5
      %v4632 = vsel %vm1426, %v4627, %v4631
      %v4633 = vshrl.u32 %v4530, 16
      %v4635 = vrot.slane %v4633, 4
      %v4636 = vor.u32 %v4635, %v4631
      %v4637 = vrot.slane %v4636, 4
      %v4639 = vshll.u32 %v4531, 16
      %v4641 = vrot.slane %v4639, 5
      %v4642 = vsel %vm1426, %v4637, %v4641
      %v4644 = vshrl.u32 %v4532, 16
      %v4646 = vrot.slane %v4644, 4
      %v4647 = vshll.u32 %v4532, 16
      %v4649 = vrot.slane %v4647, 5
      %v4650 = vor.u32 %v4646, %v4649
      %v4651 = vrot.slane %v4650, 4
      %v4653 = vshll.u32 %v4533, 16
      %v4655 = vrot.slane %v4653, 5
      %v4656 = vsel %vm1426, %v4651, %v4655
      %v4657 = vshrl.u32 %v4533, 16
      %v4659 = vrot.slane %v4657, 4
      %v4660 = vor.u32 %v4659, %v4655
      %v4661 = vrot.slane %v4660, 4
      %v4663 = vshll.u32 %v4534, 16
      %v4665 = vrot.slane %v4663, 5
      %v4666 = vsel %vm1426, %v4661, %v4665
      %v4668 = vshrl.u32 %v4535, 16
      %v4670 = vrot.slane %v4668, 4
      %v4671 = vshll.u32 %v4535, 16
      %v4673 = vrot.slane %v4671, 5
      %v4674 = vor.u32 %v4670, %v4673
      %v4675 = vrot.slane %v4674, 4
      %v4677 = vshll.u32 %v4536, 16
      %v4679 = vrot.slane %v4677, 5
      %v4680 = vsel %vm1426, %v4675, %v4679
      %v4681 = vshrl.u32 %v4536, 16
      %v4683 = vrot.slane %v4681, 4
      %v4684 = vor.u32 %v4683, %v4679
      %v4685 = vrot.slane %v4684, 4
      %v4687 = vshll.u32 %v4537, 16
      %v4689 = vrot.slane %v4687, 5
      %v4690 = vsel %vm1426, %v4685, %v4689
      %v4692 = vshrl.u32 %v4538, 16
      %v4694 = vrot.slane %v4692, 4
      %v4695 = vshll.u32 %v4538, 16
      %v4697 = vrot.slane %v4695, 5
      %v4698 = vor.u32 %v4694, %v4697
      %v4699 = vrot.slane %v4698, 4
      %v4701 = vshll.u32 %v4539, 16
      %v4703 = vrot.slane %v4701, 5
      %v4704 = vsel %vm1426, %v4699, %v4703
      %v4705 = vshrl.u32 %v4539, 16
      %v4707 = vrot.slane %v4705, 4
      %v4708 = vor.u32 %v4707, %v4703
      %v4709 = vrot.slane %v4708, 4
      %v4711 = vshll.u32 %v4540, 16
      %v4713 = vrot.slane %v4711, 5
      %v4714 = vsel %vm1426, %v4709, %v4713
      %v4716 = vshrl.u32 %v4541, 16
      %v4718 = vrot.slane %v4716, 4
      %v4719 = vshll.u32 %v4541, 16
      %v4721 = vrot.slane %v4719, 5
      %v4722 = vor.u32 %v4718, %v4721
      %v4723 = vrot.slane %v4722, 4
      %v4725 = vshll.u32 %v4542, 16
      %v4727 = vrot.slane %v4725, 5
      %v4728 = vsel %vm1426, %v4723, %v4727
      %v4729 = vshrl.u32 %v4542, 16
      %v4731 = vrot.slane %v4729, 4
      %v4732 = vor.u32 %v4731, %v4727
      %v4733 = vrot.slane %v4732, 4
      %v4735 = vshll.u32 %v4543, 16
      %v4737 = vrot.slane %v4735, 5
      %v4738 = vsel %vm1426, %v4733, %v4737
      %v4740 = vshrl.u32 %v4544, 16
      %v4742 = vrot.slane %v4740, 4
      %v4743 = vshll.u32 %v4544, 16
      %v4745 = vrot.slane %v4743, 5
      %v4746 = vor.u32 %v4742, %v4745
      %v4747 = vrot.slane %v4746, 4
      %v4749 = vshll.u32 %v4545, 16
      %v4751 = vrot.slane %v4749, 5
      %v4752 = vsel %vm1426, %v4747, %v4751
      %v4753 = vshrl.u32 %v4545, 16
      %v4755 = vrot.slane %v4753, 4
      %v4756 = vor.u32 %v4755, %v4751
      %v4757 = vrot.slane %v4756, 4
      %v4759 = vshll.u32 %v4546, 16
      %v4761 = vrot.slane %v4759, 5
      %v4762 = vsel %vm1426, %v4757, %v4761
      %v4764 = vshrl.u32 %v4547, 16
      %v4766 = vrot.slane %v4764, 4
      %v4767 = vshll.u32 %v4547, 16
      %v4769 = vrot.slane %v4767, 5
      %v4770 = vor.u32 %v4766, %v4769
      %v4771 = vrot.slane %v4770, 4
      %v4773 = vshll.u32 %v4548, 16
      %v4775 = vrot.slane %v4773, 5
      %v4776 = vsel %vm1426, %v4771, %v4775
      %v4777 = vshrl.u32 %v4548, 16
      %v4779 = vrot.slane %v4777, 4
      %v4780 = vor.u32 %v4779, %v4775
      %v4781 = vrot.slane %v4780, 4
      %v4783 = vshll.u32 %v4549, 16
      %v4785 = vrot.slane %v4783, 5
      %v4786 = vsel %vm1426, %v4781, %v4785
      %v4788 = vshrl.u32 %v4550, 16
      %v4790 = vrot.slane %v4788, 4
      %v4791 = vshll.u32 %v4550, 16
      %v4793 = vrot.slane %v4791, 5
      %v4794 = vor.u32 %v4790, %v4793
      %v4795 = vrot.slane %v4794, 4
      %v4797 = vshll.u32 %v4551, 16
      %v4799 = vrot.slane %v4797, 5
      %v4800 = vsel %vm1426, %v4795, %v4799
      %v4801 = vshrl.u32 %v4551, 16
      %v4803 = vrot.slane %v4801, 4
      %v4804 = vor.u32 %v4803, %v4799
      %v4805 = vrot.slane %v4804, 4
      %v4807 = vshll.u32 %v4552, 16
      %v4809 = vrot.slane %v4807, 5
      %v4810 = vsel %vm1426, %v4805, %v4809
      %v4812 = vshrl.u32 %v4553, 16
      %v4814 = vrot.slane %v4812, 4
      %v4815 = vshll.u32 %v4553, 16
      %v4817 = vrot.slane %v4815, 5
      %v4818 = vor.u32 %v4814, %v4817
      %v4819 = vrot.slane %v4818, 4
      %v4821 = vshll.u32 %v4554, 16
      %v4823 = vrot.slane %v4821, 5
      %v4824 = vsel %vm1426, %v4819, %v4823
      %v4825 = vshrl.u32 %v4554, 16
      %v4827 = vrot.slane %v4825, 4
      %v4828 = vor.u32 %v4827, %v4823
      %v4829 = vrot.slane %v4828, 4
      %v4831 = vshll.u32 %v4555, 16
      %v4833 = vrot.slane %v4831, 5
      %v4834 = vsel %vm1426, %v4829, %v4833
      %v4836 = vshrl.u32 %v4556, 16
      %v4838 = vrot.slane %v4836, 4
      %v4839 = vshll.u32 %v4556, 16
      %v4841 = vrot.slane %v4839, 5
      %v4842 = vor.u32 %v4838, %v4841
      %v4843 = vrot.slane %v4842, 4
      %v4845 = vshll.u32 %v4557, 16
      %v4847 = vrot.slane %v4845, 5
      %v4848 = vsel %vm1426, %v4843, %v4847
      %v4849 = vshrl.u32 %v4557, 16
      %v4851 = vrot.slane %v4849, 4
      %v4852 = vor.u32 %v4851, %v4847
      %v4853 = vrot.slane %v4852, 4
      %v4855 = vshll.u32 %v4558, 16
      %v4857 = vrot.slane %v4855, 5
      %v4858 = vsel %vm1426, %v4853, %v4857
      %v4860 = vshrl.u32 %v4559, 16
      %v4862 = vrot.slane %v4860, 4
      %v4863 = vshll.u32 %v4559, 16
      %v4865 = vrot.slane %v4863, 5
      %v4866 = vor.u32 %v4862, %v4865
      %v4867 = vrot.slane %v4866, 4
      %v4869 = vshll.u32 %v4560, 16
      %v4871 = vrot.slane %v4869, 5
      %v4872 = vsel %vm1426, %v4867, %v4871
      %v4873 = vshrl.u32 %v4560, 16
      %v4875 = vrot.slane %v4873, 4
      %v4876 = vor.u32 %v4875, %v4871
      %v4877 = vrot.slane %v4876, 4
      %v4879 = vshll.u32 %v4561, 16
      %v4881 = vrot.slane %v4879, 5
      %v4882 = vsel %vm1426, %v4877, %v4881
      %v4884 = vshrl.u32 %v4562, 16
      %v4886 = vrot.slane %v4884, 4
      %v4887 = vshll.u32 %v4562, 16
      %v4889 = vrot.slane %v4887, 5
      %v4890 = vor.u32 %v4886, %v4889
      %v4891 = vrot.slane %v4890, 4
      %v4893 = vshll.u32 %v4563, 16
      %v4895 = vrot.slane %v4893, 5
      %v4896 = vsel %vm1426, %v4891, %v4895
      %v4897 = vshrl.u32 %v4563, 16
      %v4899 = vrot.slane %v4897, 4
      %v4900 = vor.u32 %v4899, %v4895
      %v4901 = vrot.slane %v4900, 4
      %v4903 = vshll.u32 %v4564, 16
      %v4905 = vrot.slane %v4903, 5
      %v4906 = vsel %vm1426, %v4901, %v4905
      %v4908 = vshrl.u32 %v4565, 16
      %v4910 = vrot.slane %v4908, 4
      %v4911 = vshll.u32 %v4565, 16
      %v4913 = vrot.slane %v4911, 5
      %v4914 = vor.u32 %v4910, %v4913
      %v4915 = vrot.slane %v4914, 4
      %v4917 = vshll.u32 %v4566, 16
      %v4919 = vrot.slane %v4917, 5
      %v4920 = vsel %vm1426, %v4915, %v4919
      %v4921 = vshrl.u32 %v4566, 16
      %v4923 = vrot.slane %v4921, 4
      %v4924 = vor.u32 %v4923, %v4919
      %v4925 = vrot.slane %v4924, 4
      %v4927 = vshll.u32 %v4567, 16
      %v4929 = vrot.slane %v4927, 5
      %v4930 = vsel %vm1426, %v4925, %v4929
      %v4932 = vshrl.u32 %v4568, 16
      %v4934 = vrot.slane %v4932, 4
      %v4935 = vshll.u32 %v4568, 16
      %v4937 = vrot.slane %v4935, 5
      %v4938 = vor.u32 %v4934, %v4937
      %v4939 = vrot.slane %v4938, 4
      %v4941 = vshll.u32 %v4569, 16
      %v4943 = vrot.slane %v4941, 5
      %v4944 = vsel %vm1426, %v4939, %v4943
      %v4945 = vshrl.u32 %v4569, 16
      %v4947 = vrot.slane %v4945, 4
      %v4948 = vor.u32 %v4947, %v4943
      %v4949 = vrot.slane %v4948, 4
      %v4951 = vshll.u32 %v4570, 16
      %v4953 = vrot.slane %v4951, 5
      %v4954 = vsel %vm1426, %v4949, %v4953
      %v4955 = vunpack.c.l.b16 %v4584
      %v4956 = vunpack.c.l.b16 %v4594
      %v4957 = vunpack.c.l.b16 %v4608
      %v4958 = vunpack.c.l.b16 %v4618
      %v4959 = vunpack.c.l.b16 %v4632
      %v4960 = vunpack.c.l.b16 %v4642
      %v4961 = vunpack.c.l.b16 %v4656
      %v4962 = vunpack.c.l.b16 %v4666
      %v4963 = vunpack.c.l.b16 %v4680
      %v4964 = vunpack.c.l.b16 %v4690
      %v4965 = vunpack.c.l.b16 %v4704
      %v4966 = vunpack.c.l.b16 %v4714
      %v4967 = vunpack.c.l.b16 %v4728
      %v4968 = vunpack.c.l.b16 %v4738
      %v4969 = vunpack.c.l.b16 %v4752
      %v4970 = vunpack.c.l.b16 %v4762
      %v4971 = vunpack.c.l.b16 %v4776
      %v4972 = vunpack.c.l.b16 %v4786
      %v4973 = vunpack.c.l.b16 %v4800
      %v4974 = vunpack.c.l.b16 %v4810
      %v4975 = vunpack.c.l.b16 %v4824
      %v4976 = vunpack.c.l.b16 %v4834
      %v4977 = vunpack.c.l.b16 %v4848
      %v4978 = vunpack.c.l.b16 %v4858
      %v4979 = vunpack.c.l.b16 %v4872
      %v4980 = vunpack.c.l.b16 %v4882
      %v4981 = vunpack.c.l.b16 %v4896
      %v4982 = vunpack.c.l.b16 %v4906
      %v4983 = vunpack.c.l.b16 %v4920
      %v4984 = vunpack.c.l.b16 %v4930
      %v4985 = vunpack.c.l.b16 %v4944
      %v4986 = vunpack.c.l.b16 %v4954
      %v4987 = vpack.c.b16 %v4956, %v4955
      %v4988 = vpack.c.b16 %v4958, %v4957
      %v4989 = vpack.c.b16 %v4960, %v4959
      %v4990 = vpack.c.b16 %v4962, %v4961
      %v4991 = vpack.c.b16 %v4964, %v4963
      %v4992 = vpack.c.b16 %v4966, %v4965
      %v4993 = vpack.c.b16 %v4968, %v4967
      %v4994 = vpack.c.b16 %v4970, %v4969
      %v4995 = vpack.c.b16 %v4972, %v4971
      %v4996 = vpack.c.b16 %v4974, %v4973
      %v4997 = vpack.c.b16 %v4976, %v4975
      %v4998 = vpack.c.b16 %v4978, %v4977
      %v4999 = vpack.c.b16 %v4980, %v4979
      %v5000 = vpack.c.b16 %v4982, %v4981
      %v5001 = vpack.c.b16 %v4984, %v4983
      %v5002 = vpack.c.b16 %v4986, %v4985
      %s5019 = scalar_lea.vmem %s3, 512
      %v5020 = vld [vmem:[%s5019] sm:$0xf]
      %v5021 = vld [vmem:[%s5019 + $0x4] sm:$0xf]
      %v5022 = vld [vmem:[%s5019 + $0x8] sm:$0xf]
      %v5023 = vld [vmem:[%s5019 + $0xc] sm:$0xf]
      %v5024 = vld [vmem:[%s5019 + $0x10] sm:$0xf]
      %v5025 = vld [vmem:[%s5019 + $0x14] sm:$0xf]
      %v5026 = vld [vmem:[%s5019 + $0x18] sm:$0xf]
      %v5027 = vld [vmem:[%s5019 + $0x1c] sm:$0xf]
      %v5028 = vld [vmem:[%s5019 + $0x20] sm:$0xf]
      %v5029 = vld [vmem:[%s5019 + $0x24] sm:$0xf]
      %v5030 = vld [vmem:[%s5019 + $0x28] sm:$0xf]
      %v5031 = vld [vmem:[%s5019 + $0x2c] sm:$0xf]
      %v5032 = vld [vmem:[%s5019 + $0x30] sm:$0xf]
      %v5033 = vld [vmem:[%s5019 + $0x34] sm:$0xf]
      %v5034 = vld [vmem:[%s5019 + $0x38] sm:$0xf]
      %v5035 = vld [vmem:[%s5019 + $0x3c] sm:$0xf]
      %v5036 = vld [vmem:[%s5019 + $0x40] sm:$0xf]
      %v5037 = vld [vmem:[%s5019 + $0x44] sm:$0xf]
      %v5038 = vld [vmem:[%s5019 + $0x48] sm:$0xf]
      %v5039 = vld [vmem:[%s5019 + $0x4c] sm:$0xf]
      %v5040 = vld [vmem:[%s5019 + $0x50] sm:$0xf]
      %v5041 = vld [vmem:[%s5019 + $0x54] sm:$0xf]
      %v5042 = vld [vmem:[%s5019 + $0x58] sm:$0xf]
      %v5043 = vld [vmem:[%s5019 + $0x5c] sm:$0xf]
      %v5044 = vld [vmem:[%s5019 + $0x60] sm:$0xf]
      %v5045 = vld [vmem:[%s5019 + $0x64] sm:$0xf]
      %v5046 = vld [vmem:[%s5019 + $0x68] sm:$0xf]
      %v5047 = vld [vmem:[%s5019 + $0x6c] sm:$0xf]
      %v5048 = vld [vmem:[%s5019 + $0x70] sm:$0xf]
      %v5049 = vld [vmem:[%s5019 + $0x74] sm:$0xf]
      %v5050 = vld [vmem:[%s5019 + $0x78] sm:$0xf]
      %v5051 = vld [vmem:[%s5019 + $0x7c] sm:$0xf]
      %v5084 = vunpack.c.l.b16 %v5020
      %v5085 = vunpack.c.l.b16 %v5021
      %v5086 = vunpack.c.l.b16 %v5022
      %v5087 = vunpack.c.l.b16 %v5023
      %v5088 = vunpack.c.l.b16 %v5024
      %v5089 = vunpack.c.l.b16 %v5025
      %v5090 = vunpack.c.l.b16 %v5026
      %v5091 = vunpack.c.l.b16 %v5027
      %v5092 = vunpack.c.l.b16 %v5028
      %v5093 = vunpack.c.l.b16 %v5029
      %v5094 = vunpack.c.l.b16 %v5030
      %v5095 = vunpack.c.l.b16 %v5031
      %v5096 = vunpack.c.l.b16 %v5032
      %v5097 = vunpack.c.l.b16 %v5033
      %v5098 = vunpack.c.l.b16 %v5034
      %v5099 = vunpack.c.l.b16 %v5035
      %v5100 = vunpack.c.l.b16 %v5036
      %v5101 = vunpack.c.l.b16 %v5037
      %v5102 = vunpack.c.l.b16 %v5038
      %v5103 = vunpack.c.l.b16 %v5039
      %v5104 = vunpack.c.l.b16 %v5040
      %v5105 = vunpack.c.l.b16 %v5041
      %v5106 = vunpack.c.l.b16 %v5042
      %v5107 = vunpack.c.l.b16 %v5043
      %v5108 = vunpack.c.l.b16 %v5044
      %v5109 = vunpack.c.l.b16 %v5045
      %v5110 = vunpack.c.l.b16 %v5046
      %v5111 = vunpack.c.l.b16 %v5047
      %v5112 = vunpack.c.l.b16 %v5048
      %v5113 = vunpack.c.l.b16 %v5049
      %v5114 = vunpack.c.l.b16 %v5050
      %v5115 = vunpack.c.l.b16 %v5051
      %v5116 = vpack.c.b16 %v5085, %v5084
      %v5117 = vpack.c.b16 %v5087, %v5086
      %v5118 = vpack.c.b16 %v5089, %v5088
      %v5119 = vpack.c.b16 %v5091, %v5090
      %v5120 = vpack.c.b16 %v5093, %v5092
      %v5121 = vpack.c.b16 %v5095, %v5094
      %v5122 = vpack.c.b16 %v5097, %v5096
      %v5123 = vpack.c.b16 %v5099, %v5098
      %v5124 = vpack.c.b16 %v5101, %v5100
      %v5125 = vpack.c.b16 %v5103, %v5102
      %v5126 = vpack.c.b16 %v5105, %v5104
      %v5127 = vpack.c.b16 %v5107, %v5106
      %v5128 = vpack.c.b16 %v5109, %v5108
      %v5129 = vpack.c.b16 %v5111, %v5110
      %v5130 = vpack.c.b16 %v5113, %v5112
      %v5131 = vpack.c.b16 %v5115, %v5114
      %5148 = vmatprep.subr.bf16.mxu0 0
      %5149 = vmatpush1.bf16.msra.mxu0 %v5123
      %5150 = vmatprep.subr.bf16.mxu0 0
      %5151 = vmatpush1.bf16.msra.mxu0 %v5122
      %5152 = vmatprep.subr.bf16.mxu0 0
      %5153 = vmatpush1.bf16.msra.mxu0 %v5121
      %5154 = vmatprep.subr.bf16.mxu0 0
      %5155 = vmatpush1.bf16.msra.mxu0 %v5120
      %5156 = vmatprep.subr.bf16.mxu0 0
      %5157 = vmatpush1.bf16.msra.mxu0 %v5119
      %5158 = vmatprep.subr.bf16.mxu0 0
      %5159 = vmatpush1.bf16.msra.mxu0 %v5118
      %5160 = vmatprep.subr.bf16.mxu0 0
      %5161 = vmatpush1.bf16.msra.mxu0 %v5117
      %5162 = vmatprep.subr.bf16.mxu0 0
      %5163 = vmatpush1.bf16.msra.mxu0 %v5116
      %5164 = vmatprep.subr.bf16.mxu0 0
      %5165 = vmatpush2.bf16.msra.mxu0 %v5131
      %5166 = vmatprep.subr.bf16.mxu0 0
      %5167 = vmatpush2.bf16.msra.mxu0 %v5130
      %5168 = vmatprep.subr.bf16.mxu0 0
      %5169 = vmatpush2.bf16.msra.mxu0 %v5129
      %5170 = vmatprep.subr.bf16.mxu0 0
      %5171 = vmatpush2.bf16.msra.mxu0 %v5128
      %5172 = vmatprep.subr.bf16.mxu0 0
      %5173 = vmatpush2.bf16.msra.mxu0 %v5127
      %5174 = vmatprep.subr.bf16.mxu0 0
      %5175 = vmatpush2.bf16.msra.mxu0 %v5126
      %5176 = vmatprep.subr.bf16.mxu0 0
      %5177 = vmatpush2.bf16.msra.mxu0 %v5125
      %5178 = vmatprep.subr.bf16.mxu0 0
      %5179 = vmatpush2.bf16.msra.mxu0 %v5124
      %5180 = vmatprep.mubr.bf16.mxu0 %v4987
      %5181 = vmatmul.mubr.bf16.gmra.mxu0 %v4987
      %v5182 = vpop.f32.mrf.mxu0
      %v5183 = vadd.f32 0.0, %v5182
      %v5184 = vpop.f32.mrf.mxu0
      %v5185 = vpop.f32.mrf.mxu0
      %v5186 = vadd.f32 0.0, %v5185
      %v5187 = vpop.f32.mrf.mxu0
      %5188 = vmatprep.mubr.bf16.mxu0 %v4988
      %5189 = vmatmul.mubr.bf16.gmra.mxu0 %v4988
      %v5190 = vpop.f32.mrf.mxu0
      %v5191 = vadd.f32 0.0, %v5190
      %v5192 = vpop.f32.mrf.mxu0
      %v5193 = vpop.f32.mrf.mxu0
      %v5194 = vadd.f32 0.0, %v5193
      %v5195 = vpop.f32.mrf.mxu0
      %5196 = vmatprep.mubr.bf16.mxu0 %v4989
      %5197 = vmatmul.mubr.bf16.gmra.mxu0 %v4989
      %v5198 = vpop.f32.mrf.mxu0
      %v5199 = vadd.f32 0.0, %v5198
      %v5200 = vpop.f32.mrf.mxu0
      %v5201 = vpop.f32.mrf.mxu0
      %v5202 = vadd.f32 0.0, %v5201
      %v5203 = vpop.f32.mrf.mxu0
      %5204 = vmatprep.mubr.bf16.mxu0 %v4990
      %5205 = vmatmul.mubr.bf16.gmra.mxu0 %v4990
      %v5206 = vpop.f32.mrf.mxu0
      %v5207 = vadd.f32 0.0, %v5206
      %v5208 = vpop.f32.mrf.mxu0
      %v5209 = vpop.f32.mrf.mxu0
      %v5210 = vadd.f32 0.0, %v5209
      %v5211 = vpop.f32.mrf.mxu0
      %5212 = vmatprep.mubr.bf16.mxu0 %v4991
      %5213 = vmatmul.mubr.bf16.gmra.mxu0 %v4991
      %v5214 = vpop.f32.mrf.mxu0
      %v5215 = vadd.f32 0.0, %v5214
      %v5216 = vpop.f32.mrf.mxu0
      %v5217 = vpop.f32.mrf.mxu0
      %v5218 = vadd.f32 0.0, %v5217
      %v5219 = vpop.f32.mrf.mxu0
      %5220 = vmatprep.mubr.bf16.mxu0 %v4992
      %5221 = vmatmul.mubr.bf16.gmra.mxu0 %v4992
      %v5222 = vpop.f32.mrf.mxu0
      %v5223 = vadd.f32 0.0, %v5222
      %v5224 = vpop.f32.mrf.mxu0
      %v5225 = vpop.f32.mrf.mxu0
      %v5226 = vadd.f32 0.0, %v5225
      %v5227 = vpop.f32.mrf.mxu0
      %5228 = vmatprep.mubr.bf16.mxu0 %v4993
      %5229 = vmatmul.mubr.bf16.gmra.mxu0 %v4993
      %v5230 = vpop.f32.mrf.mxu0
      %v5231 = vadd.f32 0.0, %v5230
      %v5232 = vpop.f32.mrf.mxu0
      %v5233 = vpop.f32.mrf.mxu0
      %v5234 = vadd.f32 0.0, %v5233
      %v5235 = vpop.f32.mrf.mxu0
      %5236 = vmatprep.mubr.bf16.mxu0 %v4994
      %5237 = vmatmul.mubr.bf16.gmra.mxu0 %v4994
      %v5238 = vpop.f32.mrf.mxu0
      %v5239 = vadd.f32 0.0, %v5238
      %v5240 = vpop.f32.mrf.mxu0
      %v5241 = vpop.f32.mrf.mxu0
      %v5242 = vadd.f32 0.0, %v5241
      %v5243 = vpop.f32.mrf.mxu0
      %5244 = vmatprep.mubr.bf16.mxu0 %v4995
      %5245 = vmatmul.mubr.bf16.gmra.mxu0 %v4995
      %v5246 = vpop.f32.mrf.mxu0
      %v5247 = vadd.f32 0.0, %v5246
      %v5248 = vpop.f32.mrf.mxu0
      %v5249 = vpop.f32.mrf.mxu0
      %v5250 = vadd.f32 0.0, %v5249
      %v5251 = vpop.f32.mrf.mxu0
      %5252 = vmatprep.mubr.bf16.mxu0 %v4996
      %5253 = vmatmul.mubr.bf16.gmra.mxu0 %v4996
      %v5254 = vpop.f32.mrf.mxu0
      %v5255 = vadd.f32 0.0, %v5254
      %v5256 = vpop.f32.mrf.mxu0
      %v5257 = vpop.f32.mrf.mxu0
      %v5258 = vadd.f32 0.0, %v5257
      %v5259 = vpop.f32.mrf.mxu0
      %5260 = vmatprep.mubr.bf16.mxu0 %v4997
      %5261 = vmatmul.mubr.bf16.gmra.mxu0 %v4997
      %v5262 = vpop.f32.mrf.mxu0
      %v5263 = vadd.f32 0.0, %v5262
      %v5264 = vpop.f32.mrf.mxu0
      %v5265 = vpop.f32.mrf.mxu0
      %v5266 = vadd.f32 0.0, %v5265
      %v5267 = vpop.f32.mrf.mxu0
      %5268 = vmatprep.mubr.bf16.mxu0 %v4998
      %5269 = vmatmul.mubr.bf16.gmra.mxu0 %v4998
      %v5270 = vpop.f32.mrf.mxu0
      %v5271 = vadd.f32 0.0, %v5270
      %v5272 = vpop.f32.mrf.mxu0
      %v5273 = vpop.f32.mrf.mxu0
      %v5274 = vadd.f32 0.0, %v5273
      %v5275 = vpop.f32.mrf.mxu0
      %5276 = vmatprep.mubr.bf16.mxu0 %v4999
      %5277 = vmatmul.mubr.bf16.gmra.mxu0 %v4999
      %v5278 = vpop.f32.mrf.mxu0
      %v5279 = vadd.f32 0.0, %v5278
      %v5280 = vpop.f32.mrf.mxu0
      %v5281 = vpop.f32.mrf.mxu0
      %v5282 = vadd.f32 0.0, %v5281
      %v5283 = vpop.f32.mrf.mxu0
      %5284 = vmatprep.mubr.bf16.mxu0 %v5000
      %5285 = vmatmul.mubr.bf16.gmra.mxu0 %v5000
      %v5286 = vpop.f32.mrf.mxu0
      %v5287 = vadd.f32 0.0, %v5286
      %v5288 = vpop.f32.mrf.mxu0
      %v5289 = vpop.f32.mrf.mxu0
      %v5290 = vadd.f32 0.0, %v5289
      %v5291 = vpop.f32.mrf.mxu0
      %5292 = vmatprep.mubr.bf16.mxu0 %v5001
      %5293 = vmatmul.mubr.bf16.gmra.mxu0 %v5001
      %v5294 = vpop.f32.mrf.mxu0
      %v5295 = vadd.f32 0.0, %v5294
      %v5296 = vpop.f32.mrf.mxu0
      %v5297 = vpop.f32.mrf.mxu0
      %v5298 = vadd.f32 0.0, %v5297
      %v5299 = vpop.f32.mrf.mxu0
      %5300 = vmatprep.mubr.bf16.mxu0 %v5002
      %5301 = vmatmul.mubr.bf16.gmra.mxu0 %v5002
      %v5302 = vpop.f32.mrf.mxu0
      %v5303 = vadd.f32 0.0, %v5302
      %v5304 = vpop.f32.mrf.mxu0
      %v5305 = vpop.f32.mrf.mxu0
      %v5306 = vadd.f32 0.0, %v5305
      %v5307 = vpop.f32.mrf.mxu0
      %5308 = vdwg.mxu0
      %v5309 = vadd.f32 %v4491, %v5183
      %v5310 = vadd.f32 %v4492, %v5186
      %v5311 = vadd.f32 %v4493, %v5191
      %v5312 = vadd.f32 %v4494, %v5194
      %v5313 = vadd.f32 %v4495, %v5199
      %v5314 = vadd.f32 %v4496, %v5202
      %v5315 = vadd.f32 %v4497, %v5207
      %v5316 = vadd.f32 %v4498, %v5210
      %v5317 = vadd.f32 %v4499, %v5215
      %v5318 = vadd.f32 %v4500, %v5218
      %v5319 = vadd.f32 %v4501, %v5223
      %v5320 = vadd.f32 %v4502, %v5226
      %v5321 = vadd.f32 %v4503, %v5231
      %v5322 = vadd.f32 %v4504, %v5234
      %v5323 = vadd.f32 %v4505, %v5239
      %v5324 = vadd.f32 %v4506, %v5242
      %v5325 = vadd.f32 %v4507, %v5247
      %v5326 = vadd.f32 %v4508, %v5250
      %v5327 = vadd.f32 %v4509, %v5255
      %v5328 = vadd.f32 %v4510, %v5258
      %v5329 = vadd.f32 %v4511, %v5263
      %v5330 = vadd.f32 %v4512, %v5266
      %v5331 = vadd.f32 %v4513, %v5271
      %v5332 = vadd.f32 %v4514, %v5274
      %v5333 = vadd.f32 %v4515, %v5279
      %v5334 = vadd.f32 %v4516, %v5282
      %v5335 = vadd.f32 %v4517, %v5287
      %v5336 = vadd.f32 %v4518, %v5290
      %v5337 = vadd.f32 %v4519, %v5295
      %v5338 = vadd.f32 %v4520, %v5298
      %v5339 = vadd.f32 %v4521, %v5303
      %v5340 = vadd.f32 %v4522, %v5306
      %v5341 = vld [vmem:[%s4] sm:$0x1]
      %v5343 = vlaneseq
      %v5344 = vshrl.u32 %v5343, 7
      %v5345 = vsub.s32 0, %v5344
      %v5346 = vrot.slane %v5341, %v5345
      %v5348 = vadd.f32 %v5309, %v5346
      %v5349 = vadd.f32 %v5310, %v5346
      %v5350 = vadd.f32 %v5311, %v5346
      %v5351 = vadd.f32 %v5312, %v5346
      %v5352 = vadd.f32 %v5313, %v5346
      %v5353 = vadd.f32 %v5314, %v5346
      %v5354 = vadd.f32 %v5315, %v5346
      %v5355 = vadd.f32 %v5316, %v5346
      %v5356 = vadd.f32 %v5317, %v5346
      %v5357 = vadd.f32 %v5318, %v5346
      %v5358 = vadd.f32 %v5319, %v5346
      %v5359 = vadd.f32 %v5320, %v5346
      %v5360 = vadd.f32 %v5321, %v5346
      %v5361 = vadd.f32 %v5322, %v5346
      %v5362 = vadd.f32 %v5323, %v5346
      %v5363 = vadd.f32 %v5324, %v5346
      %v5364 = vadd.f32 %v5325, %v5346
      %v5365 = vadd.f32 %v5326, %v5346
      %v5366 = vadd.f32 %v5327, %v5346
      %v5367 = vadd.f32 %v5328, %v5346
      %v5368 = vadd.f32 %v5329, %v5346
      %v5369 = vadd.f32 %v5330, %v5346
      %v5370 = vadd.f32 %v5331, %v5346
      %v5371 = vadd.f32 %v5332, %v5346
      %v5372 = vadd.f32 %v5333, %v5346
      %v5373 = vadd.f32 %v5334, %v5346
      %v5374 = vadd.f32 %v5335, %v5346
      %v5375 = vadd.f32 %v5336, %v5346
      %v5376 = vadd.f32 %v5337, %v5346
      %v5377 = vadd.f32 %v5338, %v5346
      %v5378 = vadd.f32 %v5339, %v5346
      %v5379 = vadd.f32 %v5340, %v5346
      %v5380 = vmax.f32 %v5348, 0.0
      %v5381 = vmax.f32 %v5349, 0.0
      %v5382 = vmax.f32 %v5350, 0.0
      %v5383 = vmax.f32 %v5351, 0.0
      %v5384 = vmax.f32 %v5352, 0.0
      %v5385 = vmax.f32 %v5353, 0.0
      %v5386 = vmax.f32 %v5354, 0.0
      %v5387 = vmax.f32 %v5355, 0.0
      %v5388 = vmax.f32 %v5356, 0.0
      %v5389 = vmax.f32 %v5357, 0.0
      %v5390 = vmax.f32 %v5358, 0.0
      %v5391 = vmax.f32 %v5359, 0.0
      %v5392 = vmax.f32 %v5360, 0.0
      %v5393 = vmax.f32 %v5361, 0.0
      %v5394 = vmax.f32 %v5362, 0.0
      %v5395 = vmax.f32 %v5363, 0.0
      %v5396 = vmax.f32 %v5364, 0.0
      %v5397 = vmax.f32 %v5365, 0.0
      %v5398 = vmax.f32 %v5366, 0.0
      %v5399 = vmax.f32 %v5367, 0.0
      %v5400 = vmax.f32 %v5368, 0.0
      %v5401 = vmax.f32 %v5369, 0.0
      %v5402 = vmax.f32 %v5370, 0.0
      %v5403 = vmax.f32 %v5371, 0.0
      %v5404 = vmax.f32 %v5372, 0.0
      %v5405 = vmax.f32 %v5373, 0.0
      %v5406 = vmax.f32 %v5374, 0.0
      %v5407 = vmax.f32 %v5375, 0.0
      %v5408 = vmax.f32 %v5376, 0.0
      %v5409 = vmax.f32 %v5377, 0.0
      %v5410 = vmax.f32 %v5378, 0.0
      %v5411 = vmax.f32 %v5379, 0.0
      %5412 = vst [vmem:[%s224] sm:$0xff] %v5380
      %5413 = vst [vmem:[%s224 + $0x8] sm:$0xff] %v5381
      %5414 = vst [vmem:[%s224 + $0x10] sm:$0xff] %v5382
      %5415 = vst [vmem:[%s224 + $0x18] sm:$0xff] %v5383
      %5416 = vst [vmem:[%s224 + $0x20] sm:$0xff] %v5384
      %5417 = vst [vmem:[%s224 + $0x28] sm:$0xff] %v5385
      %5418 = vst [vmem:[%s224 + $0x30] sm:$0xff] %v5386
      %5419 = vst [vmem:[%s224 + $0x38] sm:$0xff] %v5387
      %5420 = vst [vmem:[%s224 + $0x40] sm:$0xff] %v5388
      %5421 = vst [vmem:[%s224 + $0x48] sm:$0xff] %v5389
      %5422 = vst [vmem:[%s224 + $0x50] sm:$0xff] %v5390
      %5423 = vst [vmem:[%s224 + $0x58] sm:$0xff] %v5391
      %5424 = vst [vmem:[%s224 + $0x60] sm:$0xff] %v5392
      %5425 = vst [vmem:[%s224 + $0x68] sm:$0xff] %v5393
      %5426 = vst [vmem:[%s224 + $0x70] sm:$0xff] %v5394
      %5427 = vst [vmem:[%s224 + $0x78] sm:$0xff] %v5395
      %5428 = vst [vmem:[%s224 + $0x80] sm:$0xff] %v5396
      %5429 = vst [vmem:[%s224 + $0x88] sm:$0xff] %v5397
      %5430 = vst [vmem:[%s224 + $0x90] sm:$0xff] %v5398
      %5431 = vst [vmem:[%s224 + $0x98] sm:$0xff] %v5399
      %5432 = vst [vmem:[%s224 + $0xa0] sm:$0xff] %v5400
      %5433 = vst [vmem:[%s224 + $0xa8] sm:$0xff] %v5401
      %5434 = vst [vmem:[%s224 + $0xb0] sm:$0xff] %v5402
      %5435 = vst [vmem:[%s224 + $0xb8] sm:$0xff] %v5403
      %5436 = vst [vmem:[%s224 + $0xc0] sm:$0xff] %v5404
      %5437 = vst [vmem:[%s224 + $0xc8] sm:$0xff] %v5405
      %5438 = vst [vmem:[%s224 + $0xd0] sm:$0xff] %v5406
      %5439 = vst [vmem:[%s224 + $0xd8] sm:$0xff] %v5407
      %5440 = vst [vmem:[%s224 + $0xe0] sm:$0xff] %v5408
      %5441 = vst [vmem:[%s224 + $0xe8] sm:$0xff] %v5409
      %5442 = vst [vmem:[%s224 + $0xf0] sm:$0xff] %v5410
      %5443 = vst [vmem:[%s224 + $0xf8] sm:$0xff] %v5411
      %p5444 = scmp.lt.s32.totalorder %s16, 1
      %s5445 = scalar_select %p5444, %s16, 1
      %s5446 = smul.addr %s5445, 32
      %s5447 = smul.addr %s5446, 8
      %s5448 = scalar_lea.vmem %s5, %s5447
      // Predicated region
      $region41: #{double_conv.1} parent=39 // pred_check
        %p5449 = pneg %p144
      $region42: #{double_conv.1} parent=39 // pred_check_branch
        %5451 = sbr.rel (%p5449) target = $region44
      $region43: #{double_conv.1} parent=39 // pred_region
        _
      $region44: #{double_conv.1} parent=39 // pred_fallthru
        _
    $region40: #{double_conv.1} parent=5 // pred_fallthru
      _
    %p5452 = scmp.le.s32.totalorder 2, %s11
    // Predicated region
    $region45: #{double_conv.1} parent=5 // pred_check
      %p5453 = pneg %p5452
    $region46: #{double_conv.1} parent=5 // pred_check_branch
      %5455 = sbr.rel (%p5453) target = $region48
    $region47: #{double_conv.1} parent=5 // pred_region
      %s5456 = ssub.s32 %s11, 2
      // Predicated region
      $region49: #{double_conv.1} parent=47 // pred_check
        %p5457 = pneg %p150
      $region50: #{double_conv.1} parent=47 // pred_check_branch
        %5459 = sbr.rel (%p5457) target = $region52
      $region51: #{double_conv.1} parent=47 // pred_region
        %p5460 = scmp.lt.s32.totalorder %s17, 1
        %s5461 = scalar_select %p5460, %s17, 1
        %s5462 = smul.addr %s5461, 32
        %s5463 = smul.addr %s5462, 8
        %s5464 = scalar_lea.vmem %s5, %s5463
      $region52: #{double_conv.1} parent=47 // pred_fallthru
        _
    $region48: #{double_conv.1} parent=5 // pred_fallthru
      _
  $region6: #{double_conv.1} parent=0 // loop_footer
    %s15 = sadd.s32 1, %s11
  $region7: #{double_conv.1} parent=0 // loop_footer_branch
    %10 = sbr.rel target = $region3
  $region8: #{double_conv.1} parent=0 // loop_exit
    _

</llo_original>
